<compile_context>
chip_gen: v6e
topology: v6e:2x2x1
jax: 0.10.0
libtpu: 0.0.40
codegen_flags: <defaults>
</compile_context>

<pallas_src>
import functools

import jax
import jax.numpy as jnp
from jax.experimental import pallas as pl
from jax.experimental.pallas import tpu as pltpu


def _shuffleblock_kernel(x_ref, w_ref, b_ref, o_ref, *, K, Wp, Lout,
                         negative_slope, res_scale):
    # x_ref: (Lin, Cin)     flattened, zero-padded, channels-last image
    # w_ref: (K*K, Cin, Cout) per-tap weight matrices (shuffle already folded)
    # b_ref: (1, Cout)
    # o_ref: (Lout, Cout)   flattened (padded-width) output rows
    cout = o_ref.shape[-1]
    acc = jnp.zeros((Lout, cout), jnp.float32)
    for t in range(K * K):                     # static, unrolled at trace time
        ky, kx = t // K, t % K
        shift = ky * Wp + kx                   # static slice offset
        xs = x_ref[shift:shift + Lout, :]      # (Lout, Cin)
        acc = acc + jnp.dot(xs, w_ref[t], preferred_element_type=jnp.float32)
    y = acc + b_ref[...].astype(jnp.float32)           # bias
    y = jnp.where(y >= 0, y, negative_slope * y)        # LeakyReLU
    y = y * res_scale                                   # residual scale
    # TODO(synk): bn=True path (BatchNorm2d) not implemented; it would fuse
    # here as an extra per-channel scale/shift before the activation.
    o_ref[...] = y.astype(o_ref.dtype)


def shuffle_block(x, weight, bias, *, conv_groups=1, negative_slope=1.0,
                  res_scale=1.0):
    """Fused ShuffleBlock forward.

    x:      (B, Cin, H, W)   NCHW (PyTorch layout)
    weight: (Cout, Cin, K, K)
    bias:   (Cout,)
    Note: the module's default act nn.LeakyReLU(True) literally means
    negative_slope=1.0; pass e.g. 0.2 for a real leaky ReLU.
    """
    B, Cin, H, W = x.shape
    Cout, Cin_w, K, K2 = weight.shape
    assert Cin_w == Cin and K == K2 and K % 2 == 1, "odd 'same' kernel expected"
    assert Cout % conv_groups == 0
    P = K // 2
    Wp = W + 2 * P                       # padded width
    Hp = H + 2 * P + 1                   # padded height (+1 row keeps every
                                         # per-tap slice in bounds)
    Lin = Hp * Wp
    Lout = H * Wp

    # ---- fold channel_shuffle into the conv weights (pure permutation) ----
    cpg = Cout // conv_groups
    j = jnp.arange(Cout)
    perm = (j % conv_groups) * cpg + j // conv_groups
    w_shuf = weight[perm]                # (Cout, Cin, K, K)
    b_shuf = bias[perm]

    # ---- layout plumbing (wrapper side, plain XLA ops) ----
    xt = jnp.transpose(x, (0, 2, 3, 1))                        # (B, H, W, Cin)
    xp = jnp.pad(xt, ((0, 0), (P, P + 1), (P, P), (0, 0)))     # (B, Hp, Wp, Cin)
    x_flat = xp.reshape(B, Lin, Cin)
    w_taps = jnp.transpose(w_shuf, (2, 3, 1, 0)).reshape(K * K, Cin, Cout)
    b2 = b_shuf.reshape(1, Cout)

    kernel = functools.partial(
        _shuffleblock_kernel, K=K, Wp=Wp, Lout=Lout,
        negative_slope=float(negative_slope), res_scale=float(res_scale))

    out_flat = pl.pallas_call(
        kernel,
        out_shape=jax.ShapeDtypeStruct((B, Lout, Cout), x.dtype),
        grid_spec=pltpu.PrefetchScalarGridSpec(
            num_scalar_prefetch=0,
            grid=(B,),
            in_specs=[
                pl.BlockSpec((None, Lin, Cin), lambda b: (b, 0, 0)),      # x
                pl.BlockSpec((K * K, Cin, Cout), lambda b: (0, 0, 0)),    # W
                pl.BlockSpec((1, Cout), lambda b: (0, 0)),                # bias
            ],
            out_specs=pl.BlockSpec((None, Lout, Cout), lambda b: (b, 0, 0)),
        ),
        compiler_params=pltpu.CompilerParams(
            dimension_semantics=("parallel",)),
    )(x_flat, w_taps, b2)

    # drop padded-width columns, back to NCHW
    out = out_flat.reshape(B, H, Wp, Cout)[:, :, :W, :]
    return jnp.transpose(out, (0, 3, 1, 2))


def _reference(x, weight, bias, conv_groups, negative_slope, res_scale):
    """Pure-JAX mirror of ShuffleBlock.forward (conv -> shuffle -> act -> scale)."""
    P = weight.shape[-1] // 2
    y = jax.lax.conv_general_dilated(
        x, weight, window_strides=(1, 1), padding=[(P, P), (P, P)],
        dimension_numbers=("NCHW", "OIHW", "NCHW"))
    y = y + bias[None, :, None, None]
    B, C, H, W = y.shape
    cpg = C // conv_groups
    y = y.reshape(B, conv_groups, cpg, H, W)
    y = jnp.transpose(y, (0, 2, 1, 3, 4)).reshape(B, C, H, W)
    y = jnp.where(y >= 0, y, negative_slope * y)
    return y * res_scale


if __name__ == "__main__":
    key = jax.random.PRNGKey(0)
    kx, kw, kb = jax.random.split(key, 3)
    B, Cin, Cout, H, W, K = 2, 4, 8, 16, 16, 3
    groups, slope, scale = 2, 0.2, 0.5        # non-trivial settings to exercise
                                              # shuffle / activation / scaling

    x = jax.random.normal(kx, (B, Cin, H, W), dtype=jnp.float32)
    weight = jax.random.normal(kw, (Cout, Cin, K, K), dtype=jnp.float32) * 0.1
    bias = jax.random.normal(kb, (Cout,), dtype=jnp.float32) * 0.1

    out = shuffle_block(x, weight, bias, conv_groups=groups,
                        negative_slope=slope, res_scale=scale)
    out = jax.block_until_ready(out)

    ref = _reference(x, weight, bias, groups, slope, scale)
    assert out.shape == (B, Cout, H, W), out.shape
    max_err = float(jnp.max(jnp.abs(out - ref)))
    assert jnp.allclose(out, ref, atol=1e-4, rtol=1e-4), max_err
    print("KERNEL_OK")
</pallas_src>

<mosaic_0001>
module attributes {stable_mosaic.version = 11 : i64} {
  func.func @_shuffleblock_kernel(%arg0: i32, %arg1: memref<1x342x4xf32, #tpu.memory_space<vmem>>, %arg2: memref<9x4x8xf32, #tpu.memory_space<vmem>>, %arg3: memref<1x8xf32, #tpu.memory_space<vmem>>, %arg4: memref<1x288x8xf32, #tpu.memory_space<vmem>>) attributes {dimension_semantics = [#tpu.dimension_semantics<parallel>], iteration_bounds = array<i64: 2>, scalar_prefetch = 0 : i64, scratch_operands = 0 : i64, tpu.core_type = #tpu.core_type<tc>, window_params = [{transform_indices = @transform_0, window_bounds = array<i64: 1, 342, 4>}, {pipeline_mode = #tpu.pipeline_mode<synchronous>, transform_indices = @transform_1, window_bounds = array<i64: 9, 4, 8>}, {pipeline_mode = #tpu.pipeline_mode<synchronous>, transform_indices = @transform_2, window_bounds = array<i64: 1, 8>}, {transform_indices = @transform_3, window_bounds = array<i64: 1, 288, 8>}]} {
    %cst = arith.constant 0.000000e+00 : f32
    %0 = vector.broadcast %cst : f32 to vector<288x8xf32>
    %c0 = arith.constant 0 : index
    %c0_0 = arith.constant 0 : index
    %c0_1 = arith.constant 0 : index
    %1 = vector.load %arg1[%c0, %c0_0, %c0_1] : memref<1x342x4xf32, #tpu.memory_space<vmem>>, vector<1x288x4xf32>
    %2 = vector.shape_cast %1 : vector<1x288x4xf32> to vector<288x4xf32>
    %c0_2 = arith.constant 0 : index
    %c0_3 = arith.constant 0 : index
    %c0_4 = arith.constant 0 : index
    %3 = vector.load %arg2[%c0_2, %c0_3, %c0_4] : memref<9x4x8xf32, #tpu.memory_space<vmem>>, vector<1x4x8xf32>
    %4 = vector.shape_cast %3 : vector<1x4x8xf32> to vector<4x8xf32>
    %cst_5 = arith.constant dense<0.000000e+00> : vector<288x8xf32>
    %5 = tpu.matmul %2, %4, %cst_5 {dimension_numbers = #tpu.dot_dimension_numbers<[1], [0], [0], [1], [0, 0, 1, 1], [], []>} : vector<288x4xf32>, vector<4x8xf32>, vector<288x8xf32> -> vector<288x8xf32>
    %6 = arith.addf %0, %5 : vector<288x8xf32>
    %c0_6 = arith.constant 0 : index
    %c1 = arith.constant 1 : index
    %c0_7 = arith.constant 0 : index
    %7 = vector.load %arg1[%c0_6, %c1, %c0_7] : memref<1x342x4xf32, #tpu.memory_space<vmem>>, vector<1x288x4xf32>
    %8 = vector.shape_cast %7 : vector<1x288x4xf32> to vector<288x4xf32>
    %c1_8 = arith.constant 1 : index
    %c0_9 = arith.constant 0 : index
    %c0_10 = arith.constant 0 : index
    %9 = vector.load %arg2[%c1_8, %c0_9, %c0_10] : memref<9x4x8xf32, #tpu.memory_space<vmem>>, vector<1x4x8xf32>
    %10 = vector.shape_cast %9 : vector<1x4x8xf32> to vector<4x8xf32>
    %cst_11 = arith.constant dense<0.000000e+00> : vector<288x8xf32>
    %11 = tpu.matmul %8, %10, %cst_11 {dimension_numbers = #tpu.dot_dimension_numbers<[1], [0], [0], [1], [0, 0, 1, 1], [], []>} : vector<288x4xf32>, vector<4x8xf32>, vector<288x8xf32> -> vector<288x8xf32>
    %12 = arith.addf %6, %11 : vector<288x8xf32>
    %c0_12 = arith.constant 0 : index
    %c2 = arith.constant 2 : index
    %c0_13 = arith.constant 0 : index
    %13 = vector.load %arg1[%c0_12, %c2, %c0_13] : memref<1x342x4xf32, #tpu.memory_space<vmem>>, vector<1x288x4xf32>
    %14 = vector.shape_cast %13 : vector<1x288x4xf32> to vector<288x4xf32>
    %c2_14 = arith.constant 2 : index
    %c0_15 = arith.constant 0 : index
    %c0_16 = arith.constant 0 : index
    %15 = vector.load %arg2[%c2_14, %c0_15, %c0_16] : memref<9x4x8xf32, #tpu.memory_space<vmem>>, vector<1x4x8xf32>
    %16 = vector.shape_cast %15 : vector<1x4x8xf32> to vector<4x8xf32>
    %cst_17 = arith.constant dense<0.000000e+00> : vector<288x8xf32>
    %17 = tpu.matmul %14, %16, %cst_17 {dimension_numbers = #tpu.dot_dimension_numbers<[1], [0], [0], [1], [0, 0, 1, 1], [], []>} : vector<288x4xf32>, vector<4x8xf32>, vector<288x8xf32> -> vector<288x8xf32>
    %18 = arith.addf %12, %17 : vector<288x8xf32>
    %c0_18 = arith.constant 0 : index
    %c18 = arith.constant 18 : index
    %c0_19 = arith.constant 0 : index
    %19 = vector.load %arg1[%c0_18, %c18, %c0_19] : memref<1x342x4xf32, #tpu.memory_space<vmem>>, vector<1x288x4xf32>
    %20 = vector.shape_cast %19 : vector<1x288x4xf32> to vector<288x4xf32>
    %c3 = arith.constant 3 : index
    %c0_20 = arith.constant 0 : index
    %c0_21 = arith.constant 0 : index
    %21 = vector.load %arg2[%c3, %c0_20, %c0_21] : memref<9x4x8xf32, #tpu.memory_space<vmem>>, vector<1x4x8xf32>
    %22 = vector.shape_cast %21 : vector<1x4x8xf32> to vector<4x8xf32>
    %cst_22 = arith.constant dense<0.000000e+00> : vector<288x8xf32>
    %23 = tpu.matmul %20, %22, %cst_22 {dimension_numbers = #tpu.dot_dimension_numbers<[1], [0], [0], [1], [0, 0, 1, 1], [], []>} : vector<288x4xf32>, vector<4x8xf32>, vector<288x8xf32> -> vector<288x8xf32>
    %24 = arith.addf %18, %23 : vector<288x8xf32>
    %c0_23 = arith.constant 0 : index
    %c19 = arith.constant 19 : index
    %c0_24 = arith.constant 0 : index
    %25 = vector.load %arg1[%c0_23, %c19, %c0_24] : memref<1x342x4xf32, #tpu.memory_space<vmem>>, vector<1x288x4xf32>
    %26 = vector.shape_cast %25 : vector<1x288x4xf32> to vector<288x4xf32>
    %c4 = arith.constant 4 : index
    %c0_25 = arith.constant 0 : index
    %c0_26 = arith.constant 0 : index
    %27 = vector.load %arg2[%c4, %c0_25, %c0_26] : memref<9x4x8xf32, #tpu.memory_space<vmem>>, vector<1x4x8xf32>
    %28 = vector.shape_cast %27 : vector<1x4x8xf32> to vector<4x8xf32>
    %cst_27 = arith.constant dense<0.000000e+00> : vector<288x8xf32>
    %29 = tpu.matmul %26, %28, %cst_27 {dimension_numbers = #tpu.dot_dimension_numbers<[1], [0], [0], [1], [0, 0, 1, 1], [], []>} : vector<288x4xf32>, vector<4x8xf32>, vector<288x8xf32> -> vector<288x8xf32>
    %30 = arith.addf %24, %29 : vector<288x8xf32>
    %c0_28 = arith.constant 0 : index
    %c20 = arith.constant 20 : index
    %c0_29 = arith.constant 0 : index
    %31 = vector.load %arg1[%c0_28, %c20, %c0_29] : memref<1x342x4xf32, #tpu.memory_space<vmem>>, vector<1x288x4xf32>
    %32 = vector.shape_cast %31 : vector<1x288x4xf32> to vector<288x4xf32>
    %c5 = arith.constant 5 : index
    %c0_30 = arith.constant 0 : index
    %c0_31 = arith.constant 0 : index
    %33 = vector.load %arg2[%c5, %c0_30, %c0_31] : memref<9x4x8xf32, #tpu.memory_space<vmem>>, vector<1x4x8xf32>
    %34 = vector.shape_cast %33 : vector<1x4x8xf32> to vector<4x8xf32>
    %cst_32 = arith.constant dense<0.000000e+00> : vector<288x8xf32>
    %35 = tpu.matmul %32, %34, %cst_32 {dimension_numbers = #tpu.dot_dimension_numbers<[1], [0], [0], [1], [0, 0, 1, 1], [], []>} : vector<288x4xf32>, vector<4x8xf32>, vector<288x8xf32> -> vector<288x8xf32>
    %36 = arith.addf %30, %35 : vector<288x8xf32>
    %c0_33 = arith.constant 0 : index
    %c36 = arith.constant 36 : index
    %c0_34 = arith.constant 0 : index
    %37 = vector.load %arg1[%c0_33, %c36, %c0_34] : memref<1x342x4xf32, #tpu.memory_space<vmem>>, vector<1x288x4xf32>
    %38 = vector.shape_cast %37 : vector<1x288x4xf32> to vector<288x4xf32>
    %c6 = arith.constant 6 : index
    %c0_35 = arith.constant 0 : index
    %c0_36 = arith.constant 0 : index
    %39 = vector.load %arg2[%c6, %c0_35, %c0_36] : memref<9x4x8xf32, #tpu.memory_space<vmem>>, vector<1x4x8xf32>
    %40 = vector.shape_cast %39 : vector<1x4x8xf32> to vector<4x8xf32>
    %cst_37 = arith.constant dense<0.000000e+00> : vector<288x8xf32>
    %41 = tpu.matmul %38, %40, %cst_37 {dimension_numbers = #tpu.dot_dimension_numbers<[1], [0], [0], [1], [0, 0, 1, 1], [], []>} : vector<288x4xf32>, vector<4x8xf32>, vector<288x8xf32> -> vector<288x8xf32>
    %42 = arith.addf %36, %41 : vector<288x8xf32>
    %c0_38 = arith.constant 0 : index
    %c37 = arith.constant 37 : index
    %c0_39 = arith.constant 0 : index
    %43 = vector.load %arg1[%c0_38, %c37, %c0_39] : memref<1x342x4xf32, #tpu.memory_space<vmem>>, vector<1x288x4xf32>
    %44 = vector.shape_cast %43 : vector<1x288x4xf32> to vector<288x4xf32>
    %c7 = arith.constant 7 : index
    %c0_40 = arith.constant 0 : index
    %c0_41 = arith.constant 0 : index
    %45 = vector.load %arg2[%c7, %c0_40, %c0_41] : memref<9x4x8xf32, #tpu.memory_space<vmem>>, vector<1x4x8xf32>
    %46 = vector.shape_cast %45 : vector<1x4x8xf32> to vector<4x8xf32>
    %cst_42 = arith.constant dense<0.000000e+00> : vector<288x8xf32>
    %47 = tpu.matmul %44, %46, %cst_42 {dimension_numbers = #tpu.dot_dimension_numbers<[1], [0], [0], [1], [0, 0, 1, 1], [], []>} : vector<288x4xf32>, vector<4x8xf32>, vector<288x8xf32> -> vector<288x8xf32>
    %48 = arith.addf %42, %47 : vector<288x8xf32>
    %c0_43 = arith.constant 0 : index
    %c38 = arith.constant 38 : index
    %c0_44 = arith.constant 0 : index
    %49 = vector.load %arg1[%c0_43, %c38, %c0_44] : memref<1x342x4xf32, #tpu.memory_space<vmem>>, vector<1x288x4xf32>
    %50 = vector.shape_cast %49 : vector<1x288x4xf32> to vector<288x4xf32>
    %c8 = arith.constant 8 : index
    %c0_45 = arith.constant 0 : index
    %c0_46 = arith.constant 0 : index
    %51 = vector.load %arg2[%c8, %c0_45, %c0_46] : memref<9x4x8xf32, #tpu.memory_space<vmem>>, vector<1x4x8xf32>
    %52 = vector.shape_cast %51 : vector<1x4x8xf32> to vector<4x8xf32>
    %cst_47 = arith.constant dense<0.000000e+00> : vector<288x8xf32>
    %53 = tpu.matmul %50, %52, %cst_47 {dimension_numbers = #tpu.dot_dimension_numbers<[1], [0], [0], [1], [0, 0, 1, 1], [], []>} : vector<288x4xf32>, vector<4x8xf32>, vector<288x8xf32> -> vector<288x8xf32>
    %54 = arith.addf %48, %53 : vector<288x8xf32>
    %c0_48 = arith.constant 0 : index
    %c0_49 = arith.constant 0 : index
    %55 = vector.load %arg3[%c0_48, %c0_49] : memref<1x8xf32, #tpu.memory_space<vmem>>, vector<1x8xf32>
    %56 = vector.broadcast %55 : vector<1x8xf32> to vector<288x8xf32>
    %57 = arith.addf %54, %56 : vector<288x8xf32>
    %cst_50 = arith.constant 0.000000e+00 : f32
    %58 = vector.broadcast %cst_50 : f32 to vector<288x8xf32>
    %59 = arith.cmpf oge, %57, %58 : vector<288x8xf32>
    %cst_51 = arith.constant 2.000000e-01 : f32
    %60 = vector.broadcast %cst_51 : f32 to vector<288x8xf32>
    %61 = arith.mulf %60, %57 : vector<288x8xf32>
    %62 = arith.select %59, %57, %61 : vector<288x8xi1>, vector<288x8xf32>
    %cst_52 = arith.constant 5.000000e-01 : f32
    %63 = vector.broadcast %cst_52 : f32 to vector<288x8xf32>
    %64 = arith.mulf %62, %63 : vector<288x8xf32>
    %c0_53 = arith.constant 0 : index
    %c0_54 = arith.constant 0 : index
    %c0_55 = arith.constant 0 : index
    %65 = vector.load %arg4[%c0_53, %c0_54, %c0_55] : memref<1x288x8xf32, #tpu.memory_space<vmem>>, vector<1x288x8xf32>
    %66 = vector.shape_cast %65 : vector<1x288x8xf32> to vector<288x8xf32>
    %67 = vector.shape_cast %64 : vector<288x8xf32> to vector<1x288x8xf32>
    tpu.vector_store %arg4[%c0_53, %c0_54, %c0_55], %67 {strides = array<i32>} : memref<1x288x8xf32, #tpu.memory_space<vmem>>, vector<1x288x8xf32>,
    return
  }
  func.func @transform_0(%arg0: i32) -> (i32, i32, i32) {
    %c0_i32 = arith.constant 0 : i32
    %c0_i32_0 = arith.constant 0 : i32
    %c0_i32_1 = arith.constant 0 : i32
    return %arg0, %c0_i32, %c0_i32_0 : i32, i32, i32
  }
  func.func @transform_1(%arg0: i32) -> (i32, i32, i32) {
    %c0_i32 = arith.constant 0 : i32
    %c0_i32_0 = arith.constant 0 : i32
    %c0_i32_1 = arith.constant 0 : i32
    %c0_i32_2 = arith.constant 0 : i32
    return %c0_i32, %c0_i32_0, %c0_i32_1 : i32, i32, i32
  }
  func.func @transform_2(%arg0: i32) -> (i32, i32) {
    %c0_i32 = arith.constant 0 : i32
    %c0_i32_0 = arith.constant 0 : i32
    %c0_i32_1 = arith.constant 0 : i32
    return %c0_i32, %c0_i32_0 : i32, i32
  }
  func.func @transform_3(%arg0: i32) -> (i32, i32, i32) {
    %c0_i32 = arith.constant 0 : i32
    %c0_i32_0 = arith.constant 0 : i32
    %c0_i32_1 = arith.constant 0 : i32
    return %arg0, %c0_i32, %c0_i32_0 : i32, i32, i32
  }
}

</mosaic_0001>

<llo_original>
// kernel: tpu_custom_call.1
$region0: #{tpu_custom_call.1}
  #allocation0 [shape = 'u32[]', space=smem, size = 0x4, offset = 0x4, fixed_abs, tag = 'smem constant byte address 0x4 - core index']
  #allocation1 [shape = 'u32[144,128]{1,0:T(1,128)}', space=vmem, size = 0x12000, scoped, tag = 'internal scratch']
  %s0 = inlined_call_operand.vmem [shape: f32[2,342,4], index: 0, kind: input, shape index: {}]
  %s1 = inlined_call_operand.vmem [shape: f32[9,4,8], index: 1, kind: input, shape index: {}]
  %s2 = inlined_call_operand.vmem [shape: f32[1,8], index: 2, kind: input, shape index: {}]
  %s3 = inlined_call_operand.vmem [shape: f32[2,288,8], index: 3, kind: output, shape index: {}]
  %s4 = sld [smem:[#allocation0]]
  $region45: #{tpu_custom_call.1} parent=0
    _
  %s6 = ssub.s32 1, %s4
  %s7 = scalar_select 0, %s6, %s4
  loop: start=0, step=1, limit=4
  $region2: #{tpu_custom_call.1} parent=0 // loop_pre_header
    _
  $region3: #{tpu_custom_call.1} parent=0 // loop_header
    %s9 = sphi 0, %s13
    %p10 = scmp.ge.s32.totalorder %s9, 4
    %s19 = sphi 0, %s21
    %s22 = sphi 0, %s19
    %s23 = sphi 0, %s22
    %s39 = sphi 0, %s23
    %s43 = sphi 0, %s43
    %s45 = sphi 0, %s43
    %s46 = sphi 0, %s45
    %s60 = sphi 0, %s46
    %s64 = sphi 0, %s64
    %s66 = sphi 0, %s64
    %s67 = sphi 0, %s66
    %s81 = sphi 0, %s67
    %s87 = sphi 0, %s89
    %s90 = sphi 0, %s87
    %s91 = sphi 0, %s90
    %s107 = sphi 0, %s91
  $region4: #{tpu_custom_call.1} parent=0 // loop_header_branch
    %12 = sbr.rel (%p10) target = $region8
  $region5: #{tpu_custom_call.1} parent=0 // loop_body
    %s14 = ssub.s32 %s9, 1
    %s15 = ssub.s32 %s9, 2
    %s16 = sadd.s32 %s9, 1
    %s17 = ssub.s32 %s9, %s16
    %p18 = scmp.eq.s32.totalorder %s17, 0
    %s20 = sadd.s32 %s19, 1
    %s21 = scalar_select %p18, %s19, %s20
    %p24 = pneg %p18
    %p25 = scmp.eq.s32.totalorder %s9, 1
    %p26 = por %p24, %p25
    %p27 = scmp.ne.s32.totalorder %s19, %s22
    %p28 = scmp.eq.s32.totalorder %s9, 0
    %p29 = por %p27, %p28
    %p30 = scmp.ne.s32.totalorder %s19, %s22
    %p31 = scmp.eq.s32.totalorder %s14, 1
    %p32 = por %p30, %p31
    %p33 = scmp.ne.s32.totalorder %s22, %s23
    %p34 = scmp.eq.s32.totalorder %s14, 0
    %p35 = por %p33, %p34
    %p36 = scmp.ne.s32.totalorder %s22, %s23
    %p37 = scmp.eq.s32.totalorder %s15, 1
    %p38 = por %p36, %p37
    %p40 = scmp.ne.s32.totalorder %s23, %s39
    %p41 = scmp.eq.s32.totalorder %s15, 0
    %p42 = por %p40, %p41
    %s44 = sadd.s32 %s43, 1
    %p47 = scmp.eq.s32.totalorder %s9, 1
    %p48 = scmp.ne.s32.totalorder %s43, %s45
    %p49 = scmp.eq.s32.totalorder %s9, 0
    %p50 = por %p48, %p49
    %p51 = scmp.ne.s32.totalorder %s43, %s45
    %p52 = scmp.eq.s32.totalorder %s14, 1
    %p53 = por %p51, %p52
    %p54 = scmp.ne.s32.totalorder %s45, %s46
    %p55 = scmp.eq.s32.totalorder %s14, 0
    %p56 = por %p54, %p55
    %p57 = scmp.ne.s32.totalorder %s45, %s46
    %p58 = scmp.eq.s32.totalorder %s15, 1
    %p59 = por %p57, %p58
    %p61 = scmp.ne.s32.totalorder %s46, %s60
    %p62 = scmp.eq.s32.totalorder %s15, 0
    %p63 = por %p61, %p62
    %s65 = sadd.s32 %s64, 1
    %p68 = scmp.eq.s32.totalorder %s9, 1
    %p69 = scmp.ne.s32.totalorder %s64, %s66
    %p70 = scmp.eq.s32.totalorder %s9, 0
    %p71 = por %p69, %p70
    %p72 = scmp.ne.s32.totalorder %s64, %s66
    %p73 = scmp.eq.s32.totalorder %s14, 1
    %p74 = por %p72, %p73
    %p75 = scmp.ne.s32.totalorder %s66, %s67
    %p76 = scmp.eq.s32.totalorder %s14, 0
    %p77 = por %p75, %p76
    %p78 = scmp.ne.s32.totalorder %s66, %s67
    %p79 = scmp.eq.s32.totalorder %s15, 1
    %p80 = por %p78, %p79
    %p82 = scmp.ne.s32.totalorder %s67, %s81
    %p83 = scmp.eq.s32.totalorder %s15, 0
    %p84 = por %p82, %p83
    %s85 = ssub.s32 %s9, %s16
    %p86 = scmp.eq.s32.totalorder %s85, 0
    %s88 = sadd.s32 %s87, 1
    %s89 = scalar_select %p86, %s87, %s88
    %p92 = pneg %p86
    %p93 = scmp.eq.s32.totalorder %s9, 1
    %p94 = por %p92, %p93
    %p95 = scmp.ne.s32.totalorder %s87, %s90
    %p96 = scmp.eq.s32.totalorder %s9, 0
    %p97 = por %p95, %p96
    %p98 = scmp.ne.s32.totalorder %s87, %s90
    %p99 = scmp.eq.s32.totalorder %s14, 1
    %p100 = por %p98, %p99
    %p101 = scmp.ne.s32.totalorder %s90, %s91
    %p102 = scmp.eq.s32.totalorder %s14, 0
    %p103 = por %p101, %p102
    %p104 = scmp.ne.s32.totalorder %s90, %s91
    %p105 = scmp.eq.s32.totalorder %s15, 1
    %p106 = por %p104, %p105
    %p108 = scmp.ne.s32.totalorder %s91, %s107
    %p109 = scmp.eq.s32.totalorder %s15, 0
    %p110 = por %p108, %p109
    %p111 = scmp.le.s32.totalorder 1, %s9
    %p112 = scmp.lt.s32.totalorder %s9, 3
    %p113 = pnand %p111, %p112
    %p114 = pneg %p113
    // Predicated region
    $region9: #{tpu_custom_call.1} parent=5 // pred_check
      _
    $region10: #{tpu_custom_call.1} parent=5 // pred_check_branch
      %116 = sbr.rel (%p113) target = $region12
    $region11: #{tpu_custom_call.1} parent=5 // pred_region
      %s117 = ssub.s32 %s9, 1
      // Predicated region
      $region13: #{tpu_custom_call.1} parent=11 // pred_check
        %p118 = pneg %p56
      $region14: #{tpu_custom_call.1} parent=11 // pred_check_branch
        %120 = sbr.rel (%p118) target = $region16
      $region15: #{tpu_custom_call.1} parent=11 // pred_region
        _
      $region16: #{tpu_custom_call.1} parent=11 // pred_fallthru
        _
      // Predicated region
      $region17: #{tpu_custom_call.1} parent=11 // pred_check
        %p121 = pneg %p77
      $region18: #{tpu_custom_call.1} parent=11 // pred_check_branch
        %123 = sbr.rel (%p121) target = $region20
      $region19: #{tpu_custom_call.1} parent=11 // pred_region
        _
      $region20: #{tpu_custom_call.1} parent=11 // pred_fallthru
        _
    $region12: #{tpu_custom_call.1} parent=5 // pred_fallthru
      _
    %p124 = scmp.lt.s32.totalorder %s9, 2
    // Predicated region
    $region21: #{tpu_custom_call.1} parent=5 // pred_check
      %p125 = pneg %p124
    $region22: #{tpu_custom_call.1} parent=5 // pred_check_branch
      %127 = sbr.rel (%p125) target = $region24
    $region23: #{tpu_custom_call.1} parent=5 // pred_region
      // Predicated region
      $region25: #{tpu_custom_call.1} parent=23 // pred_check
        %p128 = pneg %p29
      $region26: #{tpu_custom_call.1} parent=23 // pred_check_branch
        %130 = sbr.rel (%p128) target = $region28
      $region27: #{tpu_custom_call.1} parent=23 // pred_region
        %p131 = scmp.lt.s32.totalorder %s9, 1
        %s132 = scalar_select %p131, %s9, 1
        %s133 = smul.addr %s132, 43
        %s134 = smul.addr %s133, 8
        %s135 = scalar_lea.vmem %s0, %s134
      $region28: #{tpu_custom_call.1} parent=23 // pred_fallthru
        _
    $region24: #{tpu_custom_call.1} parent=5 // pred_fallthru
      _
    %p136 = scmp.le.s32.totalorder 1, %s9
    %p137 = scmp.lt.s32.totalorder %s9, 3
    %p138 = pnand %p136, %p137
    %p139 = pneg %p138
    // Predicated region
    $region29: #{tpu_custom_call.1} parent=5 // pred_check
      _
    $region30: #{tpu_custom_call.1} parent=5 // pred_check_branch
      %141 = sbr.rel (%p138) target = $region32
    $region31: #{tpu_custom_call.1} parent=5 // pred_region
      %s142 = ssub.s32 %s9, 1
      %p143 = scmp.lt.s32.totalorder %s14, 1
      %s144 = scalar_select %p143, %s14, 1
      %s145 = smul.addr %s144, 43
      %s146 = smul.addr %s145, 8
      %s147 = scalar_lea.vmem %s0, %s146
      %p148 = pneg %p35
      %p149 = pneg %p32
      %p150 = pneg %p56
      %p151 = pneg %p53
      %p152 = pneg %p77
      %p153 = pneg %p74
      %p154 = pneg %p103
      %p155 = pneg %p100
      %p156 = scmp.lt.s32.totalorder %s14, 1
      %s157 = scalar_select %p156, %s14, 1
      %s158 = smul.addr %s157, 36
      %s159 = smul.addr %s158, 8
      %s160 = scalar_lea.vmem %s3, %s159
      %p161 = scmp.lt.s32.totalorder %s14, 1
      %s162 = scalar_select %p161, %s14, 1
      %s163 = smul.addr %s162, 43
      %s164 = smul.addr %s163, 8
      %s165 = scalar_lea.vmem %s0, %s164
      %p166 = scmp.lt.s32.totalorder %s14, 1
      %s167 = scalar_select %p166, %s14, 1
      %s168 = smul.addr %s167, 36
      %s169 = smul.addr %s168, 8
      %s170 = scalar_lea.vmem %s3, %s169
      %v171 = vld [vmem:[%s165] sm:$0xff]
      %v172 = vld [vmem:[%s165 + $0x8] sm:$0xff]
      %v173 = vld [vmem:[%s165 + $0x10] sm:$0xff]
      %v174 = vld [vmem:[%s165 + $0x18] sm:$0xff]
      %v175 = vld [vmem:[%s165 + $0x20] sm:$0xff]
      %v176 = vld [vmem:[%s165 + $0x28] sm:$0xff]
      %v177 = vld [vmem:[%s165 + $0x30] sm:$0xff]
      %v178 = vld [vmem:[%s165 + $0x38] sm:$0xff]
      %v179 = vld [vmem:[%s165 + $0x40] sm:$0xff]
      %v180 = vld [vmem:[%s165 + $0x48] sm:$0xff]
      %v181 = vld [vmem:[%s165 + $0x50] sm:$0xff]
      %v182 = vld [vmem:[%s165 + $0x58] sm:$0xff]
      %v183 = vld [vmem:[%s165 + $0x60] sm:$0xff]
      %v184 = vld [vmem:[%s165 + $0x68] sm:$0xff]
      %v185 = vld [vmem:[%s165 + $0x70] sm:$0xff]
      %v186 = vld [vmem:[%s165 + $0x78] sm:$0xff]
      %v187 = vld [vmem:[%s165 + $0x80] sm:$0xff]
      %v188 = vld [vmem:[%s165 + $0x88] sm:$0xff]
      %v189 = vld [vmem:[%s165 + $0x90] sm:$0xff]
      %v190 = vld [vmem:[%s165 + $0x98] sm:$0xff]
      %v191 = vld [vmem:[%s165 + $0xa0] sm:$0xff]
      %v192 = vld [vmem:[%s165 + $0xa8] sm:$0xff]
      %v193 = vld [vmem:[%s165 + $0xb0] sm:$0xff]
      %v194 = vld [vmem:[%s165 + $0xb8] sm:$0xff]
      %v195 = vld [vmem:[%s165 + $0xc0] sm:$0xff]
      %v196 = vld [vmem:[%s165 + $0xc8] sm:$0xff]
      %v197 = vld [vmem:[%s165 + $0xd0] sm:$0xff]
      %v198 = vld [vmem:[%s165 + $0xd8] sm:$0xff]
      %v199 = vld [vmem:[%s165 + $0xe0] sm:$0xff]
      %v200 = vld [vmem:[%s165 + $0xe8] sm:$0xff]
      %v201 = vld [vmem:[%s165 + $0xf0] sm:$0xff]
      %v202 = vld [vmem:[%s165 + $0xf8] sm:$0xff]
      %v203 = vld [vmem:[%s165 + $0x100] sm:$0xff]
      %v204 = vld [vmem:[%s165 + $0x108] sm:$0xff]
      %v205 = vld [vmem:[%s165 + $0x110] sm:$0xff]
      %v206 = vld [vmem:[%s165 + $0x118] sm:$0xff]
      %v207 = vld [vmem:[%s1] sm:$0xf]
      %v208 = vld [vmem:[%s165 + $0x1] sm:$0xff]
      %v209 = vld [vmem:[%s165 + $0x9] sm:$0xff]
      %v210 = vld [vmem:[%s165 + $0x11] sm:$0xff]
      %v211 = vld [vmem:[%s165 + $0x19] sm:$0xff]
      %v212 = vld [vmem:[%s165 + $0x21] sm:$0xff]
      %v213 = vld [vmem:[%s165 + $0x29] sm:$0xff]
      %v214 = vld [vmem:[%s165 + $0x31] sm:$0xff]
      %v215 = vld [vmem:[%s165 + $0x39] sm:$0xff]
      %v216 = vld [vmem:[%s165 + $0x41] sm:$0xff]
      %v217 = vld [vmem:[%s165 + $0x49] sm:$0xff]
      %v218 = vld [vmem:[%s165 + $0x51] sm:$0xff]
      %v219 = vld [vmem:[%s165 + $0x59] sm:$0xff]
      %v220 = vld [vmem:[%s165 + $0x61] sm:$0xff]
      %v221 = vld [vmem:[%s165 + $0x69] sm:$0xff]
      %v222 = vld [vmem:[%s165 + $0x71] sm:$0xff]
      %v223 = vld [vmem:[%s165 + $0x79] sm:$0xff]
      %v224 = vld [vmem:[%s165 + $0x81] sm:$0xff]
      %v225 = vld [vmem:[%s165 + $0x89] sm:$0xff]
      %v226 = vld [vmem:[%s165 + $0x91] sm:$0xff]
      %v227 = vld [vmem:[%s165 + $0x99] sm:$0xff]
      %v228 = vld [vmem:[%s165 + $0xa1] sm:$0xff]
      %v229 = vld [vmem:[%s165 + $0xa9] sm:$0xff]
      %v230 = vld [vmem:[%s165 + $0xb1] sm:$0xff]
      %v231 = vld [vmem:[%s165 + $0xb9] sm:$0xff]
      %v232 = vld [vmem:[%s165 + $0xc1] sm:$0xff]
      %v233 = vld [vmem:[%s165 + $0xc9] sm:$0xff]
      %v234 = vld [vmem:[%s165 + $0xd1] sm:$0xff]
      %v235 = vld [vmem:[%s165 + $0xd9] sm:$0xff]
      %v236 = vld [vmem:[%s165 + $0xe1] sm:$0xff]
      %v237 = vld [vmem:[%s165 + $0xe9] sm:$0xff]
      %v238 = vld [vmem:[%s165 + $0xf1] sm:$0xff]
      %v239 = vld [vmem:[%s165 + $0xf9] sm:$0xff]
      %v240 = vld [vmem:[%s165 + $0x101] sm:$0xff]
      %v241 = vld [vmem:[%s165 + $0x109] sm:$0xff]
      %v242 = vld [vmem:[%s165 + $0x111] sm:$0xff]
      %v243 = vld [vmem:[%s165 + $0x119] sm:$0xff]
      %s244 = scalar_lea.vmem %s1, 4
      %v245 = vld [vmem:[%s244] sm:$0xf]
      %vm246 = vcmask 31744
      %v248 = vsel %vm246, %v208, 0
      %v251 = vsel %vm246, %v209, 0
      %v254 = vsel %vm246, %v210, 0
      %v257 = vsel %vm246, %v211, 0
      %v260 = vsel %vm246, %v212, 0
      %v263 = vsel %vm246, %v213, 0
      %v266 = vsel %vm246, %v214, 0
      %v269 = vsel %vm246, %v215, 0
      %v272 = vsel %vm246, %v216, 0
      %v275 = vsel %vm246, %v217, 0
      %v278 = vsel %vm246, %v218, 0
      %v281 = vsel %vm246, %v219, 0
      %v284 = vsel %vm246, %v220, 0
      %v287 = vsel %vm246, %v221, 0
      %v290 = vsel %vm246, %v222, 0
      %v293 = vsel %vm246, %v223, 0
      %v296 = vsel %vm246, %v224, 0
      %v299 = vsel %vm246, %v225, 0
      %v302 = vsel %vm246, %v226, 0
      %v305 = vsel %vm246, %v227, 0
      %v308 = vsel %vm246, %v228, 0
      %v311 = vsel %vm246, %v229, 0
      %v314 = vsel %vm246, %v230, 0
      %v317 = vsel %vm246, %v231, 0
      %v320 = vsel %vm246, %v232, 0
      %v323 = vsel %vm246, %v233, 0
      %v326 = vsel %vm246, %v234, 0
      %v329 = vsel %vm246, %v235, 0
      %v332 = vsel %vm246, %v236, 0
      %v335 = vsel %vm246, %v237, 0
      %v338 = vsel %vm246, %v238, 0
      %v341 = vsel %vm246, %v239, 0
      %v344 = vsel %vm246, %v240, 0
      %v347 = vsel %vm246, %v241, 0
      %v350 = vsel %vm246, %v242, 0
      %v353 = vsel %vm246, %v243, 0
      %vm355 = vcmask 1043456
      %v357 = vsel %vm355, %v245, 0
      %359 = vmatprep.subr.mxu0 0.0
      %360 = vmatpush1.msra.mxu0 0.0
      %361 = vmatprep.subr.mxu0 0.0
      %362 = vmatpush1.msra.mxu0 0.0
      %363 = vmatprep.subr.mxu0 0.0
      %364 = vmatpush1.msra.mxu0 0.0
      %365 = vmatprep.subr.mxu0 0.0
      %366 = vmatpush1.msra.mxu0 0.0
      %367 = vmatprep.subr.mxu0 0.0
      %368 = vmatpush1.msra.mxu0 0.0
      %369 = vmatprep.subr.mxu0 0.0
      %370 = vmatpush1.msra.mxu0 0.0
      %371 = vmatprep.subr.mxu0 0.0
      %372 = vmatpush1.msra.mxu0 0.0
      %373 = vmatprep.subr.mxu0 0.0
      %374 = vmatpush1.msra.mxu0 0.0
      %375 = vmatprep.subr.mxu0 0.0
      %376 = vmatpush1.msra.mxu0 0.0
      %377 = vmatprep.subr.mxu0 0.0
      %378 = vmatpush1.msra.mxu0 0.0
      %379 = vmatprep.subr.mxu0 0.0
      %380 = vmatpush1.msra.mxu0 0.0
      %381 = vmatprep.subr.mxu0 0.0
      %382 = vmatpush1.msra.mxu0 0.0
      %383 = vmatprep.subr.mxu0 0.0
      %384 = vmatpush1.msra.mxu0 0.0
      %385 = vmatprep.subr.mxu0 0.0
      %386 = vmatpush1.msra.mxu0 0.0
      %387 = vmatprep.subr.mxu0 0.0
      %388 = vmatpush1.msra.mxu0 0.0
      %389 = vmatprep.subr.mxu0 0.0
      %390 = vmatpush1.msra.mxu0 %v357
      %391 = vmatprep.subr.mxu0 0.0
      %392 = vmatpush2.msra.mxu0 0.0
      %393 = vmatprep.subr.mxu0 0.0
      %394 = vmatpush2.msra.mxu0 0.0
      %395 = vmatprep.subr.mxu0 0.0
      %396 = vmatpush2.msra.mxu0 0.0
      %397 = vmatprep.subr.mxu0 0.0
      %398 = vmatpush2.msra.mxu0 0.0
      %399 = vmatprep.subr.mxu0 0.0
      %400 = vmatpush2.msra.mxu0 0.0
      %401 = vmatprep.subr.mxu0 0.0
      %402 = vmatpush2.msra.mxu0 0.0
      %403 = vmatprep.subr.mxu0 0.0
      %404 = vmatpush2.msra.mxu0 0.0
      %405 = vmatprep.subr.mxu0 0.0
      %406 = vmatpush2.msra.mxu0 0.0
      %407 = vmatprep.subr.mxu0 0.0
      %408 = vmatpush2.msra.mxu0 0.0
      %409 = vmatprep.subr.mxu0 0.0
      %410 = vmatpush2.msra.mxu0 0.0
      %411 = vmatprep.subr.mxu0 0.0
      %412 = vmatpush2.msra.mxu0 0.0
      %413 = vmatprep.subr.mxu0 0.0
      %414 = vmatpush2.msra.mxu0 0.0
      %415 = vmatprep.subr.mxu0 0.0
      %416 = vmatpush2.msra.mxu0 0.0
      %417 = vmatprep.subr.mxu0 0.0
      %418 = vmatpush2.msra.mxu0 0.0
      %419 = vmatprep.subr.mxu0 0.0
      %420 = vmatpush2.msra.mxu0 0.0
      %421 = vmatprep.subr.mxu0 0.0
      %422 = vmatpush2.msra.mxu0 0.0
      %423 = vmatprep.mubr.f32.mxu0 0.0
      %424 = vmatmul.mubr.f32.gmra.mxu0 %v248
      %v425 = vpop.f32.mrf.mxu0
      %v426 = vadd.f32 0.0, %v425
      %v427 = vpop.f32.mrf.mxu0
      %428 = vmatprep.mubr.f32.mxu0 0.0
      %429 = vmatmul.mubr.f32.gmra.mxu0 %v251
      %v430 = vpop.f32.mrf.mxu0
      %v431 = vadd.f32 0.0, %v430
      %v432 = vpop.f32.mrf.mxu0
      %433 = vmatprep.mubr.f32.mxu0 0.0
      %434 = vmatmul.mubr.f32.gmra.mxu0 %v254
      %v435 = vpop.f32.mrf.mxu0
      %v436 = vadd.f32 0.0, %v435
      %v437 = vpop.f32.mrf.mxu0
      %438 = vmatprep.mubr.f32.mxu0 0.0
      %439 = vmatmul.mubr.f32.gmra.mxu0 %v257
      %v440 = vpop.f32.mrf.mxu0
      %v441 = vadd.f32 0.0, %v440
      %v442 = vpop.f32.mrf.mxu0
      %443 = vmatprep.mubr.f32.mxu0 0.0
      %444 = vmatmul.mubr.f32.gmra.mxu0 %v260
      %v445 = vpop.f32.mrf.mxu0
      %v446 = vadd.f32 0.0, %v445
      %v447 = vpop.f32.mrf.mxu0
      %448 = vmatprep.mubr.f32.mxu0 0.0
      %449 = vmatmul.mubr.f32.gmra.mxu0 %v263
      %v450 = vpop.f32.mrf.mxu0
      %v451 = vadd.f32 0.0, %v450
      %v452 = vpop.f32.mrf.mxu0
      %453 = vmatprep.mubr.f32.mxu0 0.0
      %454 = vmatmul.mubr.f32.gmra.mxu0 %v266
      %v455 = vpop.f32.mrf.mxu0
      %v456 = vadd.f32 0.0, %v455
      %v457 = vpop.f32.mrf.mxu0
      %458 = vmatprep.mubr.f32.mxu0 0.0
      %459 = vmatmul.mubr.f32.gmra.mxu0 %v269
      %v460 = vpop.f32.mrf.mxu0
      %v461 = vadd.f32 0.0, %v460
      %v462 = vpop.f32.mrf.mxu0
      %463 = vmatprep.mubr.f32.mxu0 0.0
      %464 = vmatmul.mubr.f32.gmra.mxu0 %v272
      %v465 = vpop.f32.mrf.mxu0
      %v466 = vadd.f32 0.0, %v465
      %v467 = vpop.f32.mrf.mxu0
      %468 = vmatprep.mubr.f32.mxu0 0.0
      %469 = vmatmul.mubr.f32.gmra.mxu0 %v275
      %v470 = vpop.f32.mrf.mxu0
      %v471 = vadd.f32 0.0, %v470
      %v472 = vpop.f32.mrf.mxu0
      %473 = vmatprep.mubr.f32.mxu0 0.0
      %474 = vmatmul.mubr.f32.gmra.mxu0 %v278
      %v475 = vpop.f32.mrf.mxu0
      %v476 = vadd.f32 0.0, %v475
      %v477 = vpop.f32.mrf.mxu0
      %478 = vmatprep.mubr.f32.mxu0 0.0
      %479 = vmatmul.mubr.f32.gmra.mxu0 %v281
      %v480 = vpop.f32.mrf.mxu0
      %v481 = vadd.f32 0.0, %v480
      %v482 = vpop.f32.mrf.mxu0
      %483 = vmatprep.mubr.f32.mxu0 0.0
      %484 = vmatmul.mubr.f32.gmra.mxu0 %v284
      %v485 = vpop.f32.mrf.mxu0
      %v486 = vadd.f32 0.0, %v485
      %v487 = vpop.f32.mrf.mxu0
      %488 = vmatprep.mubr.f32.mxu0 0.0
      %489 = vmatmul.mubr.f32.gmra.mxu0 %v287
      %v490 = vpop.f32.mrf.mxu0
      %v491 = vadd.f32 0.0, %v490
      %v492 = vpop.f32.mrf.mxu0
      %493 = vmatprep.mubr.f32.mxu0 0.0
      %494 = vmatmul.mubr.f32.gmra.mxu0 %v290
      %v495 = vpop.f32.mrf.mxu0
      %v496 = vadd.f32 0.0, %v495
      %v497 = vpop.f32.mrf.mxu0
      %498 = vmatprep.mubr.f32.mxu0 0.0
      %499 = vmatmul.mubr.f32.gmra.mxu0 %v293
      %v500 = vpop.f32.mrf.mxu0
      %v501 = vadd.f32 0.0, %v500
      %v502 = vpop.f32.mrf.mxu0
      %503 = vmatprep.mubr.f32.mxu0 0.0
      %504 = vmatmul.mubr.f32.gmra.mxu0 %v296
      %v505 = vpop.f32.mrf.mxu0
      %v506 = vadd.f32 0.0, %v505
      %v507 = vpop.f32.mrf.mxu0
      %508 = vmatprep.mubr.f32.mxu0 0.0
      %509 = vmatmul.mubr.f32.gmra.mxu0 %v299
      %v510 = vpop.f32.mrf.mxu0
      %v511 = vadd.f32 0.0, %v510
      %v512 = vpop.f32.mrf.mxu0
      %513 = vmatprep.mubr.f32.mxu0 0.0
      %514 = vmatmul.mubr.f32.gmra.mxu0 %v302
      %v515 = vpop.f32.mrf.mxu0
      %v516 = vadd.f32 0.0, %v515
      %v517 = vpop.f32.mrf.mxu0
      %518 = vmatprep.mubr.f32.mxu0 0.0
      %519 = vmatmul.mubr.f32.gmra.mxu0 %v305
      %v520 = vpop.f32.mrf.mxu0
      %v521 = vadd.f32 0.0, %v520
      %v522 = vpop.f32.mrf.mxu0
      %523 = vmatprep.mubr.f32.mxu0 0.0
      %524 = vmatmul.mubr.f32.gmra.mxu0 %v308
      %v525 = vpop.f32.mrf.mxu0
      %v526 = vadd.f32 0.0, %v525
      %v527 = vpop.f32.mrf.mxu0
      %528 = vmatprep.mubr.f32.mxu0 0.0
      %529 = vmatmul.mubr.f32.gmra.mxu0 %v311
      %v530 = vpop.f32.mrf.mxu0
      %v531 = vadd.f32 0.0, %v530
      %v532 = vpop.f32.mrf.mxu0
      %533 = vmatprep.mubr.f32.mxu0 0.0
      %534 = vmatmul.mubr.f32.gmra.mxu0 %v314
      %v535 = vpop.f32.mrf.mxu0
      %v536 = vadd.f32 0.0, %v535
      %v537 = vpop.f32.mrf.mxu0
      %538 = vmatprep.mubr.f32.mxu0 0.0
      %539 = vmatmul.mubr.f32.gmra.mxu0 %v317
      %v540 = vpop.f32.mrf.mxu0
      %v541 = vadd.f32 0.0, %v540
      %v542 = vpop.f32.mrf.mxu0
      %543 = vmatprep.mubr.f32.mxu0 0.0
      %544 = vmatmul.mubr.f32.gmra.mxu0 %v320
      %v545 = vpop.f32.mrf.mxu0
      %v546 = vadd.f32 0.0, %v545
      %v547 = vpop.f32.mrf.mxu0
      %548 = vmatprep.mubr.f32.mxu0 0.0
      %549 = vmatmul.mubr.f32.gmra.mxu0 %v323
      %v550 = vpop.f32.mrf.mxu0
      %v551 = vadd.f32 0.0, %v550
      %v552 = vpop.f32.mrf.mxu0
      %553 = vmatprep.mubr.f32.mxu0 0.0
      %554 = vmatmul.mubr.f32.gmra.mxu0 %v326
      %v555 = vpop.f32.mrf.mxu0
      %v556 = vadd.f32 0.0, %v555
      %v557 = vpop.f32.mrf.mxu0
      %558 = vmatprep.mubr.f32.mxu0 0.0
      %559 = vmatmul.mubr.f32.gmra.mxu0 %v329
      %v560 = vpop.f32.mrf.mxu0
      %v561 = vadd.f32 0.0, %v560
      %v562 = vpop.f32.mrf.mxu0
      %563 = vmatprep.mubr.f32.mxu0 0.0
      %564 = vmatmul.mubr.f32.gmra.mxu0 %v332
      %v565 = vpop.f32.mrf.mxu0
      %v566 = vadd.f32 0.0, %v565
      %v567 = vpop.f32.mrf.mxu0
      %568 = vmatprep.mubr.f32.mxu0 0.0
      %569 = vmatmul.mubr.f32.gmra.mxu0 %v335
      %v570 = vpop.f32.mrf.mxu0
      %v571 = vadd.f32 0.0, %v570
      %v572 = vpop.f32.mrf.mxu0
      %573 = vmatprep.mubr.f32.mxu0 0.0
      %574 = vmatmul.mubr.f32.gmra.mxu0 %v338
      %v575 = vpop.f32.mrf.mxu0
      %v576 = vadd.f32 0.0, %v575
      %v577 = vpop.f32.mrf.mxu0
      %578 = vmatprep.mubr.f32.mxu0 0.0
      %579 = vmatmul.mubr.f32.gmra.mxu0 %v341
      %v580 = vpop.f32.mrf.mxu0
      %v581 = vadd.f32 0.0, %v580
      %v582 = vpop.f32.mrf.mxu0
      %583 = vmatprep.mubr.f32.mxu0 0.0
      %584 = vmatmul.mubr.f32.gmra.mxu0 %v344
      %v585 = vpop.f32.mrf.mxu0
      %v586 = vadd.f32 0.0, %v585
      %v587 = vpop.f32.mrf.mxu0
      %588 = vmatprep.mubr.f32.mxu0 0.0
      %589 = vmatmul.mubr.f32.gmra.mxu0 %v347
      %v590 = vpop.f32.mrf.mxu0
      %v591 = vadd.f32 0.0, %v590
      %v592 = vpop.f32.mrf.mxu0
      %593 = vmatprep.mubr.f32.mxu0 0.0
      %594 = vmatmul.mubr.f32.gmra.mxu0 %v350
      %v595 = vpop.f32.mrf.mxu0
      %v596 = vadd.f32 0.0, %v595
      %v597 = vpop.f32.mrf.mxu0
      %598 = vmatprep.mubr.f32.mxu0 0.0
      %599 = vmatmul.mubr.f32.gmra.mxu0 %v353
      %v600 = vpop.f32.mrf.mxu0
      %v601 = vadd.f32 0.0, %v600
      %v602 = vpop.f32.mrf.mxu0
      %603 = vdwg.mxu0
      %v605 = vsel %vm246, %v171, 0
      %v608 = vsel %vm246, %v172, 0
      %v611 = vsel %vm246, %v173, 0
      %v614 = vsel %vm246, %v174, 0
      %v617 = vsel %vm246, %v175, 0
      %v620 = vsel %vm246, %v176, 0
      %v623 = vsel %vm246, %v177, 0
      %v626 = vsel %vm246, %v178, 0
      %v629 = vsel %vm246, %v179, 0
      %v632 = vsel %vm246, %v180, 0
      %v635 = vsel %vm246, %v181, 0
      %v638 = vsel %vm246, %v182, 0
      %v641 = vsel %vm246, %v183, 0
      %v644 = vsel %vm246, %v184, 0
      %v647 = vsel %vm246, %v185, 0
      %v650 = vsel %vm246, %v186, 0
      %v653 = vsel %vm246, %v187, 0
      %v656 = vsel %vm246, %v188, 0
      %v659 = vsel %vm246, %v189, 0
      %v662 = vsel %vm246, %v190, 0
      %v665 = vsel %vm246, %v191, 0
      %v668 = vsel %vm246, %v192, 0
      %v671 = vsel %vm246, %v193, 0
      %v674 = vsel %vm246, %v194, 0
      %v677 = vsel %vm246, %v195, 0
      %v680 = vsel %vm246, %v196, 0
      %v683 = vsel %vm246, %v197, 0
      %v686 = vsel %vm246, %v198, 0
      %v689 = vsel %vm246, %v199, 0
      %v692 = vsel %vm246, %v200, 0
      %v695 = vsel %vm246, %v201, 0
      %v698 = vsel %vm246, %v202, 0
      %v701 = vsel %vm246, %v203, 0
      %v704 = vsel %vm246, %v204, 0
      %v707 = vsel %vm246, %v205, 0
      %v710 = vsel %vm246, %v206, 0
      %v713 = vsel %vm355, %v207, 0
      %715 = vmatprep.subr.mxu0 0.0
      %716 = vmatpush1.msra.mxu0 0.0
      %717 = vmatprep.subr.mxu0 0.0
      %718 = vmatpush1.msra.mxu0 0.0
      %719 = vmatprep.subr.mxu0 0.0
      %720 = vmatpush1.msra.mxu0 0.0
      %721 = vmatprep.subr.mxu0 0.0
      %722 = vmatpush1.msra.mxu0 0.0
      %723 = vmatprep.subr.mxu0 0.0
      %724 = vmatpush1.msra.mxu0 0.0
      %725 = vmatprep.subr.mxu0 0.0
      %726 = vmatpush1.msra.mxu0 0.0
      %727 = vmatprep.subr.mxu0 0.0
      %728 = vmatpush1.msra.mxu0 0.0
      %729 = vmatprep.subr.mxu0 0.0
      %730 = vmatpush1.msra.mxu0 0.0
      %731 = vmatprep.subr.mxu0 0.0
      %732 = vmatpush1.msra.mxu0 0.0
      %733 = vmatprep.subr.mxu0 0.0
      %734 = vmatpush1.msra.mxu0 0.0
      %735 = vmatprep.subr.mxu0 0.0
      %736 = vmatpush1.msra.mxu0 0.0
      %737 = vmatprep.subr.mxu0 0.0
      %738 = vmatpush1.msra.mxu0 0.0
      %739 = vmatprep.subr.mxu0 0.0
      %740 = vmatpush1.msra.mxu0 0.0
      %741 = vmatprep.subr.mxu0 0.0
      %742 = vmatpush1.msra.mxu0 0.0
      %743 = vmatprep.subr.mxu0 0.0
      %744 = vmatpush1.msra.mxu0 0.0
      %745 = vmatprep.subr.mxu0 0.0
      %746 = vmatpush1.msra.mxu0 %v713
      %747 = vmatprep.subr.mxu0 0.0
      %748 = vmatpush2.msra.mxu0 0.0
      %749 = vmatprep.subr.mxu0 0.0
      %750 = vmatpush2.msra.mxu0 0.0
      %751 = vmatprep.subr.mxu0 0.0
      %752 = vmatpush2.msra.mxu0 0.0
      %753 = vmatprep.subr.mxu0 0.0
      %754 = vmatpush2.msra.mxu0 0.0
      %755 = vmatprep.subr.mxu0 0.0
      %756 = vmatpush2.msra.mxu0 0.0
      %757 = vmatprep.subr.mxu0 0.0
      %758 = vmatpush2.msra.mxu0 0.0
      %759 = vmatprep.subr.mxu0 0.0
      %760 = vmatpush2.msra.mxu0 0.0
      %761 = vmatprep.subr.mxu0 0.0
      %762 = vmatpush2.msra.mxu0 0.0
      %763 = vmatprep.subr.mxu0 0.0
      %764 = vmatpush2.msra.mxu0 0.0
      %765 = vmatprep.subr.mxu0 0.0
      %766 = vmatpush2.msra.mxu0 0.0
      %767 = vmatprep.subr.mxu0 0.0
      %768 = vmatpush2.msra.mxu0 0.0
      %769 = vmatprep.subr.mxu0 0.0
      %770 = vmatpush2.msra.mxu0 0.0
      %771 = vmatprep.subr.mxu0 0.0
      %772 = vmatpush2.msra.mxu0 0.0
      %773 = vmatprep.subr.mxu0 0.0
      %774 = vmatpush2.msra.mxu0 0.0
      %775 = vmatprep.subr.mxu0 0.0
      %776 = vmatpush2.msra.mxu0 0.0
      %777 = vmatprep.subr.mxu0 0.0
      %778 = vmatpush2.msra.mxu0 0.0
      %779 = vmatprep.mubr.f32.mxu0 0.0
      %780 = vmatmul.mubr.f32.gmra.mxu0 %v605
      %v781 = vpop.f32.mrf.mxu0
      %v782 = vadd.f32 %v426, %v781
      %v783 = vpop.f32.mrf.mxu0
      %784 = vmatprep.mubr.f32.mxu0 0.0
      %785 = vmatmul.mubr.f32.gmra.mxu0 %v608
      %v786 = vpop.f32.mrf.mxu0
      %v787 = vadd.f32 %v431, %v786
      %v788 = vpop.f32.mrf.mxu0
      %789 = vmatprep.mubr.f32.mxu0 0.0
      %790 = vmatmul.mubr.f32.gmra.mxu0 %v611
      %v791 = vpop.f32.mrf.mxu0
      %v792 = vadd.f32 %v436, %v791
      %v793 = vpop.f32.mrf.mxu0
      %794 = vmatprep.mubr.f32.mxu0 0.0
      %795 = vmatmul.mubr.f32.gmra.mxu0 %v614
      %v796 = vpop.f32.mrf.mxu0
      %v797 = vadd.f32 %v441, %v796
      %v798 = vpop.f32.mrf.mxu0
      %799 = vmatprep.mubr.f32.mxu0 0.0
      %800 = vmatmul.mubr.f32.gmra.mxu0 %v617
      %v801 = vpop.f32.mrf.mxu0
      %v802 = vadd.f32 %v446, %v801
      %v803 = vpop.f32.mrf.mxu0
      %804 = vmatprep.mubr.f32.mxu0 0.0
      %805 = vmatmul.mubr.f32.gmra.mxu0 %v620
      %v806 = vpop.f32.mrf.mxu0
      %v807 = vadd.f32 %v451, %v806
      %v808 = vpop.f32.mrf.mxu0
      %809 = vmatprep.mubr.f32.mxu0 0.0
      %810 = vmatmul.mubr.f32.gmra.mxu0 %v623
      %v811 = vpop.f32.mrf.mxu0
      %v812 = vadd.f32 %v456, %v811
      %v813 = vpop.f32.mrf.mxu0
      %814 = vmatprep.mubr.f32.mxu0 0.0
      %815 = vmatmul.mubr.f32.gmra.mxu0 %v626
      %v816 = vpop.f32.mrf.mxu0
      %v817 = vadd.f32 %v461, %v816
      %v818 = vpop.f32.mrf.mxu0
      %819 = vmatprep.mubr.f32.mxu0 0.0
      %820 = vmatmul.mubr.f32.gmra.mxu0 %v629
      %v821 = vpop.f32.mrf.mxu0
      %v822 = vadd.f32 %v466, %v821
      %v823 = vpop.f32.mrf.mxu0
      %824 = vmatprep.mubr.f32.mxu0 0.0
      %825 = vmatmul.mubr.f32.gmra.mxu0 %v632
      %v826 = vpop.f32.mrf.mxu0
      %v827 = vadd.f32 %v471, %v826
      %v828 = vpop.f32.mrf.mxu0
      %829 = vmatprep.mubr.f32.mxu0 0.0
      %830 = vmatmul.mubr.f32.gmra.mxu0 %v635
      %v831 = vpop.f32.mrf.mxu0
      %v832 = vadd.f32 %v476, %v831
      %v833 = vpop.f32.mrf.mxu0
      %834 = vmatprep.mubr.f32.mxu0 0.0
      %835 = vmatmul.mubr.f32.gmra.mxu0 %v638
      %v836 = vpop.f32.mrf.mxu0
      %v837 = vadd.f32 %v481, %v836
      %v838 = vpop.f32.mrf.mxu0
      %839 = vmatprep.mubr.f32.mxu0 0.0
      %840 = vmatmul.mubr.f32.gmra.mxu0 %v641
      %v841 = vpop.f32.mrf.mxu0
      %v842 = vadd.f32 %v486, %v841
      %v843 = vpop.f32.mrf.mxu0
      %844 = vmatprep.mubr.f32.mxu0 0.0
      %845 = vmatmul.mubr.f32.gmra.mxu0 %v644
      %v846 = vpop.f32.mrf.mxu0
      %v847 = vadd.f32 %v491, %v846
      %v848 = vpop.f32.mrf.mxu0
      %849 = vmatprep.mubr.f32.mxu0 0.0
      %850 = vmatmul.mubr.f32.gmra.mxu0 %v647
      %v851 = vpop.f32.mrf.mxu0
      %v852 = vadd.f32 %v496, %v851
      %v853 = vpop.f32.mrf.mxu0
      %854 = vmatprep.mubr.f32.mxu0 0.0
      %855 = vmatmul.mubr.f32.gmra.mxu0 %v650
      %v856 = vpop.f32.mrf.mxu0
      %v857 = vadd.f32 %v501, %v856
      %v858 = vpop.f32.mrf.mxu0
      %859 = vmatprep.mubr.f32.mxu0 0.0
      %860 = vmatmul.mubr.f32.gmra.mxu0 %v653
      %v861 = vpop.f32.mrf.mxu0
      %v862 = vadd.f32 %v506, %v861
      %v863 = vpop.f32.mrf.mxu0
      %864 = vmatprep.mubr.f32.mxu0 0.0
      %865 = vmatmul.mubr.f32.gmra.mxu0 %v656
      %v866 = vpop.f32.mrf.mxu0
      %v867 = vadd.f32 %v511, %v866
      %v868 = vpop.f32.mrf.mxu0
      %869 = vmatprep.mubr.f32.mxu0 0.0
      %870 = vmatmul.mubr.f32.gmra.mxu0 %v659
      %v871 = vpop.f32.mrf.mxu0
      %v872 = vadd.f32 %v516, %v871
      %v873 = vpop.f32.mrf.mxu0
      %874 = vmatprep.mubr.f32.mxu0 0.0
      %875 = vmatmul.mubr.f32.gmra.mxu0 %v662
      %v876 = vpop.f32.mrf.mxu0
      %v877 = vadd.f32 %v521, %v876
      %v878 = vpop.f32.mrf.mxu0
      %879 = vmatprep.mubr.f32.mxu0 0.0
      %880 = vmatmul.mubr.f32.gmra.mxu0 %v665
      %v881 = vpop.f32.mrf.mxu0
      %v882 = vadd.f32 %v526, %v881
      %v883 = vpop.f32.mrf.mxu0
      %884 = vmatprep.mubr.f32.mxu0 0.0
      %885 = vmatmul.mubr.f32.gmra.mxu0 %v668
      %v886 = vpop.f32.mrf.mxu0
      %v887 = vadd.f32 %v531, %v886
      %v888 = vpop.f32.mrf.mxu0
      %889 = vmatprep.mubr.f32.mxu0 0.0
      %890 = vmatmul.mubr.f32.gmra.mxu0 %v671
      %v891 = vpop.f32.mrf.mxu0
      %v892 = vadd.f32 %v536, %v891
      %v893 = vpop.f32.mrf.mxu0
      %894 = vmatprep.mubr.f32.mxu0 0.0
      %895 = vmatmul.mubr.f32.gmra.mxu0 %v674
      %v896 = vpop.f32.mrf.mxu0
      %v897 = vadd.f32 %v541, %v896
      %v898 = vpop.f32.mrf.mxu0
      %899 = vmatprep.mubr.f32.mxu0 0.0
      %900 = vmatmul.mubr.f32.gmra.mxu0 %v677
      %v901 = vpop.f32.mrf.mxu0
      %v902 = vadd.f32 %v546, %v901
      %v903 = vpop.f32.mrf.mxu0
      %904 = vmatprep.mubr.f32.mxu0 0.0
      %905 = vmatmul.mubr.f32.gmra.mxu0 %v680
      %v906 = vpop.f32.mrf.mxu0
      %v907 = vadd.f32 %v551, %v906
      %v908 = vpop.f32.mrf.mxu0
      %909 = vmatprep.mubr.f32.mxu0 0.0
      %910 = vmatmul.mubr.f32.gmra.mxu0 %v683
      %v911 = vpop.f32.mrf.mxu0
      %v912 = vadd.f32 %v556, %v911
      %v913 = vpop.f32.mrf.mxu0
      %914 = vmatprep.mubr.f32.mxu0 0.0
      %915 = vmatmul.mubr.f32.gmra.mxu0 %v686
      %v916 = vpop.f32.mrf.mxu0
      %v917 = vadd.f32 %v561, %v916
      %v918 = vpop.f32.mrf.mxu0
      %919 = vmatprep.mubr.f32.mxu0 0.0
      %920 = vmatmul.mubr.f32.gmra.mxu0 %v689
      %v921 = vpop.f32.mrf.mxu0
      %v922 = vadd.f32 %v566, %v921
      %v923 = vpop.f32.mrf.mxu0
      %924 = vmatprep.mubr.f32.mxu0 0.0
      %925 = vmatmul.mubr.f32.gmra.mxu0 %v692
      %v926 = vpop.f32.mrf.mxu0
      %v927 = vadd.f32 %v571, %v926
      %v928 = vpop.f32.mrf.mxu0
      %929 = vmatprep.mubr.f32.mxu0 0.0
      %930 = vmatmul.mubr.f32.gmra.mxu0 %v695
      %v931 = vpop.f32.mrf.mxu0
      %v932 = vadd.f32 %v576, %v931
      %v933 = vpop.f32.mrf.mxu0
      %934 = vmatprep.mubr.f32.mxu0 0.0
      %935 = vmatmul.mubr.f32.gmra.mxu0 %v698
      %v936 = vpop.f32.mrf.mxu0
      %v937 = vadd.f32 %v581, %v936
      %v938 = vpop.f32.mrf.mxu0
      %939 = vmatprep.mubr.f32.mxu0 0.0
      %940 = vmatmul.mubr.f32.gmra.mxu0 %v701
      %v941 = vpop.f32.mrf.mxu0
      %v942 = vadd.f32 %v586, %v941
      %v943 = vpop.f32.mrf.mxu0
      %944 = vmatprep.mubr.f32.mxu0 0.0
      %945 = vmatmul.mubr.f32.gmra.mxu0 %v704
      %v946 = vpop.f32.mrf.mxu0
      %v947 = vadd.f32 %v591, %v946
      %v948 = vpop.f32.mrf.mxu0
      %949 = vmatprep.mubr.f32.mxu0 0.0
      %950 = vmatmul.mubr.f32.gmra.mxu0 %v707
      %v951 = vpop.f32.mrf.mxu0
      %v952 = vadd.f32 %v596, %v951
      %v953 = vpop.f32.mrf.mxu0
      %954 = vmatprep.mubr.f32.mxu0 0.0
      %955 = vmatmul.mubr.f32.gmra.mxu0 %v710
      %v956 = vpop.f32.mrf.mxu0
      %v957 = vadd.f32 %v601, %v956
      %v958 = vpop.f32.mrf.mxu0
      %959 = vdwg.mxu0
      %v960 = vld [vmem:[%s165 + $0x2] sm:$0xff]
      %v961 = vld [vmem:[%s165 + $0xa] sm:$0xff]
      %v962 = vld [vmem:[%s165 + $0x12] sm:$0xff]
      %v963 = vld [vmem:[%s165 + $0x1a] sm:$0xff]
      %v964 = vld [vmem:[%s165 + $0x22] sm:$0xff]
      %v965 = vld [vmem:[%s165 + $0x2a] sm:$0xff]
      %v966 = vld [vmem:[%s165 + $0x32] sm:$0xff]
      %v967 = vld [vmem:[%s165 + $0x3a] sm:$0xff]
      %v968 = vld [vmem:[%s165 + $0x42] sm:$0xff]
      %v969 = vld [vmem:[%s165 + $0x4a] sm:$0xff]
      %v970 = vld [vmem:[%s165 + $0x52] sm:$0xff]
      %v971 = vld [vmem:[%s165 + $0x5a] sm:$0xff]
      %v972 = vld [vmem:[%s165 + $0x62] sm:$0xff]
      %v973 = vld [vmem:[%s165 + $0x6a] sm:$0xff]
      %v974 = vld [vmem:[%s165 + $0x72] sm:$0xff]
      %v975 = vld [vmem:[%s165 + $0x7a] sm:$0xff]
      %v976 = vld [vmem:[%s165 + $0x82] sm:$0xff]
      %v977 = vld [vmem:[%s165 + $0x8a] sm:$0xff]
      %v978 = vld [vmem:[%s165 + $0x92] sm:$0xff]
      %v979 = vld [vmem:[%s165 + $0x9a] sm:$0xff]
      %v980 = vld [vmem:[%s165 + $0xa2] sm:$0xff]
      %v981 = vld [vmem:[%s165 + $0xaa] sm:$0xff]
      %v982 = vld [vmem:[%s165 + $0xb2] sm:$0xff]
      %v983 = vld [vmem:[%s165 + $0xba] sm:$0xff]
      %v984 = vld [vmem:[%s165 + $0xc2] sm:$0xff]
      %v985 = vld [vmem:[%s165 + $0xca] sm:$0xff]
      %v986 = vld [vmem:[%s165 + $0xd2] sm:$0xff]
      %v987 = vld [vmem:[%s165 + $0xda] sm:$0xff]
      %v988 = vld [vmem:[%s165 + $0xe2] sm:$0xff]
      %v989 = vld [vmem:[%s165 + $0xea] sm:$0xff]
      %v990 = vld [vmem:[%s165 + $0xf2] sm:$0xff]
      %v991 = vld [vmem:[%s165 + $0xfa] sm:$0xff]
      %v992 = vld [vmem:[%s165 + $0x102] sm:$0xff]
      %v993 = vld [vmem:[%s165 + $0x10a] sm:$0xff]
      %v994 = vld [vmem:[%s165 + $0x112] sm:$0xff]
      %v995 = vld [vmem:[%s165 + $0x11a] sm:$0xff]
      %s996 = scalar_lea.vmem %s1, 8
      %v997 = vld [vmem:[%s996] sm:$0xf]
      %v999 = vsel %vm246, %v960, 0
      %v1002 = vsel %vm246, %v961, 0
      %v1005 = vsel %vm246, %v962, 0
      %v1008 = vsel %vm246, %v963, 0
      %v1011 = vsel %vm246, %v964, 0
      %v1014 = vsel %vm246, %v965, 0
      %v1017 = vsel %vm246, %v966, 0
      %v1020 = vsel %vm246, %v967, 0
      %v1023 = vsel %vm246, %v968, 0
      %v1026 = vsel %vm246, %v969, 0
      %v1029 = vsel %vm246, %v970, 0
      %v1032 = vsel %vm246, %v971, 0
      %v1035 = vsel %vm246, %v972, 0
      %v1038 = vsel %vm246, %v973, 0
      %v1041 = vsel %vm246, %v974, 0
      %v1044 = vsel %vm246, %v975, 0
      %v1047 = vsel %vm246, %v976, 0
      %v1050 = vsel %vm246, %v977, 0
      %v1053 = vsel %vm246, %v978, 0
      %v1056 = vsel %vm246, %v979, 0
      %v1059 = vsel %vm246, %v980, 0
      %v1062 = vsel %vm246, %v981, 0
      %v1065 = vsel %vm246, %v982, 0
      %v1068 = vsel %vm246, %v983, 0
      %v1071 = vsel %vm246, %v984, 0
      %v1074 = vsel %vm246, %v985, 0
      %v1077 = vsel %vm246, %v986, 0
      %v1080 = vsel %vm246, %v987, 0
      %v1083 = vsel %vm246, %v988, 0
      %v1086 = vsel %vm246, %v989, 0
      %v1089 = vsel %vm246, %v990, 0
      %v1092 = vsel %vm246, %v991, 0
      %v1095 = vsel %vm246, %v992, 0
      %v1098 = vsel %vm246, %v993, 0
      %v1101 = vsel %vm246, %v994, 0
      %v1104 = vsel %vm246, %v995, 0
      %v1107 = vsel %vm355, %v997, 0
      %1109 = vmatprep.subr.mxu0 0.0
      %1110 = vmatpush1.msra.mxu0 0.0
      %1111 = vmatprep.subr.mxu0 0.0
      %1112 = vmatpush1.msra.mxu0 0.0
      %1113 = vmatprep.subr.mxu0 0.0
      %1114 = vmatpush1.msra.mxu0 0.0
      %1115 = vmatprep.subr.mxu0 0.0
      %1116 = vmatpush1.msra.mxu0 0.0
      %1117 = vmatprep.subr.mxu0 0.0
      %1118 = vmatpush1.msra.mxu0 0.0
      %1119 = vmatprep.subr.mxu0 0.0
      %1120 = vmatpush1.msra.mxu0 0.0
      %1121 = vmatprep.subr.mxu0 0.0
      %1122 = vmatpush1.msra.mxu0 0.0
      %1123 = vmatprep.subr.mxu0 0.0
      %1124 = vmatpush1.msra.mxu0 0.0
      %1125 = vmatprep.subr.mxu0 0.0
      %1126 = vmatpush1.msra.mxu0 0.0
      %1127 = vmatprep.subr.mxu0 0.0
      %1128 = vmatpush1.msra.mxu0 0.0
      %1129 = vmatprep.subr.mxu0 0.0
      %1130 = vmatpush1.msra.mxu0 0.0
      %1131 = vmatprep.subr.mxu0 0.0
      %1132 = vmatpush1.msra.mxu0 0.0
      %1133 = vmatprep.subr.mxu0 0.0
      %1134 = vmatpush1.msra.mxu0 0.0
      %1135 = vmatprep.subr.mxu0 0.0
      %1136 = vmatpush1.msra.mxu0 0.0
      %1137 = vmatprep.subr.mxu0 0.0
      %1138 = vmatpush1.msra.mxu0 0.0
      %1139 = vmatprep.subr.mxu0 0.0
      %1140 = vmatpush1.msra.mxu0 %v1107
      %1141 = vmatprep.subr.mxu0 0.0
      %1142 = vmatpush2.msra.mxu0 0.0
      %1143 = vmatprep.subr.mxu0 0.0
      %1144 = vmatpush2.msra.mxu0 0.0
      %1145 = vmatprep.subr.mxu0 0.0
      %1146 = vmatpush2.msra.mxu0 0.0
      %1147 = vmatprep.subr.mxu0 0.0
      %1148 = vmatpush2.msra.mxu0 0.0
      %1149 = vmatprep.subr.mxu0 0.0
      %1150 = vmatpush2.msra.mxu0 0.0
      %1151 = vmatprep.subr.mxu0 0.0
      %1152 = vmatpush2.msra.mxu0 0.0
      %1153 = vmatprep.subr.mxu0 0.0
      %1154 = vmatpush2.msra.mxu0 0.0
      %1155 = vmatprep.subr.mxu0 0.0
      %1156 = vmatpush2.msra.mxu0 0.0
      %1157 = vmatprep.subr.mxu0 0.0
      %1158 = vmatpush2.msra.mxu0 0.0
      %1159 = vmatprep.subr.mxu0 0.0
      %1160 = vmatpush2.msra.mxu0 0.0
      %1161 = vmatprep.subr.mxu0 0.0
      %1162 = vmatpush2.msra.mxu0 0.0
      %1163 = vmatprep.subr.mxu0 0.0
      %1164 = vmatpush2.msra.mxu0 0.0
      %1165 = vmatprep.subr.mxu0 0.0
      %1166 = vmatpush2.msra.mxu0 0.0
      %1167 = vmatprep.subr.mxu0 0.0
      %1168 = vmatpush2.msra.mxu0 0.0
      %1169 = vmatprep.subr.mxu0 0.0
      %1170 = vmatpush2.msra.mxu0 0.0
      %1171 = vmatprep.subr.mxu0 0.0
      %1172 = vmatpush2.msra.mxu0 0.0
      %1173 = vmatprep.mubr.f32.mxu0 0.0
      %1174 = vmatmul.mubr.f32.gmra.mxu0 %v999
      %v1175 = vpop.f32.mrf.mxu0
      %v1176 = vadd.f32 0.0, %v1175
      %v1177 = vpop.f32.mrf.mxu0
      %1178 = vmatprep.mubr.f32.mxu0 0.0
      %1179 = vmatmul.mubr.f32.gmra.mxu0 %v1002
      %v1180 = vpop.f32.mrf.mxu0
      %v1181 = vadd.f32 0.0, %v1180
      %v1182 = vpop.f32.mrf.mxu0
      %1183 = vmatprep.mubr.f32.mxu0 0.0
      %1184 = vmatmul.mubr.f32.gmra.mxu0 %v1005
      %v1185 = vpop.f32.mrf.mxu0
      %v1186 = vadd.f32 0.0, %v1185
      %v1187 = vpop.f32.mrf.mxu0
      %1188 = vmatprep.mubr.f32.mxu0 0.0
      %1189 = vmatmul.mubr.f32.gmra.mxu0 %v1008
      %v1190 = vpop.f32.mrf.mxu0
      %v1191 = vadd.f32 0.0, %v1190
      %v1192 = vpop.f32.mrf.mxu0
      %1193 = vmatprep.mubr.f32.mxu0 0.0
      %1194 = vmatmul.mubr.f32.gmra.mxu0 %v1011
      %v1195 = vpop.f32.mrf.mxu0
      %v1196 = vadd.f32 0.0, %v1195
      %v1197 = vpop.f32.mrf.mxu0
      %1198 = vmatprep.mubr.f32.mxu0 0.0
      %1199 = vmatmul.mubr.f32.gmra.mxu0 %v1014
      %v1200 = vpop.f32.mrf.mxu0
      %v1201 = vadd.f32 0.0, %v1200
      %v1202 = vpop.f32.mrf.mxu0
      %1203 = vmatprep.mubr.f32.mxu0 0.0
      %1204 = vmatmul.mubr.f32.gmra.mxu0 %v1017
      %v1205 = vpop.f32.mrf.mxu0
      %v1206 = vadd.f32 0.0, %v1205
      %v1207 = vpop.f32.mrf.mxu0
      %1208 = vmatprep.mubr.f32.mxu0 0.0
      %1209 = vmatmul.mubr.f32.gmra.mxu0 %v1020
      %v1210 = vpop.f32.mrf.mxu0
      %v1211 = vadd.f32 0.0, %v1210
      %v1212 = vpop.f32.mrf.mxu0
      %1213 = vmatprep.mubr.f32.mxu0 0.0
      %1214 = vmatmul.mubr.f32.gmra.mxu0 %v1023
      %v1215 = vpop.f32.mrf.mxu0
      %v1216 = vadd.f32 0.0, %v1215
      %v1217 = vpop.f32.mrf.mxu0
      %1218 = vmatprep.mubr.f32.mxu0 0.0
      %1219 = vmatmul.mubr.f32.gmra.mxu0 %v1026
      %v1220 = vpop.f32.mrf.mxu0
      %v1221 = vadd.f32 0.0, %v1220
      %v1222 = vpop.f32.mrf.mxu0
      %1223 = vmatprep.mubr.f32.mxu0 0.0
      %1224 = vmatmul.mubr.f32.gmra.mxu0 %v1029
      %v1225 = vpop.f32.mrf.mxu0
      %v1226 = vadd.f32 0.0, %v1225
      %v1227 = vpop.f32.mrf.mxu0
      %1228 = vmatprep.mubr.f32.mxu0 0.0
      %1229 = vmatmul.mubr.f32.gmra.mxu0 %v1032
      %v1230 = vpop.f32.mrf.mxu0
      %v1231 = vadd.f32 0.0, %v1230
      %v1232 = vpop.f32.mrf.mxu0
      %1233 = vmatprep.mubr.f32.mxu0 0.0
      %1234 = vmatmul.mubr.f32.gmra.mxu0 %v1035
      %v1235 = vpop.f32.mrf.mxu0
      %v1236 = vadd.f32 0.0, %v1235
      %v1237 = vpop.f32.mrf.mxu0
      %1238 = vmatprep.mubr.f32.mxu0 0.0
      %1239 = vmatmul.mubr.f32.gmra.mxu0 %v1038
      %v1240 = vpop.f32.mrf.mxu0
      %v1241 = vadd.f32 0.0, %v1240
      %v1242 = vpop.f32.mrf.mxu0
      %1243 = vmatprep.mubr.f32.mxu0 0.0
      %1244 = vmatmul.mubr.f32.gmra.mxu0 %v1041
      %v1245 = vpop.f32.mrf.mxu0
      %v1246 = vadd.f32 0.0, %v1245
      %v1247 = vpop.f32.mrf.mxu0
      %1248 = vmatprep.mubr.f32.mxu0 0.0
      %1249 = vmatmul.mubr.f32.gmra.mxu0 %v1044
      %v1250 = vpop.f32.mrf.mxu0
      %v1251 = vadd.f32 0.0, %v1250
      %v1252 = vpop.f32.mrf.mxu0
      %1253 = vmatprep.mubr.f32.mxu0 0.0
      %1254 = vmatmul.mubr.f32.gmra.mxu0 %v1047
      %v1255 = vpop.f32.mrf.mxu0
      %v1256 = vadd.f32 0.0, %v1255
      %v1257 = vpop.f32.mrf.mxu0
      %1258 = vmatprep.mubr.f32.mxu0 0.0
      %1259 = vmatmul.mubr.f32.gmra.mxu0 %v1050
      %v1260 = vpop.f32.mrf.mxu0
      %v1261 = vadd.f32 0.0, %v1260
      %v1262 = vpop.f32.mrf.mxu0
      %1263 = vmatprep.mubr.f32.mxu0 0.0
      %1264 = vmatmul.mubr.f32.gmra.mxu0 %v1053
      %v1265 = vpop.f32.mrf.mxu0
      %v1266 = vadd.f32 0.0, %v1265
      %v1267 = vpop.f32.mrf.mxu0
      %1268 = vmatprep.mubr.f32.mxu0 0.0
      %1269 = vmatmul.mubr.f32.gmra.mxu0 %v1056
      %v1270 = vpop.f32.mrf.mxu0
      %v1271 = vadd.f32 0.0, %v1270
      %v1272 = vpop.f32.mrf.mxu0
      %1273 = vmatprep.mubr.f32.mxu0 0.0
      %1274 = vmatmul.mubr.f32.gmra.mxu0 %v1059
      %v1275 = vpop.f32.mrf.mxu0
      %v1276 = vadd.f32 0.0, %v1275
      %v1277 = vpop.f32.mrf.mxu0
      %1278 = vmatprep.mubr.f32.mxu0 0.0
      %1279 = vmatmul.mubr.f32.gmra.mxu0 %v1062
      %v1280 = vpop.f32.mrf.mxu0
      %v1281 = vadd.f32 0.0, %v1280
      %v1282 = vpop.f32.mrf.mxu0
      %1283 = vmatprep.mubr.f32.mxu0 0.0
      %1284 = vmatmul.mubr.f32.gmra.mxu0 %v1065
      %v1285 = vpop.f32.mrf.mxu0
      %v1286 = vadd.f32 0.0, %v1285
      %v1287 = vpop.f32.mrf.mxu0
      %1288 = vmatprep.mubr.f32.mxu0 0.0
      %1289 = vmatmul.mubr.f32.gmra.mxu0 %v1068
      %v1290 = vpop.f32.mrf.mxu0
      %v1291 = vadd.f32 0.0, %v1290
      %v1292 = vpop.f32.mrf.mxu0
      %1293 = vmatprep.mubr.f32.mxu0 0.0
      %1294 = vmatmul.mubr.f32.gmra.mxu0 %v1071
      %v1295 = vpop.f32.mrf.mxu0
      %v1296 = vadd.f32 0.0, %v1295
      %v1297 = vpop.f32.mrf.mxu0
      %1298 = vmatprep.mubr.f32.mxu0 0.0
      %1299 = vmatmul.mubr.f32.gmra.mxu0 %v1074
      %v1300 = vpop.f32.mrf.mxu0
      %v1301 = vadd.f32 0.0, %v1300
      %v1302 = vpop.f32.mrf.mxu0
      %1303 = vmatprep.mubr.f32.mxu0 0.0
      %1304 = vmatmul.mubr.f32.gmra.mxu0 %v1077
      %v1305 = vpop.f32.mrf.mxu0
      %v1306 = vadd.f32 0.0, %v1305
      %v1307 = vpop.f32.mrf.mxu0
      %1308 = vmatprep.mubr.f32.mxu0 0.0
      %1309 = vmatmul.mubr.f32.gmra.mxu0 %v1080
      %v1310 = vpop.f32.mrf.mxu0
      %v1311 = vadd.f32 0.0, %v1310
      %v1312 = vpop.f32.mrf.mxu0
      %1313 = vmatprep.mubr.f32.mxu0 0.0
      %1314 = vmatmul.mubr.f32.gmra.mxu0 %v1083
      %v1315 = vpop.f32.mrf.mxu0
      %v1316 = vadd.f32 0.0, %v1315
      %v1317 = vpop.f32.mrf.mxu0
      %1318 = vmatprep.mubr.f32.mxu0 0.0
      %1319 = vmatmul.mubr.f32.gmra.mxu0 %v1086
      %v1320 = vpop.f32.mrf.mxu0
      %v1321 = vadd.f32 0.0, %v1320
      %v1322 = vpop.f32.mrf.mxu0
      %1323 = vmatprep.mubr.f32.mxu0 0.0
      %1324 = vmatmul.mubr.f32.gmra.mxu0 %v1089
      %v1325 = vpop.f32.mrf.mxu0
      %v1326 = vadd.f32 0.0, %v1325
      %v1327 = vpop.f32.mrf.mxu0
      %1328 = vmatprep.mubr.f32.mxu0 0.0
      %1329 = vmatmul.mubr.f32.gmra.mxu0 %v1092
      %v1330 = vpop.f32.mrf.mxu0
      %v1331 = vadd.f32 0.0, %v1330
      %v1332 = vpop.f32.mrf.mxu0
      %1333 = vmatprep.mubr.f32.mxu0 0.0
      %1334 = vmatmul.mubr.f32.gmra.mxu0 %v1095
      %v1335 = vpop.f32.mrf.mxu0
      %v1336 = vadd.f32 0.0, %v1335
      %v1337 = vpop.f32.mrf.mxu0
      %1338 = vmatprep.mubr.f32.mxu0 0.0
      %1339 = vmatmul.mubr.f32.gmra.mxu0 %v1098
      %v1340 = vpop.f32.mrf.mxu0
      %v1341 = vadd.f32 0.0, %v1340
      %v1342 = vpop.f32.mrf.mxu0
      %1343 = vmatprep.mubr.f32.mxu0 0.0
      %1344 = vmatmul.mubr.f32.gmra.mxu0 %v1101
      %v1345 = vpop.f32.mrf.mxu0
      %v1346 = vadd.f32 0.0, %v1345
      %v1347 = vpop.f32.mrf.mxu0
      %1348 = vmatprep.mubr.f32.mxu0 0.0
      %1349 = vmatmul.mubr.f32.gmra.mxu0 %v1104
      %v1350 = vpop.f32.mrf.mxu0
      %v1351 = vadd.f32 0.0, %v1350
      %v1352 = vpop.f32.mrf.mxu0
      %1353 = vdwg.mxu0
      %v1354 = vadd.f32 %v782, %v1176
      %v1355 = vadd.f32 %v787, %v1181
      %v1356 = vadd.f32 %v792, %v1186
      %v1357 = vadd.f32 %v797, %v1191
      %v1358 = vadd.f32 %v802, %v1196
      %v1359 = vadd.f32 %v807, %v1201
      %v1360 = vadd.f32 %v812, %v1206
      %v1361 = vadd.f32 %v817, %v1211
      %v1362 = vadd.f32 %v822, %v1216
      %v1363 = vadd.f32 %v827, %v1221
      %v1364 = vadd.f32 %v832, %v1226
      %v1365 = vadd.f32 %v837, %v1231
      %v1366 = vadd.f32 %v842, %v1236
      %v1367 = vadd.f32 %v847, %v1241
      %v1368 = vadd.f32 %v852, %v1246
      %v1369 = vadd.f32 %v857, %v1251
      %v1370 = vadd.f32 %v862, %v1256
      %v1371 = vadd.f32 %v867, %v1261
      %v1372 = vadd.f32 %v872, %v1266
      %v1373 = vadd.f32 %v877, %v1271
      %v1374 = vadd.f32 %v882, %v1276
      %v1375 = vadd.f32 %v887, %v1281
      %v1376 = vadd.f32 %v892, %v1286
      %v1377 = vadd.f32 %v897, %v1291
      %v1378 = vadd.f32 %v902, %v1296
      %v1379 = vadd.f32 %v907, %v1301
      %v1380 = vadd.f32 %v912, %v1306
      %v1381 = vadd.f32 %v917, %v1311
      %v1382 = vadd.f32 %v922, %v1316
      %v1383 = vadd.f32 %v927, %v1321
      %v1384 = vadd.f32 %v932, %v1326
      %v1385 = vadd.f32 %v937, %v1331
      %v1386 = vadd.f32 %v942, %v1336
      %v1387 = vadd.f32 %v947, %v1341
      %v1388 = vadd.f32 %v952, %v1346
      %v1389 = vadd.f32 %v957, %v1351
      %v1390 = vld [vmem:[%s165 + $0x12] sm:$0xff]
      %v1391 = vld [vmem:[%s165 + $0x1a] sm:$0xff]
      %v1392 = vld [vmem:[%s165 + $0x22] sm:$0xff]
      %v1393 = vld [vmem:[%s165 + $0x2a] sm:$0xff]
      %v1394 = vld [vmem:[%s165 + $0x32] sm:$0xff]
      %v1395 = vld [vmem:[%s165 + $0x3a] sm:$0xff]
      %v1396 = vld [vmem:[%s165 + $0x42] sm:$0xff]
      %v1397 = vld [vmem:[%s165 + $0x4a] sm:$0xff]
      %v1398 = vld [vmem:[%s165 + $0x52] sm:$0xff]
      %v1399 = vld [vmem:[%s165 + $0x5a] sm:$0xff]
      %v1400 = vld [vmem:[%s165 + $0x62] sm:$0xff]
      %v1401 = vld [vmem:[%s165 + $0x6a] sm:$0xff]
      %v1402 = vld [vmem:[%s165 + $0x72] sm:$0xff]
      %v1403 = vld [vmem:[%s165 + $0x7a] sm:$0xff]
      %v1404 = vld [vmem:[%s165 + $0x82] sm:$0xff]
      %v1405 = vld [vmem:[%s165 + $0x8a] sm:$0xff]
      %v1406 = vld [vmem:[%s165 + $0x92] sm:$0xff]
      %v1407 = vld [vmem:[%s165 + $0x9a] sm:$0xff]
      %v1408 = vld [vmem:[%s165 + $0xa2] sm:$0xff]
      %v1409 = vld [vmem:[%s165 + $0xaa] sm:$0xff]
      %v1410 = vld [vmem:[%s165 + $0xb2] sm:$0xff]
      %v1411 = vld [vmem:[%s165 + $0xba] sm:$0xff]
      %v1412 = vld [vmem:[%s165 + $0xc2] sm:$0xff]
      %v1413 = vld [vmem:[%s165 + $0xca] sm:$0xff]
      %v1414 = vld [vmem:[%s165 + $0xd2] sm:$0xff]
      %v1415 = vld [vmem:[%s165 + $0xda] sm:$0xff]
      %v1416 = vld [vmem:[%s165 + $0xe2] sm:$0xff]
      %v1417 = vld [vmem:[%s165 + $0xea] sm:$0xff]
      %v1418 = vld [vmem:[%s165 + $0xf2] sm:$0xff]
      %v1419 = vld [vmem:[%s165 + $0xfa] sm:$0xff]
      %v1420 = vld [vmem:[%s165 + $0x102] sm:$0xff]
      %v1421 = vld [vmem:[%s165 + $0x10a] sm:$0xff]
      %v1422 = vld [vmem:[%s165 + $0x112] sm:$0xff]
      %v1423 = vld [vmem:[%s165 + $0x11a] sm:$0xff]
      %v1424 = vld [vmem:[%s165 + $0x122] sm:$0xff]
      %v1425 = vld [vmem:[%s165 + $0x12a] sm:$0xff]
      %s1426 = scalar_lea.vmem %s1, 12
      %v1427 = vld [vmem:[%s1426] sm:$0xf]
      %v1429 = vsel %vm246, %v1390, 0
      %v1432 = vsel %vm246, %v1391, 0
      %v1435 = vsel %vm246, %v1392, 0
      %v1438 = vsel %vm246, %v1393, 0
      %v1441 = vsel %vm246, %v1394, 0
      %v1444 = vsel %vm246, %v1395, 0
      %v1447 = vsel %vm246, %v1396, 0
      %v1450 = vsel %vm246, %v1397, 0
      %v1453 = vsel %vm246, %v1398, 0
      %v1456 = vsel %vm246, %v1399, 0
      %v1459 = vsel %vm246, %v1400, 0
      %v1462 = vsel %vm246, %v1401, 0
      %v1465 = vsel %vm246, %v1402, 0
      %v1468 = vsel %vm246, %v1403, 0
      %v1471 = vsel %vm246, %v1404, 0
      %v1474 = vsel %vm246, %v1405, 0
      %v1477 = vsel %vm246, %v1406, 0
      %v1480 = vsel %vm246, %v1407, 0
      %v1483 = vsel %vm246, %v1408, 0
      %v1486 = vsel %vm246, %v1409, 0
      %v1489 = vsel %vm246, %v1410, 0
      %v1492 = vsel %vm246, %v1411, 0
      %v1495 = vsel %vm246, %v1412, 0
      %v1498 = vsel %vm246, %v1413, 0
      %v1501 = vsel %vm246, %v1414, 0
      %v1504 = vsel %vm246, %v1415, 0
      %v1507 = vsel %vm246, %v1416, 0
      %v1510 = vsel %vm246, %v1417, 0
      %v1513 = vsel %vm246, %v1418, 0
      %v1516 = vsel %vm246, %v1419, 0
      %v1519 = vsel %vm246, %v1420, 0
      %v1522 = vsel %vm246, %v1421, 0
      %v1525 = vsel %vm246, %v1422, 0
      %v1528 = vsel %vm246, %v1423, 0
      %v1531 = vsel %vm246, %v1424, 0
      %v1534 = vsel %vm246, %v1425, 0
      %v1537 = vsel %vm355, %v1427, 0
      %1539 = vmatprep.subr.mxu0 0.0
      %1540 = vmatpush1.msra.mxu0 0.0
      %1541 = vmatprep.subr.mxu0 0.0
      %1542 = vmatpush1.msra.mxu0 0.0
      %1543 = vmatprep.subr.mxu0 0.0
      %1544 = vmatpush1.msra.mxu0 0.0
      %1545 = vmatprep.subr.mxu0 0.0
      %1546 = vmatpush1.msra.mxu0 0.0
      %1547 = vmatprep.subr.mxu0 0.0
      %1548 = vmatpush1.msra.mxu0 0.0
      %1549 = vmatprep.subr.mxu0 0.0
      %1550 = vmatpush1.msra.mxu0 0.0
      %1551 = vmatprep.subr.mxu0 0.0
      %1552 = vmatpush1.msra.mxu0 0.0
      %1553 = vmatprep.subr.mxu0 0.0
      %1554 = vmatpush1.msra.mxu0 0.0
      %1555 = vmatprep.subr.mxu0 0.0
      %1556 = vmatpush1.msra.mxu0 0.0
      %1557 = vmatprep.subr.mxu0 0.0
      %1558 = vmatpush1.msra.mxu0 0.0
      %1559 = vmatprep.subr.mxu0 0.0
      %1560 = vmatpush1.msra.mxu0 0.0
      %1561 = vmatprep.subr.mxu0 0.0
      %1562 = vmatpush1.msra.mxu0 0.0
      %1563 = vmatprep.subr.mxu0 0.0
      %1564 = vmatpush1.msra.mxu0 0.0
      %1565 = vmatprep.subr.mxu0 0.0
      %1566 = vmatpush1.msra.mxu0 0.0
      %1567 = vmatprep.subr.mxu0 0.0
      %1568 = vmatpush1.msra.mxu0 0.0
      %1569 = vmatprep.subr.mxu0 0.0
      %1570 = vmatpush1.msra.mxu0 %v1537
      %1571 = vmatprep.subr.mxu0 0.0
      %1572 = vmatpush2.msra.mxu0 0.0
      %1573 = vmatprep.subr.mxu0 0.0
      %1574 = vmatpush2.msra.mxu0 0.0
      %1575 = vmatprep.subr.mxu0 0.0
      %1576 = vmatpush2.msra.mxu0 0.0
      %1577 = vmatprep.subr.mxu0 0.0
      %1578 = vmatpush2.msra.mxu0 0.0
      %1579 = vmatprep.subr.mxu0 0.0
      %1580 = vmatpush2.msra.mxu0 0.0
      %1581 = vmatprep.subr.mxu0 0.0
      %1582 = vmatpush2.msra.mxu0 0.0
      %1583 = vmatprep.subr.mxu0 0.0
      %1584 = vmatpush2.msra.mxu0 0.0
      %1585 = vmatprep.subr.mxu0 0.0
      %1586 = vmatpush2.msra.mxu0 0.0
      %1587 = vmatprep.subr.mxu0 0.0
      %1588 = vmatpush2.msra.mxu0 0.0
      %1589 = vmatprep.subr.mxu0 0.0
      %1590 = vmatpush2.msra.mxu0 0.0
      %1591 = vmatprep.subr.mxu0 0.0
      %1592 = vmatpush2.msra.mxu0 0.0
      %1593 = vmatprep.subr.mxu0 0.0
      %1594 = vmatpush2.msra.mxu0 0.0
      %1595 = vmatprep.subr.mxu0 0.0
      %1596 = vmatpush2.msra.mxu0 0.0
      %1597 = vmatprep.subr.mxu0 0.0
      %1598 = vmatpush2.msra.mxu0 0.0
      %1599 = vmatprep.subr.mxu0 0.0
      %1600 = vmatpush2.msra.mxu0 0.0
      %1601 = vmatprep.subr.mxu0 0.0
      %1602 = vmatpush2.msra.mxu0 0.0
      %1603 = vmatprep.mubr.f32.mxu0 0.0
      %1604 = vmatmul.mubr.f32.gmra.mxu0 %v1429
      %v1605 = vpop.f32.mrf.mxu0
      %v1606 = vadd.f32 0.0, %v1605
      %v1607 = vpop.f32.mrf.mxu0
      %1608 = vmatprep.mubr.f32.mxu0 0.0
      %1609 = vmatmul.mubr.f32.gmra.mxu0 %v1432
      %v1610 = vpop.f32.mrf.mxu0
      %v1611 = vadd.f32 0.0, %v1610
      %v1612 = vpop.f32.mrf.mxu0
      %1613 = vmatprep.mubr.f32.mxu0 0.0
      %1614 = vmatmul.mubr.f32.gmra.mxu0 %v1435
      %v1615 = vpop.f32.mrf.mxu0
      %v1616 = vadd.f32 0.0, %v1615
      %v1617 = vpop.f32.mrf.mxu0
      %1618 = vmatprep.mubr.f32.mxu0 0.0
      %1619 = vmatmul.mubr.f32.gmra.mxu0 %v1438
      %v1620 = vpop.f32.mrf.mxu0
      %v1621 = vadd.f32 0.0, %v1620
      %v1622 = vpop.f32.mrf.mxu0
      %1623 = vmatprep.mubr.f32.mxu0 0.0
      %1624 = vmatmul.mubr.f32.gmra.mxu0 %v1441
      %v1625 = vpop.f32.mrf.mxu0
      %v1626 = vadd.f32 0.0, %v1625
      %v1627 = vpop.f32.mrf.mxu0
      %1628 = vmatprep.mubr.f32.mxu0 0.0
      %1629 = vmatmul.mubr.f32.gmra.mxu0 %v1444
      %v1630 = vpop.f32.mrf.mxu0
      %v1631 = vadd.f32 0.0, %v1630
      %v1632 = vpop.f32.mrf.mxu0
      %1633 = vmatprep.mubr.f32.mxu0 0.0
      %1634 = vmatmul.mubr.f32.gmra.mxu0 %v1447
      %v1635 = vpop.f32.mrf.mxu0
      %v1636 = vadd.f32 0.0, %v1635
      %v1637 = vpop.f32.mrf.mxu0
      %1638 = vmatprep.mubr.f32.mxu0 0.0
      %1639 = vmatmul.mubr.f32.gmra.mxu0 %v1450
      %v1640 = vpop.f32.mrf.mxu0
      %v1641 = vadd.f32 0.0, %v1640
      %v1642 = vpop.f32.mrf.mxu0
      %1643 = vmatprep.mubr.f32.mxu0 0.0
      %1644 = vmatmul.mubr.f32.gmra.mxu0 %v1453
      %v1645 = vpop.f32.mrf.mxu0
      %v1646 = vadd.f32 0.0, %v1645
      %v1647 = vpop.f32.mrf.mxu0
      %1648 = vmatprep.mubr.f32.mxu0 0.0
      %1649 = vmatmul.mubr.f32.gmra.mxu0 %v1456
      %v1650 = vpop.f32.mrf.mxu0
      %v1651 = vadd.f32 0.0, %v1650
      %v1652 = vpop.f32.mrf.mxu0
      %1653 = vmatprep.mubr.f32.mxu0 0.0
      %1654 = vmatmul.mubr.f32.gmra.mxu0 %v1459
      %v1655 = vpop.f32.mrf.mxu0
      %v1656 = vadd.f32 0.0, %v1655
      %v1657 = vpop.f32.mrf.mxu0
      %1658 = vmatprep.mubr.f32.mxu0 0.0
      %1659 = vmatmul.mubr.f32.gmra.mxu0 %v1462
      %v1660 = vpop.f32.mrf.mxu0
      %v1661 = vadd.f32 0.0, %v1660
      %v1662 = vpop.f32.mrf.mxu0
      %1663 = vmatprep.mubr.f32.mxu0 0.0
      %1664 = vmatmul.mubr.f32.gmra.mxu0 %v1465
      %v1665 = vpop.f32.mrf.mxu0
      %v1666 = vadd.f32 0.0, %v1665
      %v1667 = vpop.f32.mrf.mxu0
      %1668 = vmatprep.mubr.f32.mxu0 0.0
      %1669 = vmatmul.mubr.f32.gmra.mxu0 %v1468
      %v1670 = vpop.f32.mrf.mxu0
      %v1671 = vadd.f32 0.0, %v1670
      %v1672 = vpop.f32.mrf.mxu0
      %1673 = vmatprep.mubr.f32.mxu0 0.0
      %1674 = vmatmul.mubr.f32.gmra.mxu0 %v1471
      %v1675 = vpop.f32.mrf.mxu0
      %v1676 = vadd.f32 0.0, %v1675
      %v1677 = vpop.f32.mrf.mxu0
      %1678 = vmatprep.mubr.f32.mxu0 0.0
      %1679 = vmatmul.mubr.f32.gmra.mxu0 %v1474
      %v1680 = vpop.f32.mrf.mxu0
      %v1681 = vadd.f32 0.0, %v1680
      %v1682 = vpop.f32.mrf.mxu0
      %1683 = vmatprep.mubr.f32.mxu0 0.0
      %1684 = vmatmul.mubr.f32.gmra.mxu0 %v1477
      %v1685 = vpop.f32.mrf.mxu0
      %v1686 = vadd.f32 0.0, %v1685
      %v1687 = vpop.f32.mrf.mxu0
      %1688 = vmatprep.mubr.f32.mxu0 0.0
      %1689 = vmatmul.mubr.f32.gmra.mxu0 %v1480
      %v1690 = vpop.f32.mrf.mxu0
      %v1691 = vadd.f32 0.0, %v1690
      %v1692 = vpop.f32.mrf.mxu0
      %1693 = vmatprep.mubr.f32.mxu0 0.0
      %1694 = vmatmul.mubr.f32.gmra.mxu0 %v1483
      %v1695 = vpop.f32.mrf.mxu0
      %v1696 = vadd.f32 0.0, %v1695
      %v1697 = vpop.f32.mrf.mxu0
      %1698 = vmatprep.mubr.f32.mxu0 0.0
      %1699 = vmatmul.mubr.f32.gmra.mxu0 %v1486
      %v1700 = vpop.f32.mrf.mxu0
      %v1701 = vadd.f32 0.0, %v1700
      %v1702 = vpop.f32.mrf.mxu0
      %1703 = vmatprep.mubr.f32.mxu0 0.0
      %1704 = vmatmul.mubr.f32.gmra.mxu0 %v1489
      %v1705 = vpop.f32.mrf.mxu0
      %v1706 = vadd.f32 0.0, %v1705
      %v1707 = vpop.f32.mrf.mxu0
      %1708 = vmatprep.mubr.f32.mxu0 0.0
      %1709 = vmatmul.mubr.f32.gmra.mxu0 %v1492
      %v1710 = vpop.f32.mrf.mxu0
      %v1711 = vadd.f32 0.0, %v1710
      %v1712 = vpop.f32.mrf.mxu0
      %1713 = vmatprep.mubr.f32.mxu0 0.0
      %1714 = vmatmul.mubr.f32.gmra.mxu0 %v1495
      %v1715 = vpop.f32.mrf.mxu0
      %v1716 = vadd.f32 0.0, %v1715
      %v1717 = vpop.f32.mrf.mxu0
      %1718 = vmatprep.mubr.f32.mxu0 0.0
      %1719 = vmatmul.mubr.f32.gmra.mxu0 %v1498
      %v1720 = vpop.f32.mrf.mxu0
      %v1721 = vadd.f32 0.0, %v1720
      %v1722 = vpop.f32.mrf.mxu0
      %1723 = vmatprep.mubr.f32.mxu0 0.0
      %1724 = vmatmul.mubr.f32.gmra.mxu0 %v1501
      %v1725 = vpop.f32.mrf.mxu0
      %v1726 = vadd.f32 0.0, %v1725
      %v1727 = vpop.f32.mrf.mxu0
      %1728 = vmatprep.mubr.f32.mxu0 0.0
      %1729 = vmatmul.mubr.f32.gmra.mxu0 %v1504
      %v1730 = vpop.f32.mrf.mxu0
      %v1731 = vadd.f32 0.0, %v1730
      %v1732 = vpop.f32.mrf.mxu0
      %1733 = vmatprep.mubr.f32.mxu0 0.0
      %1734 = vmatmul.mubr.f32.gmra.mxu0 %v1507
      %v1735 = vpop.f32.mrf.mxu0
      %v1736 = vadd.f32 0.0, %v1735
      %v1737 = vpop.f32.mrf.mxu0
      %1738 = vmatprep.mubr.f32.mxu0 0.0
      %1739 = vmatmul.mubr.f32.gmra.mxu0 %v1510
      %v1740 = vpop.f32.mrf.mxu0
      %v1741 = vadd.f32 0.0, %v1740
      %v1742 = vpop.f32.mrf.mxu0
      %1743 = vmatprep.mubr.f32.mxu0 0.0
      %1744 = vmatmul.mubr.f32.gmra.mxu0 %v1513
      %v1745 = vpop.f32.mrf.mxu0
      %v1746 = vadd.f32 0.0, %v1745
      %v1747 = vpop.f32.mrf.mxu0
      %1748 = vmatprep.mubr.f32.mxu0 0.0
      %1749 = vmatmul.mubr.f32.gmra.mxu0 %v1516
      %v1750 = vpop.f32.mrf.mxu0
      %v1751 = vadd.f32 0.0, %v1750
      %v1752 = vpop.f32.mrf.mxu0
      %1753 = vmatprep.mubr.f32.mxu0 0.0
      %1754 = vmatmul.mubr.f32.gmra.mxu0 %v1519
      %v1755 = vpop.f32.mrf.mxu0
      %v1756 = vadd.f32 0.0, %v1755
      %v1757 = vpop.f32.mrf.mxu0
      %1758 = vmatprep.mubr.f32.mxu0 0.0
      %1759 = vmatmul.mubr.f32.gmra.mxu0 %v1522
      %v1760 = vpop.f32.mrf.mxu0
      %v1761 = vadd.f32 0.0, %v1760
      %v1762 = vpop.f32.mrf.mxu0
      %1763 = vmatprep.mubr.f32.mxu0 0.0
      %1764 = vmatmul.mubr.f32.gmra.mxu0 %v1525
      %v1765 = vpop.f32.mrf.mxu0
      %v1766 = vadd.f32 0.0, %v1765
      %v1767 = vpop.f32.mrf.mxu0
      %1768 = vmatprep.mubr.f32.mxu0 0.0
      %1769 = vmatmul.mubr.f32.gmra.mxu0 %v1528
      %v1770 = vpop.f32.mrf.mxu0
      %v1771 = vadd.f32 0.0, %v1770
      %v1772 = vpop.f32.mrf.mxu0
      %1773 = vmatprep.mubr.f32.mxu0 0.0
      %1774 = vmatmul.mubr.f32.gmra.mxu0 %v1531
      %v1775 = vpop.f32.mrf.mxu0
      %v1776 = vadd.f32 0.0, %v1775
      %v1777 = vpop.f32.mrf.mxu0
      %1778 = vmatprep.mubr.f32.mxu0 0.0
      %1779 = vmatmul.mubr.f32.gmra.mxu0 %v1534
      %v1780 = vpop.f32.mrf.mxu0
      %v1781 = vadd.f32 0.0, %v1780
      %v1782 = vpop.f32.mrf.mxu0
      %1783 = vdwg.mxu0
      %v1784 = vadd.f32 %v1354, %v1606
      %v1785 = vadd.f32 %v1355, %v1611
      %v1786 = vadd.f32 %v1356, %v1616
      %v1787 = vadd.f32 %v1357, %v1621
      %v1788 = vadd.f32 %v1358, %v1626
      %v1789 = vadd.f32 %v1359, %v1631
      %v1790 = vadd.f32 %v1360, %v1636
      %v1791 = vadd.f32 %v1361, %v1641
      %v1792 = vadd.f32 %v1362, %v1646
      %v1793 = vadd.f32 %v1363, %v1651
      %v1794 = vadd.f32 %v1364, %v1656
      %v1795 = vadd.f32 %v1365, %v1661
      %v1796 = vadd.f32 %v1366, %v1666
      %v1797 = vadd.f32 %v1367, %v1671
      %v1798 = vadd.f32 %v1368, %v1676
      %v1799 = vadd.f32 %v1369, %v1681
      %v1800 = vadd.f32 %v1370, %v1686
      %v1801 = vadd.f32 %v1371, %v1691
      %v1802 = vadd.f32 %v1372, %v1696
      %v1803 = vadd.f32 %v1373, %v1701
      %v1804 = vadd.f32 %v1374, %v1706
      %v1805 = vadd.f32 %v1375, %v1711
      %v1806 = vadd.f32 %v1376, %v1716
      %v1807 = vadd.f32 %v1377, %v1721
      %v1808 = vadd.f32 %v1378, %v1726
      %v1809 = vadd.f32 %v1379, %v1731
      %v1810 = vadd.f32 %v1380, %v1736
      %v1811 = vadd.f32 %v1381, %v1741
      %v1812 = vadd.f32 %v1382, %v1746
      %v1813 = vadd.f32 %v1383, %v1751
      %v1814 = vadd.f32 %v1384, %v1756
      %v1815 = vadd.f32 %v1385, %v1761
      %v1816 = vadd.f32 %v1386, %v1766
      %v1817 = vadd.f32 %v1387, %v1771
      %v1818 = vadd.f32 %v1388, %v1776
      %v1819 = vadd.f32 %v1389, %v1781
      %v1820 = vld [vmem:[%s165 + $0x13] sm:$0xff]
      %v1821 = vld [vmem:[%s165 + $0x1b] sm:$0xff]
      %v1822 = vld [vmem:[%s165 + $0x23] sm:$0xff]
      %v1823 = vld [vmem:[%s165 + $0x2b] sm:$0xff]
      %v1824 = vld [vmem:[%s165 + $0x33] sm:$0xff]
      %v1825 = vld [vmem:[%s165 + $0x3b] sm:$0xff]
      %v1826 = vld [vmem:[%s165 + $0x43] sm:$0xff]
      %v1827 = vld [vmem:[%s165 + $0x4b] sm:$0xff]
      %v1828 = vld [vmem:[%s165 + $0x53] sm:$0xff]
      %v1829 = vld [vmem:[%s165 + $0x5b] sm:$0xff]
      %v1830 = vld [vmem:[%s165 + $0x63] sm:$0xff]
      %v1831 = vld [vmem:[%s165 + $0x6b] sm:$0xff]
      %v1832 = vld [vmem:[%s165 + $0x73] sm:$0xff]
      %v1833 = vld [vmem:[%s165 + $0x7b] sm:$0xff]
      %v1834 = vld [vmem:[%s165 + $0x83] sm:$0xff]
      %v1835 = vld [vmem:[%s165 + $0x8b] sm:$0xff]
      %v1836 = vld [vmem:[%s165 + $0x93] sm:$0xff]
      %v1837 = vld [vmem:[%s165 + $0x9b] sm:$0xff]
      %v1838 = vld [vmem:[%s165 + $0xa3] sm:$0xff]
      %v1839 = vld [vmem:[%s165 + $0xab] sm:$0xff]
      %v1840 = vld [vmem:[%s165 + $0xb3] sm:$0xff]
      %v1841 = vld [vmem:[%s165 + $0xbb] sm:$0xff]
      %v1842 = vld [vmem:[%s165 + $0xc3] sm:$0xff]
      %v1843 = vld [vmem:[%s165 + $0xcb] sm:$0xff]
      %v1844 = vld [vmem:[%s165 + $0xd3] sm:$0xff]
      %v1845 = vld [vmem:[%s165 + $0xdb] sm:$0xff]
      %v1846 = vld [vmem:[%s165 + $0xe3] sm:$0xff]
      %v1847 = vld [vmem:[%s165 + $0xeb] sm:$0xff]
      %v1848 = vld [vmem:[%s165 + $0xf3] sm:$0xff]
      %v1849 = vld [vmem:[%s165 + $0xfb] sm:$0xff]
      %v1850 = vld [vmem:[%s165 + $0x103] sm:$0xff]
      %v1851 = vld [vmem:[%s165 + $0x10b] sm:$0xff]
      %v1852 = vld [vmem:[%s165 + $0x113] sm:$0xff]
      %v1853 = vld [vmem:[%s165 + $0x11b] sm:$0xff]
      %v1854 = vld [vmem:[%s165 + $0x123] sm:$0xff]
      %v1855 = vld [vmem:[%s165 + $0x12b] sm:$0xff]
      %s1856 = scalar_lea.vmem %s1, 16
      %v1857 = vld [vmem:[%s1856] sm:$0xf]
      %v1859 = vsel %vm246, %v1820, 0
      %v1862 = vsel %vm246, %v1821, 0
      %v1865 = vsel %vm246, %v1822, 0
      %v1868 = vsel %vm246, %v1823, 0
      %v1871 = vsel %vm246, %v1824, 0
      %v1874 = vsel %vm246, %v1825, 0
      %v1877 = vsel %vm246, %v1826, 0
      %v1880 = vsel %vm246, %v1827, 0
      %v1883 = vsel %vm246, %v1828, 0
      %v1886 = vsel %vm246, %v1829, 0
      %v1889 = vsel %vm246, %v1830, 0
      %v1892 = vsel %vm246, %v1831, 0
      %v1895 = vsel %vm246, %v1832, 0
      %v1898 = vsel %vm246, %v1833, 0
      %v1901 = vsel %vm246, %v1834, 0
      %v1904 = vsel %vm246, %v1835, 0
      %v1907 = vsel %vm246, %v1836, 0
      %v1910 = vsel %vm246, %v1837, 0
      %v1913 = vsel %vm246, %v1838, 0
      %v1916 = vsel %vm246, %v1839, 0
      %v1919 = vsel %vm246, %v1840, 0
      %v1922 = vsel %vm246, %v1841, 0
      %v1925 = vsel %vm246, %v1842, 0
      %v1928 = vsel %vm246, %v1843, 0
      %v1931 = vsel %vm246, %v1844, 0
      %v1934 = vsel %vm246, %v1845, 0
      %v1937 = vsel %vm246, %v1846, 0
      %v1940 = vsel %vm246, %v1847, 0
      %v1943 = vsel %vm246, %v1848, 0
      %v1946 = vsel %vm246, %v1849, 0
      %v1949 = vsel %vm246, %v1850, 0
      %v1952 = vsel %vm246, %v1851, 0
      %v1955 = vsel %vm246, %v1852, 0
      %v1958 = vsel %vm246, %v1853, 0
      %v1961 = vsel %vm246, %v1854, 0
      %v1964 = vsel %vm246, %v1855, 0
      %v1967 = vsel %vm355, %v1857, 0
      %1969 = vmatprep.subr.mxu0 0.0
      %1970 = vmatpush1.msra.mxu0 0.0
      %1971 = vmatprep.subr.mxu0 0.0
      %1972 = vmatpush1.msra.mxu0 0.0
      %1973 = vmatprep.subr.mxu0 0.0
      %1974 = vmatpush1.msra.mxu0 0.0
      %1975 = vmatprep.subr.mxu0 0.0
      %1976 = vmatpush1.msra.mxu0 0.0
      %1977 = vmatprep.subr.mxu0 0.0
      %1978 = vmatpush1.msra.mxu0 0.0
      %1979 = vmatprep.subr.mxu0 0.0
      %1980 = vmatpush1.msra.mxu0 0.0
      %1981 = vmatprep.subr.mxu0 0.0
      %1982 = vmatpush1.msra.mxu0 0.0
      %1983 = vmatprep.subr.mxu0 0.0
      %1984 = vmatpush1.msra.mxu0 0.0
      %1985 = vmatprep.subr.mxu0 0.0
      %1986 = vmatpush1.msra.mxu0 0.0
      %1987 = vmatprep.subr.mxu0 0.0
      %1988 = vmatpush1.msra.mxu0 0.0
      %1989 = vmatprep.subr.mxu0 0.0
      %1990 = vmatpush1.msra.mxu0 0.0
      %1991 = vmatprep.subr.mxu0 0.0
      %1992 = vmatpush1.msra.mxu0 0.0
      %1993 = vmatprep.subr.mxu0 0.0
      %1994 = vmatpush1.msra.mxu0 0.0
      %1995 = vmatprep.subr.mxu0 0.0
      %1996 = vmatpush1.msra.mxu0 0.0
      %1997 = vmatprep.subr.mxu0 0.0
      %1998 = vmatpush1.msra.mxu0 0.0
      %1999 = vmatprep.subr.mxu0 0.0
      %2000 = vmatpush1.msra.mxu0 %v1967
      %2001 = vmatprep.subr.mxu0 0.0
      %2002 = vmatpush2.msra.mxu0 0.0
      %2003 = vmatprep.subr.mxu0 0.0
      %2004 = vmatpush2.msra.mxu0 0.0
      %2005 = vmatprep.subr.mxu0 0.0
      %2006 = vmatpush2.msra.mxu0 0.0
      %2007 = vmatprep.subr.mxu0 0.0
      %2008 = vmatpush2.msra.mxu0 0.0
      %2009 = vmatprep.subr.mxu0 0.0
      %2010 = vmatpush2.msra.mxu0 0.0
      %2011 = vmatprep.subr.mxu0 0.0
      %2012 = vmatpush2.msra.mxu0 0.0
      %2013 = vmatprep.subr.mxu0 0.0
      %2014 = vmatpush2.msra.mxu0 0.0
      %2015 = vmatprep.subr.mxu0 0.0
      %2016 = vmatpush2.msra.mxu0 0.0
      %2017 = vmatprep.subr.mxu0 0.0
      %2018 = vmatpush2.msra.mxu0 0.0
      %2019 = vmatprep.subr.mxu0 0.0
      %2020 = vmatpush2.msra.mxu0 0.0
      %2021 = vmatprep.subr.mxu0 0.0
      %2022 = vmatpush2.msra.mxu0 0.0
      %2023 = vmatprep.subr.mxu0 0.0
      %2024 = vmatpush2.msra.mxu0 0.0
      %2025 = vmatprep.subr.mxu0 0.0
      %2026 = vmatpush2.msra.mxu0 0.0
      %2027 = vmatprep.subr.mxu0 0.0
      %2028 = vmatpush2.msra.mxu0 0.0
      %2029 = vmatprep.subr.mxu0 0.0
      %2030 = vmatpush2.msra.mxu0 0.0
      %2031 = vmatprep.subr.mxu0 0.0
      %2032 = vmatpush2.msra.mxu0 0.0
      %2033 = vmatprep.mubr.f32.mxu0 0.0
      %2034 = vmatmul.mubr.f32.gmra.mxu0 %v1859
      %v2035 = vpop.f32.mrf.mxu0
      %v2036 = vadd.f32 0.0, %v2035
      %v2037 = vpop.f32.mrf.mxu0
      %2038 = vmatprep.mubr.f32.mxu0 0.0
      %2039 = vmatmul.mubr.f32.gmra.mxu0 %v1862
      %v2040 = vpop.f32.mrf.mxu0
      %v2041 = vadd.f32 0.0, %v2040
      %v2042 = vpop.f32.mrf.mxu0
      %2043 = vmatprep.mubr.f32.mxu0 0.0
      %2044 = vmatmul.mubr.f32.gmra.mxu0 %v1865
      %v2045 = vpop.f32.mrf.mxu0
      %v2046 = vadd.f32 0.0, %v2045
      %v2047 = vpop.f32.mrf.mxu0
      %2048 = vmatprep.mubr.f32.mxu0 0.0
      %2049 = vmatmul.mubr.f32.gmra.mxu0 %v1868
      %v2050 = vpop.f32.mrf.mxu0
      %v2051 = vadd.f32 0.0, %v2050
      %v2052 = vpop.f32.mrf.mxu0
      %2053 = vmatprep.mubr.f32.mxu0 0.0
      %2054 = vmatmul.mubr.f32.gmra.mxu0 %v1871
      %v2055 = vpop.f32.mrf.mxu0
      %v2056 = vadd.f32 0.0, %v2055
      %v2057 = vpop.f32.mrf.mxu0
      %2058 = vmatprep.mubr.f32.mxu0 0.0
      %2059 = vmatmul.mubr.f32.gmra.mxu0 %v1874
      %v2060 = vpop.f32.mrf.mxu0
      %v2061 = vadd.f32 0.0, %v2060
      %v2062 = vpop.f32.mrf.mxu0
      %2063 = vmatprep.mubr.f32.mxu0 0.0
      %2064 = vmatmul.mubr.f32.gmra.mxu0 %v1877
      %v2065 = vpop.f32.mrf.mxu0
      %v2066 = vadd.f32 0.0, %v2065
      %v2067 = vpop.f32.mrf.mxu0
      %2068 = vmatprep.mubr.f32.mxu0 0.0
      %2069 = vmatmul.mubr.f32.gmra.mxu0 %v1880
      %v2070 = vpop.f32.mrf.mxu0
      %v2071 = vadd.f32 0.0, %v2070
      %v2072 = vpop.f32.mrf.mxu0
      %2073 = vmatprep.mubr.f32.mxu0 0.0
      %2074 = vmatmul.mubr.f32.gmra.mxu0 %v1883
      %v2075 = vpop.f32.mrf.mxu0
      %v2076 = vadd.f32 0.0, %v2075
      %v2077 = vpop.f32.mrf.mxu0
      %2078 = vmatprep.mubr.f32.mxu0 0.0
      %2079 = vmatmul.mubr.f32.gmra.mxu0 %v1886
      %v2080 = vpop.f32.mrf.mxu0
      %v2081 = vadd.f32 0.0, %v2080
      %v2082 = vpop.f32.mrf.mxu0
      %2083 = vmatprep.mubr.f32.mxu0 0.0
      %2084 = vmatmul.mubr.f32.gmra.mxu0 %v1889
      %v2085 = vpop.f32.mrf.mxu0
      %v2086 = vadd.f32 0.0, %v2085
      %v2087 = vpop.f32.mrf.mxu0
      %2088 = vmatprep.mubr.f32.mxu0 0.0
      %2089 = vmatmul.mubr.f32.gmra.mxu0 %v1892
      %v2090 = vpop.f32.mrf.mxu0
      %v2091 = vadd.f32 0.0, %v2090
      %v2092 = vpop.f32.mrf.mxu0
      %2093 = vmatprep.mubr.f32.mxu0 0.0
      %2094 = vmatmul.mubr.f32.gmra.mxu0 %v1895
      %v2095 = vpop.f32.mrf.mxu0
      %v2096 = vadd.f32 0.0, %v2095
      %v2097 = vpop.f32.mrf.mxu0
      %2098 = vmatprep.mubr.f32.mxu0 0.0
      %2099 = vmatmul.mubr.f32.gmra.mxu0 %v1898
      %v2100 = vpop.f32.mrf.mxu0
      %v2101 = vadd.f32 0.0, %v2100
      %v2102 = vpop.f32.mrf.mxu0
      %2103 = vmatprep.mubr.f32.mxu0 0.0
      %2104 = vmatmul.mubr.f32.gmra.mxu0 %v1901
      %v2105 = vpop.f32.mrf.mxu0
      %v2106 = vadd.f32 0.0, %v2105
      %v2107 = vpop.f32.mrf.mxu0
      %2108 = vmatprep.mubr.f32.mxu0 0.0
      %2109 = vmatmul.mubr.f32.gmra.mxu0 %v1904
      %v2110 = vpop.f32.mrf.mxu0
      %v2111 = vadd.f32 0.0, %v2110
      %v2112 = vpop.f32.mrf.mxu0
      %2113 = vmatprep.mubr.f32.mxu0 0.0
      %2114 = vmatmul.mubr.f32.gmra.mxu0 %v1907
      %v2115 = vpop.f32.mrf.mxu0
      %v2116 = vadd.f32 0.0, %v2115
      %v2117 = vpop.f32.mrf.mxu0
      %2118 = vmatprep.mubr.f32.mxu0 0.0
      %2119 = vmatmul.mubr.f32.gmra.mxu0 %v1910
      %v2120 = vpop.f32.mrf.mxu0
      %v2121 = vadd.f32 0.0, %v2120
      %v2122 = vpop.f32.mrf.mxu0
      %2123 = vmatprep.mubr.f32.mxu0 0.0
      %2124 = vmatmul.mubr.f32.gmra.mxu0 %v1913
      %v2125 = vpop.f32.mrf.mxu0
      %v2126 = vadd.f32 0.0, %v2125
      %v2127 = vpop.f32.mrf.mxu0
      %2128 = vmatprep.mubr.f32.mxu0 0.0
      %2129 = vmatmul.mubr.f32.gmra.mxu0 %v1916
      %v2130 = vpop.f32.mrf.mxu0
      %v2131 = vadd.f32 0.0, %v2130
      %v2132 = vpop.f32.mrf.mxu0
      %2133 = vmatprep.mubr.f32.mxu0 0.0
      %2134 = vmatmul.mubr.f32.gmra.mxu0 %v1919
      %v2135 = vpop.f32.mrf.mxu0
      %v2136 = vadd.f32 0.0, %v2135
      %v2137 = vpop.f32.mrf.mxu0
      %2138 = vmatprep.mubr.f32.mxu0 0.0
      %2139 = vmatmul.mubr.f32.gmra.mxu0 %v1922
      %v2140 = vpop.f32.mrf.mxu0
      %v2141 = vadd.f32 0.0, %v2140
      %v2142 = vpop.f32.mrf.mxu0
      %2143 = vmatprep.mubr.f32.mxu0 0.0
      %2144 = vmatmul.mubr.f32.gmra.mxu0 %v1925
      %v2145 = vpop.f32.mrf.mxu0
      %v2146 = vadd.f32 0.0, %v2145
      %v2147 = vpop.f32.mrf.mxu0
      %2148 = vmatprep.mubr.f32.mxu0 0.0
      %2149 = vmatmul.mubr.f32.gmra.mxu0 %v1928
      %v2150 = vpop.f32.mrf.mxu0
      %v2151 = vadd.f32 0.0, %v2150
      %v2152 = vpop.f32.mrf.mxu0
      %2153 = vmatprep.mubr.f32.mxu0 0.0
      %2154 = vmatmul.mubr.f32.gmra.mxu0 %v1931
      %v2155 = vpop.f32.mrf.mxu0
      %v2156 = vadd.f32 0.0, %v2155
      %v2157 = vpop.f32.mrf.mxu0
      %2158 = vmatprep.mubr.f32.mxu0 0.0
      %2159 = vmatmul.mubr.f32.gmra.mxu0 %v1934
      %v2160 = vpop.f32.mrf.mxu0
      %v2161 = vadd.f32 0.0, %v2160
      %v2162 = vpop.f32.mrf.mxu0
      %2163 = vmatprep.mubr.f32.mxu0 0.0
      %2164 = vmatmul.mubr.f32.gmra.mxu0 %v1937
      %v2165 = vpop.f32.mrf.mxu0
      %v2166 = vadd.f32 0.0, %v2165
      %v2167 = vpop.f32.mrf.mxu0
      %2168 = vmatprep.mubr.f32.mxu0 0.0
      %2169 = vmatmul.mubr.f32.gmra.mxu0 %v1940
      %v2170 = vpop.f32.mrf.mxu0
      %v2171 = vadd.f32 0.0, %v2170
      %v2172 = vpop.f32.mrf.mxu0
      %2173 = vmatprep.mubr.f32.mxu0 0.0
      %2174 = vmatmul.mubr.f32.gmra.mxu0 %v1943
      %v2175 = vpop.f32.mrf.mxu0
      %v2176 = vadd.f32 0.0, %v2175
      %v2177 = vpop.f32.mrf.mxu0
      %2178 = vmatprep.mubr.f32.mxu0 0.0
      %2179 = vmatmul.mubr.f32.gmra.mxu0 %v1946
      %v2180 = vpop.f32.mrf.mxu0
      %v2181 = vadd.f32 0.0, %v2180
      %v2182 = vpop.f32.mrf.mxu0
      %2183 = vmatprep.mubr.f32.mxu0 0.0
      %2184 = vmatmul.mubr.f32.gmra.mxu0 %v1949
      %v2185 = vpop.f32.mrf.mxu0
      %v2186 = vadd.f32 0.0, %v2185
      %v2187 = vpop.f32.mrf.mxu0
      %2188 = vmatprep.mubr.f32.mxu0 0.0
      %2189 = vmatmul.mubr.f32.gmra.mxu0 %v1952
      %v2190 = vpop.f32.mrf.mxu0
      %v2191 = vadd.f32 0.0, %v2190
      %v2192 = vpop.f32.mrf.mxu0
      %2193 = vmatprep.mubr.f32.mxu0 0.0
      %2194 = vmatmul.mubr.f32.gmra.mxu0 %v1955
      %v2195 = vpop.f32.mrf.mxu0
      %v2196 = vadd.f32 0.0, %v2195
      %v2197 = vpop.f32.mrf.mxu0
      %2198 = vmatprep.mubr.f32.mxu0 0.0
      %2199 = vmatmul.mubr.f32.gmra.mxu0 %v1958
      %v2200 = vpop.f32.mrf.mxu0
      %v2201 = vadd.f32 0.0, %v2200
      %v2202 = vpop.f32.mrf.mxu0
      %2203 = vmatprep.mubr.f32.mxu0 0.0
      %2204 = vmatmul.mubr.f32.gmra.mxu0 %v1961
      %v2205 = vpop.f32.mrf.mxu0
      %v2206 = vadd.f32 0.0, %v2205
      %v2207 = vpop.f32.mrf.mxu0
      %2208 = vmatprep.mubr.f32.mxu0 0.0
      %2209 = vmatmul.mubr.f32.gmra.mxu0 %v1964
      %v2210 = vpop.f32.mrf.mxu0
      %v2211 = vadd.f32 0.0, %v2210
      %v2212 = vpop.f32.mrf.mxu0
      %2213 = vdwg.mxu0
      %v2214 = vadd.f32 %v1784, %v2036
      %v2215 = vadd.f32 %v1785, %v2041
      %v2216 = vadd.f32 %v1786, %v2046
      %v2217 = vadd.f32 %v1787, %v2051
      %v2218 = vadd.f32 %v1788, %v2056
      %v2219 = vadd.f32 %v1789, %v2061
      %v2220 = vadd.f32 %v1790, %v2066
      %v2221 = vadd.f32 %v1791, %v2071
      %v2222 = vadd.f32 %v1792, %v2076
      %v2223 = vadd.f32 %v1793, %v2081
      %v2224 = vadd.f32 %v1794, %v2086
      %v2225 = vadd.f32 %v1795, %v2091
      %v2226 = vadd.f32 %v1796, %v2096
      %v2227 = vadd.f32 %v1797, %v2101
      %v2228 = vadd.f32 %v1798, %v2106
      %v2229 = vadd.f32 %v1799, %v2111
      %v2230 = vadd.f32 %v1800, %v2116
      %v2231 = vadd.f32 %v1801, %v2121
      %v2232 = vadd.f32 %v1802, %v2126
      %v2233 = vadd.f32 %v1803, %v2131
      %v2234 = vadd.f32 %v1804, %v2136
      %v2235 = vadd.f32 %v1805, %v2141
      %v2236 = vadd.f32 %v1806, %v2146
      %v2237 = vadd.f32 %v1807, %v2151
      %v2238 = vadd.f32 %v1808, %v2156
      %v2239 = vadd.f32 %v1809, %v2161
      %v2240 = vadd.f32 %v1810, %v2166
      %v2241 = vadd.f32 %v1811, %v2171
      %v2242 = vadd.f32 %v1812, %v2176
      %v2243 = vadd.f32 %v1813, %v2181
      %v2244 = vadd.f32 %v1814, %v2186
      %v2245 = vadd.f32 %v1815, %v2191
      %v2246 = vadd.f32 %v1816, %v2196
      %v2247 = vadd.f32 %v1817, %v2201
      %v2248 = vadd.f32 %v1818, %v2206
      %v2249 = vadd.f32 %v1819, %v2211
      %v2250 = vld [vmem:[%s165 + $0x14] sm:$0xff]
      %v2251 = vld [vmem:[%s165 + $0x1c] sm:$0xff]
      %v2252 = vld [vmem:[%s165 + $0x24] sm:$0xff]
      %v2253 = vld [vmem:[%s165 + $0x2c] sm:$0xff]
      %v2254 = vld [vmem:[%s165 + $0x34] sm:$0xff]
      %v2255 = vld [vmem:[%s165 + $0x3c] sm:$0xff]
      %v2256 = vld [vmem:[%s165 + $0x44] sm:$0xff]
      %v2257 = vld [vmem:[%s165 + $0x4c] sm:$0xff]
      %v2258 = vld [vmem:[%s165 + $0x54] sm:$0xff]
      %v2259 = vld [vmem:[%s165 + $0x5c] sm:$0xff]
      %v2260 = vld [vmem:[%s165 + $0x64] sm:$0xff]
      %v2261 = vld [vmem:[%s165 + $0x6c] sm:$0xff]
      %v2262 = vld [vmem:[%s165 + $0x74] sm:$0xff]
      %v2263 = vld [vmem:[%s165 + $0x7c] sm:$0xff]
      %v2264 = vld [vmem:[%s165 + $0x84] sm:$0xff]
      %v2265 = vld [vmem:[%s165 + $0x8c] sm:$0xff]
      %v2266 = vld [vmem:[%s165 + $0x94] sm:$0xff]
      %v2267 = vld [vmem:[%s165 + $0x9c] sm:$0xff]
      %v2268 = vld [vmem:[%s165 + $0xa4] sm:$0xff]
      %v2269 = vld [vmem:[%s165 + $0xac] sm:$0xff]
      %v2270 = vld [vmem:[%s165 + $0xb4] sm:$0xff]
      %v2271 = vld [vmem:[%s165 + $0xbc] sm:$0xff]
      %v2272 = vld [vmem:[%s165 + $0xc4] sm:$0xff]
      %v2273 = vld [vmem:[%s165 + $0xcc] sm:$0xff]
      %v2274 = vld [vmem:[%s165 + $0xd4] sm:$0xff]
      %v2275 = vld [vmem:[%s165 + $0xdc] sm:$0xff]
      %v2276 = vld [vmem:[%s165 + $0xe4] sm:$0xff]
      %v2277 = vld [vmem:[%s165 + $0xec] sm:$0xff]
      %v2278 = vld [vmem:[%s165 + $0xf4] sm:$0xff]
      %v2279 = vld [vmem:[%s165 + $0xfc] sm:$0xff]
      %v2280 = vld [vmem:[%s165 + $0x104] sm:$0xff]
      %v2281 = vld [vmem:[%s165 + $0x10c] sm:$0xff]
      %v2282 = vld [vmem:[%s165 + $0x114] sm:$0xff]
      %v2283 = vld [vmem:[%s165 + $0x11c] sm:$0xff]
      %v2284 = vld [vmem:[%s165 + $0x124] sm:$0xff]
      %v2285 = vld [vmem:[%s165 + $0x12c] sm:$0xff]
      %s2286 = scalar_lea.vmem %s1, 20
      %v2287 = vld [vmem:[%s2286] sm:$0xf]
      %v2289 = vsel %vm246, %v2250, 0
      %v2292 = vsel %vm246, %v2251, 0
      %v2295 = vsel %vm246, %v2252, 0
      %v2298 = vsel %vm246, %v2253, 0
      %v2301 = vsel %vm246, %v2254, 0
      %v2304 = vsel %vm246, %v2255, 0
      %v2307 = vsel %vm246, %v2256, 0
      %v2310 = vsel %vm246, %v2257, 0
      %v2313 = vsel %vm246, %v2258, 0
      %v2316 = vsel %vm246, %v2259, 0
      %v2319 = vsel %vm246, %v2260, 0
      %v2322 = vsel %vm246, %v2261, 0
      %v2325 = vsel %vm246, %v2262, 0
      %v2328 = vsel %vm246, %v2263, 0
      %v2331 = vsel %vm246, %v2264, 0
      %v2334 = vsel %vm246, %v2265, 0
      %v2337 = vsel %vm246, %v2266, 0
      %v2340 = vsel %vm246, %v2267, 0
      %v2343 = vsel %vm246, %v2268, 0
      %v2346 = vsel %vm246, %v2269, 0
      %v2349 = vsel %vm246, %v2270, 0
      %v2352 = vsel %vm246, %v2271, 0
      %v2355 = vsel %vm246, %v2272, 0
      %v2358 = vsel %vm246, %v2273, 0
      %v2361 = vsel %vm246, %v2274, 0
      %v2364 = vsel %vm246, %v2275, 0
      %v2367 = vsel %vm246, %v2276, 0
      %v2370 = vsel %vm246, %v2277, 0
      %v2373 = vsel %vm246, %v2278, 0
      %v2376 = vsel %vm246, %v2279, 0
      %v2379 = vsel %vm246, %v2280, 0
      %v2382 = vsel %vm246, %v2281, 0
      %v2385 = vsel %vm246, %v2282, 0
      %v2388 = vsel %vm246, %v2283, 0
      %v2391 = vsel %vm246, %v2284, 0
      %v2394 = vsel %vm246, %v2285, 0
      %v2397 = vsel %vm355, %v2287, 0
      %2399 = vmatprep.subr.mxu0 0.0
      %2400 = vmatpush1.msra.mxu0 0.0
      %2401 = vmatprep.subr.mxu0 0.0
      %2402 = vmatpush1.msra.mxu0 0.0
      %2403 = vmatprep.subr.mxu0 0.0
      %2404 = vmatpush1.msra.mxu0 0.0
      %2405 = vmatprep.subr.mxu0 0.0
      %2406 = vmatpush1.msra.mxu0 0.0
      %2407 = vmatprep.subr.mxu0 0.0
      %2408 = vmatpush1.msra.mxu0 0.0
      %2409 = vmatprep.subr.mxu0 0.0
      %2410 = vmatpush1.msra.mxu0 0.0
      %2411 = vmatprep.subr.mxu0 0.0
      %2412 = vmatpush1.msra.mxu0 0.0
      %2413 = vmatprep.subr.mxu0 0.0
      %2414 = vmatpush1.msra.mxu0 0.0
      %2415 = vmatprep.subr.mxu0 0.0
      %2416 = vmatpush1.msra.mxu0 0.0
      %2417 = vmatprep.subr.mxu0 0.0
      %2418 = vmatpush1.msra.mxu0 0.0
      %2419 = vmatprep.subr.mxu0 0.0
      %2420 = vmatpush1.msra.mxu0 0.0
      %2421 = vmatprep.subr.mxu0 0.0
      %2422 = vmatpush1.msra.mxu0 0.0
      %2423 = vmatprep.subr.mxu0 0.0
      %2424 = vmatpush1.msra.mxu0 0.0
      %2425 = vmatprep.subr.mxu0 0.0
      %2426 = vmatpush1.msra.mxu0 0.0
      %2427 = vmatprep.subr.mxu0 0.0
      %2428 = vmatpush1.msra.mxu0 0.0
      %2429 = vmatprep.subr.mxu0 0.0
      %2430 = vmatpush1.msra.mxu0 %v2397
      %2431 = vmatprep.subr.mxu0 0.0
      %2432 = vmatpush2.msra.mxu0 0.0
      %2433 = vmatprep.subr.mxu0 0.0
      %2434 = vmatpush2.msra.mxu0 0.0
      %2435 = vmatprep.subr.mxu0 0.0
      %2436 = vmatpush2.msra.mxu0 0.0
      %2437 = vmatprep.subr.mxu0 0.0
      %2438 = vmatpush2.msra.mxu0 0.0
      %2439 = vmatprep.subr.mxu0 0.0
      %2440 = vmatpush2.msra.mxu0 0.0
      %2441 = vmatprep.subr.mxu0 0.0
      %2442 = vmatpush2.msra.mxu0 0.0
      %2443 = vmatprep.subr.mxu0 0.0
      %2444 = vmatpush2.msra.mxu0 0.0
      %2445 = vmatprep.subr.mxu0 0.0
      %2446 = vmatpush2.msra.mxu0 0.0
      %2447 = vmatprep.subr.mxu0 0.0
      %2448 = vmatpush2.msra.mxu0 0.0
      %2449 = vmatprep.subr.mxu0 0.0
      %2450 = vmatpush2.msra.mxu0 0.0
      %2451 = vmatprep.subr.mxu0 0.0
      %2452 = vmatpush2.msra.mxu0 0.0
      %2453 = vmatprep.subr.mxu0 0.0
      %2454 = vmatpush2.msra.mxu0 0.0
      %2455 = vmatprep.subr.mxu0 0.0
      %2456 = vmatpush2.msra.mxu0 0.0
      %2457 = vmatprep.subr.mxu0 0.0
      %2458 = vmatpush2.msra.mxu0 0.0
      %2459 = vmatprep.subr.mxu0 0.0
      %2460 = vmatpush2.msra.mxu0 0.0
      %2461 = vmatprep.subr.mxu0 0.0
      %2462 = vmatpush2.msra.mxu0 0.0
      %2463 = vmatprep.mubr.f32.mxu0 0.0
      %2464 = vmatmul.mubr.f32.gmra.mxu0 %v2289
      %v2465 = vpop.f32.mrf.mxu0
      %v2466 = vadd.f32 0.0, %v2465
      %v2467 = vpop.f32.mrf.mxu0
      %2468 = vmatprep.mubr.f32.mxu0 0.0
      %2469 = vmatmul.mubr.f32.gmra.mxu0 %v2292
      %v2470 = vpop.f32.mrf.mxu0
      %v2471 = vadd.f32 0.0, %v2470
      %v2472 = vpop.f32.mrf.mxu0
      %2473 = vmatprep.mubr.f32.mxu0 0.0
      %2474 = vmatmul.mubr.f32.gmra.mxu0 %v2295
      %v2475 = vpop.f32.mrf.mxu0
      %v2476 = vadd.f32 0.0, %v2475
      %v2477 = vpop.f32.mrf.mxu0
      %2478 = vmatprep.mubr.f32.mxu0 0.0
      %2479 = vmatmul.mubr.f32.gmra.mxu0 %v2298
      %v2480 = vpop.f32.mrf.mxu0
      %v2481 = vadd.f32 0.0, %v2480
      %v2482 = vpop.f32.mrf.mxu0
      %2483 = vmatprep.mubr.f32.mxu0 0.0
      %2484 = vmatmul.mubr.f32.gmra.mxu0 %v2301
      %v2485 = vpop.f32.mrf.mxu0
      %v2486 = vadd.f32 0.0, %v2485
      %v2487 = vpop.f32.mrf.mxu0
      %2488 = vmatprep.mubr.f32.mxu0 0.0
      %2489 = vmatmul.mubr.f32.gmra.mxu0 %v2304
      %v2490 = vpop.f32.mrf.mxu0
      %v2491 = vadd.f32 0.0, %v2490
      %v2492 = vpop.f32.mrf.mxu0
      %2493 = vmatprep.mubr.f32.mxu0 0.0
      %2494 = vmatmul.mubr.f32.gmra.mxu0 %v2307
      %v2495 = vpop.f32.mrf.mxu0
      %v2496 = vadd.f32 0.0, %v2495
      %v2497 = vpop.f32.mrf.mxu0
      %2498 = vmatprep.mubr.f32.mxu0 0.0
      %2499 = vmatmul.mubr.f32.gmra.mxu0 %v2310
      %v2500 = vpop.f32.mrf.mxu0
      %v2501 = vadd.f32 0.0, %v2500
      %v2502 = vpop.f32.mrf.mxu0
      %2503 = vmatprep.mubr.f32.mxu0 0.0
      %2504 = vmatmul.mubr.f32.gmra.mxu0 %v2313
      %v2505 = vpop.f32.mrf.mxu0
      %v2506 = vadd.f32 0.0, %v2505
      %v2507 = vpop.f32.mrf.mxu0
      %2508 = vmatprep.mubr.f32.mxu0 0.0
      %2509 = vmatmul.mubr.f32.gmra.mxu0 %v2316
      %v2510 = vpop.f32.mrf.mxu0
      %v2511 = vadd.f32 0.0, %v2510
      %v2512 = vpop.f32.mrf.mxu0
      %2513 = vmatprep.mubr.f32.mxu0 0.0
      %2514 = vmatmul.mubr.f32.gmra.mxu0 %v2319
      %v2515 = vpop.f32.mrf.mxu0
      %v2516 = vadd.f32 0.0, %v2515
      %v2517 = vpop.f32.mrf.mxu0
      %2518 = vmatprep.mubr.f32.mxu0 0.0
      %2519 = vmatmul.mubr.f32.gmra.mxu0 %v2322
      %v2520 = vpop.f32.mrf.mxu0
      %v2521 = vadd.f32 0.0, %v2520
      %v2522 = vpop.f32.mrf.mxu0
      %2523 = vmatprep.mubr.f32.mxu0 0.0
      %2524 = vmatmul.mubr.f32.gmra.mxu0 %v2325
      %v2525 = vpop.f32.mrf.mxu0
      %v2526 = vadd.f32 0.0, %v2525
      %v2527 = vpop.f32.mrf.mxu0
      %2528 = vmatprep.mubr.f32.mxu0 0.0
      %2529 = vmatmul.mubr.f32.gmra.mxu0 %v2328
      %v2530 = vpop.f32.mrf.mxu0
      %v2531 = vadd.f32 0.0, %v2530
      %v2532 = vpop.f32.mrf.mxu0
      %2533 = vmatprep.mubr.f32.mxu0 0.0
      %2534 = vmatmul.mubr.f32.gmra.mxu0 %v2331
      %v2535 = vpop.f32.mrf.mxu0
      %v2536 = vadd.f32 0.0, %v2535
      %v2537 = vpop.f32.mrf.mxu0
      %2538 = vmatprep.mubr.f32.mxu0 0.0
      %2539 = vmatmul.mubr.f32.gmra.mxu0 %v2334
      %v2540 = vpop.f32.mrf.mxu0
      %v2541 = vadd.f32 0.0, %v2540
      %v2542 = vpop.f32.mrf.mxu0
      %2543 = vmatprep.mubr.f32.mxu0 0.0
      %2544 = vmatmul.mubr.f32.gmra.mxu0 %v2337
      %v2545 = vpop.f32.mrf.mxu0
      %v2546 = vadd.f32 0.0, %v2545
      %v2547 = vpop.f32.mrf.mxu0
      %2548 = vmatprep.mubr.f32.mxu0 0.0
      %2549 = vmatmul.mubr.f32.gmra.mxu0 %v2340
      %v2550 = vpop.f32.mrf.mxu0
      %v2551 = vadd.f32 0.0, %v2550
      %v2552 = vpop.f32.mrf.mxu0
      %2553 = vmatprep.mubr.f32.mxu0 0.0
      %2554 = vmatmul.mubr.f32.gmra.mxu0 %v2343
      %v2555 = vpop.f32.mrf.mxu0
      %v2556 = vadd.f32 0.0, %v2555
      %v2557 = vpop.f32.mrf.mxu0
      %2558 = vmatprep.mubr.f32.mxu0 0.0
      %2559 = vmatmul.mubr.f32.gmra.mxu0 %v2346
      %v2560 = vpop.f32.mrf.mxu0
      %v2561 = vadd.f32 0.0, %v2560
      %v2562 = vpop.f32.mrf.mxu0
      %2563 = vmatprep.mubr.f32.mxu0 0.0
      %2564 = vmatmul.mubr.f32.gmra.mxu0 %v2349
      %v2565 = vpop.f32.mrf.mxu0
      %v2566 = vadd.f32 0.0, %v2565
      %v2567 = vpop.f32.mrf.mxu0
      %2568 = vmatprep.mubr.f32.mxu0 0.0
      %2569 = vmatmul.mubr.f32.gmra.mxu0 %v2352
      %v2570 = vpop.f32.mrf.mxu0
      %v2571 = vadd.f32 0.0, %v2570
      %v2572 = vpop.f32.mrf.mxu0
      %2573 = vmatprep.mubr.f32.mxu0 0.0
      %2574 = vmatmul.mubr.f32.gmra.mxu0 %v2355
      %v2575 = vpop.f32.mrf.mxu0
      %v2576 = vadd.f32 0.0, %v2575
      %v2577 = vpop.f32.mrf.mxu0
      %2578 = vmatprep.mubr.f32.mxu0 0.0
      %2579 = vmatmul.mubr.f32.gmra.mxu0 %v2358
      %v2580 = vpop.f32.mrf.mxu0
      %v2581 = vadd.f32 0.0, %v2580
      %v2582 = vpop.f32.mrf.mxu0
      %2583 = vmatprep.mubr.f32.mxu0 0.0
      %2584 = vmatmul.mubr.f32.gmra.mxu0 %v2361
      %v2585 = vpop.f32.mrf.mxu0
      %v2586 = vadd.f32 0.0, %v2585
      %v2587 = vpop.f32.mrf.mxu0
      %2588 = vmatprep.mubr.f32.mxu0 0.0
      %2589 = vmatmul.mubr.f32.gmra.mxu0 %v2364
      %v2590 = vpop.f32.mrf.mxu0
      %v2591 = vadd.f32 0.0, %v2590
      %v2592 = vpop.f32.mrf.mxu0
      %2593 = vmatprep.mubr.f32.mxu0 0.0
      %2594 = vmatmul.mubr.f32.gmra.mxu0 %v2367
      %v2595 = vpop.f32.mrf.mxu0
      %v2596 = vadd.f32 0.0, %v2595
      %v2597 = vpop.f32.mrf.mxu0
      %2598 = vmatprep.mubr.f32.mxu0 0.0
      %2599 = vmatmul.mubr.f32.gmra.mxu0 %v2370
      %v2600 = vpop.f32.mrf.mxu0
      %v2601 = vadd.f32 0.0, %v2600
      %v2602 = vpop.f32.mrf.mxu0
      %2603 = vmatprep.mubr.f32.mxu0 0.0
      %2604 = vmatmul.mubr.f32.gmra.mxu0 %v2373
      %v2605 = vpop.f32.mrf.mxu0
      %v2606 = vadd.f32 0.0, %v2605
      %v2607 = vpop.f32.mrf.mxu0
      %2608 = vmatprep.mubr.f32.mxu0 0.0
      %2609 = vmatmul.mubr.f32.gmra.mxu0 %v2376
      %v2610 = vpop.f32.mrf.mxu0
      %v2611 = vadd.f32 0.0, %v2610
      %v2612 = vpop.f32.mrf.mxu0
      %2613 = vmatprep.mubr.f32.mxu0 0.0
      %2614 = vmatmul.mubr.f32.gmra.mxu0 %v2379
      %v2615 = vpop.f32.mrf.mxu0
      %v2616 = vadd.f32 0.0, %v2615
      %v2617 = vpop.f32.mrf.mxu0
      %2618 = vmatprep.mubr.f32.mxu0 0.0
      %2619 = vmatmul.mubr.f32.gmra.mxu0 %v2382
      %v2620 = vpop.f32.mrf.mxu0
      %v2621 = vadd.f32 0.0, %v2620
      %v2622 = vpop.f32.mrf.mxu0
      %2623 = vmatprep.mubr.f32.mxu0 0.0
      %2624 = vmatmul.mubr.f32.gmra.mxu0 %v2385
      %v2625 = vpop.f32.mrf.mxu0
      %v2626 = vadd.f32 0.0, %v2625
      %v2627 = vpop.f32.mrf.mxu0
      %2628 = vmatprep.mubr.f32.mxu0 0.0
      %2629 = vmatmul.mubr.f32.gmra.mxu0 %v2388
      %v2630 = vpop.f32.mrf.mxu0
      %v2631 = vadd.f32 0.0, %v2630
      %v2632 = vpop.f32.mrf.mxu0
      %2633 = vmatprep.mubr.f32.mxu0 0.0
      %2634 = vmatmul.mubr.f32.gmra.mxu0 %v2391
      %v2635 = vpop.f32.mrf.mxu0
      %v2636 = vadd.f32 0.0, %v2635
      %v2637 = vpop.f32.mrf.mxu0
      %2638 = vmatprep.mubr.f32.mxu0 0.0
      %2639 = vmatmul.mubr.f32.gmra.mxu0 %v2394
      %v2640 = vpop.f32.mrf.mxu0
      %v2641 = vadd.f32 0.0, %v2640
      %v2642 = vpop.f32.mrf.mxu0
      %2643 = vdwg.mxu0
      %v2644 = vadd.f32 %v2214, %v2466
      %v2645 = vadd.f32 %v2215, %v2471
      %v2646 = vadd.f32 %v2216, %v2476
      %v2647 = vadd.f32 %v2217, %v2481
      %v2648 = vadd.f32 %v2218, %v2486
      %v2649 = vadd.f32 %v2219, %v2491
      %v2650 = vadd.f32 %v2220, %v2496
      %v2651 = vadd.f32 %v2221, %v2501
      %v2652 = vadd.f32 %v2222, %v2506
      %v2653 = vadd.f32 %v2223, %v2511
      %v2654 = vadd.f32 %v2224, %v2516
      %v2655 = vadd.f32 %v2225, %v2521
      %v2656 = vadd.f32 %v2226, %v2526
      %v2657 = vadd.f32 %v2227, %v2531
      %v2658 = vadd.f32 %v2228, %v2536
      %v2659 = vadd.f32 %v2229, %v2541
      %v2660 = vadd.f32 %v2230, %v2546
      %v2661 = vadd.f32 %v2231, %v2551
      %v2662 = vadd.f32 %v2232, %v2556
      %v2663 = vadd.f32 %v2233, %v2561
      %v2664 = vadd.f32 %v2234, %v2566
      %v2665 = vadd.f32 %v2235, %v2571
      %v2666 = vadd.f32 %v2236, %v2576
      %v2667 = vadd.f32 %v2237, %v2581
      %v2668 = vadd.f32 %v2238, %v2586
      %v2669 = vadd.f32 %v2239, %v2591
      %v2670 = vadd.f32 %v2240, %v2596
      %v2671 = vadd.f32 %v2241, %v2601
      %v2672 = vadd.f32 %v2242, %v2606
      %v2673 = vadd.f32 %v2243, %v2611
      %v2674 = vadd.f32 %v2244, %v2616
      %v2675 = vadd.f32 %v2245, %v2621
      %v2676 = vadd.f32 %v2246, %v2626
      %v2677 = vadd.f32 %v2247, %v2631
      %v2678 = vadd.f32 %v2248, %v2636
      %v2679 = vadd.f32 %v2249, %v2641
      %v2680 = vld [vmem:[%s165 + $0x24] sm:$0xff]
      %v2681 = vld [vmem:[%s165 + $0x2c] sm:$0xff]
      %v2682 = vld [vmem:[%s165 + $0x34] sm:$0xff]
      %v2683 = vld [vmem:[%s165 + $0x3c] sm:$0xff]
      %v2684 = vld [vmem:[%s165 + $0x44] sm:$0xff]
      %v2685 = vld [vmem:[%s165 + $0x4c] sm:$0xff]
      %v2686 = vld [vmem:[%s165 + $0x54] sm:$0xff]
      %v2687 = vld [vmem:[%s165 + $0x5c] sm:$0xff]
      %v2688 = vld [vmem:[%s165 + $0x64] sm:$0xff]
      %v2689 = vld [vmem:[%s165 + $0x6c] sm:$0xff]
      %v2690 = vld [vmem:[%s165 + $0x74] sm:$0xff]
      %v2691 = vld [vmem:[%s165 + $0x7c] sm:$0xff]
      %v2692 = vld [vmem:[%s165 + $0x84] sm:$0xff]
      %v2693 = vld [vmem:[%s165 + $0x8c] sm:$0xff]
      %v2694 = vld [vmem:[%s165 + $0x94] sm:$0xff]
      %v2695 = vld [vmem:[%s165 + $0x9c] sm:$0xff]
      %v2696 = vld [vmem:[%s165 + $0xa4] sm:$0xff]
      %v2697 = vld [vmem:[%s165 + $0xac] sm:$0xff]
      %v2698 = vld [vmem:[%s165 + $0xb4] sm:$0xff]
      %v2699 = vld [vmem:[%s165 + $0xbc] sm:$0xff]
      %v2700 = vld [vmem:[%s165 + $0xc4] sm:$0xff]
      %v2701 = vld [vmem:[%s165 + $0xcc] sm:$0xff]
      %v2702 = vld [vmem:[%s165 + $0xd4] sm:$0xff]
      %v2703 = vld [vmem:[%s165 + $0xdc] sm:$0xff]
      %v2704 = vld [vmem:[%s165 + $0xe4] sm:$0xff]
      %v2705 = vld [vmem:[%s165 + $0xec] sm:$0xff]
      %v2706 = vld [vmem:[%s165 + $0xf4] sm:$0xff]
      %v2707 = vld [vmem:[%s165 + $0xfc] sm:$0xff]
      %v2708 = vld [vmem:[%s165 + $0x104] sm:$0xff]
      %v2709 = vld [vmem:[%s165 + $0x10c] sm:$0xff]
      %v2710 = vld [vmem:[%s165 + $0x114] sm:$0xff]
      %v2711 = vld [vmem:[%s165 + $0x11c] sm:$0xff]
      %v2712 = vld [vmem:[%s165 + $0x124] sm:$0xff]
      %v2713 = vld [vmem:[%s165 + $0x12c] sm:$0xff]
      %v2714 = vld [vmem:[%s165 + $0x134] sm:$0xff]
      %v2715 = vld [vmem:[%s165 + $0x13c] sm:$0xff]
      %s2716 = scalar_lea.vmem %s1, 24
      %v2717 = vld [vmem:[%s2716] sm:$0xf]
      %v2719 = vsel %vm246, %v2680, 0
      %v2722 = vsel %vm246, %v2681, 0
      %v2725 = vsel %vm246, %v2682, 0
      %v2728 = vsel %vm246, %v2683, 0
      %v2731 = vsel %vm246, %v2684, 0
      %v2734 = vsel %vm246, %v2685, 0
      %v2737 = vsel %vm246, %v2686, 0
      %v2740 = vsel %vm246, %v2687, 0
      %v2743 = vsel %vm246, %v2688, 0
      %v2746 = vsel %vm246, %v2689, 0
      %v2749 = vsel %vm246, %v2690, 0
      %v2752 = vsel %vm246, %v2691, 0
      %v2755 = vsel %vm246, %v2692, 0
      %v2758 = vsel %vm246, %v2693, 0
      %v2761 = vsel %vm246, %v2694, 0
      %v2764 = vsel %vm246, %v2695, 0
      %v2767 = vsel %vm246, %v2696, 0
      %v2770 = vsel %vm246, %v2697, 0
      %v2773 = vsel %vm246, %v2698, 0
      %v2776 = vsel %vm246, %v2699, 0
      %v2779 = vsel %vm246, %v2700, 0
      %v2782 = vsel %vm246, %v2701, 0
      %v2785 = vsel %vm246, %v2702, 0
      %v2788 = vsel %vm246, %v2703, 0
      %v2791 = vsel %vm246, %v2704, 0
      %v2794 = vsel %vm246, %v2705, 0
      %v2797 = vsel %vm246, %v2706, 0
      %v2800 = vsel %vm246, %v2707, 0
      %v2803 = vsel %vm246, %v2708, 0
      %v2806 = vsel %vm246, %v2709, 0
      %v2809 = vsel %vm246, %v2710, 0
      %v2812 = vsel %vm246, %v2711, 0
      %v2815 = vsel %vm246, %v2712, 0
      %v2818 = vsel %vm246, %v2713, 0
      %v2821 = vsel %vm246, %v2714, 0
      %v2824 = vsel %vm246, %v2715, 0
      %v2827 = vsel %vm355, %v2717, 0
      %2829 = vmatprep.subr.mxu0 0.0
      %2830 = vmatpush1.msra.mxu0 0.0
      %2831 = vmatprep.subr.mxu0 0.0
      %2832 = vmatpush1.msra.mxu0 0.0
      %2833 = vmatprep.subr.mxu0 0.0
      %2834 = vmatpush1.msra.mxu0 0.0
      %2835 = vmatprep.subr.mxu0 0.0
      %2836 = vmatpush1.msra.mxu0 0.0
      %2837 = vmatprep.subr.mxu0 0.0
      %2838 = vmatpush1.msra.mxu0 0.0
      %2839 = vmatprep.subr.mxu0 0.0
      %2840 = vmatpush1.msra.mxu0 0.0
      %2841 = vmatprep.subr.mxu0 0.0
      %2842 = vmatpush1.msra.mxu0 0.0
      %2843 = vmatprep.subr.mxu0 0.0
      %2844 = vmatpush1.msra.mxu0 0.0
      %2845 = vmatprep.subr.mxu0 0.0
      %2846 = vmatpush1.msra.mxu0 0.0
      %2847 = vmatprep.subr.mxu0 0.0
      %2848 = vmatpush1.msra.mxu0 0.0
      %2849 = vmatprep.subr.mxu0 0.0
      %2850 = vmatpush1.msra.mxu0 0.0
      %2851 = vmatprep.subr.mxu0 0.0
      %2852 = vmatpush1.msra.mxu0 0.0
      %2853 = vmatprep.subr.mxu0 0.0
      %2854 = vmatpush1.msra.mxu0 0.0
      %2855 = vmatprep.subr.mxu0 0.0
      %2856 = vmatpush1.msra.mxu0 0.0
      %2857 = vmatprep.subr.mxu0 0.0
      %2858 = vmatpush1.msra.mxu0 0.0
      %2859 = vmatprep.subr.mxu0 0.0
      %2860 = vmatpush1.msra.mxu0 %v2827
      %2861 = vmatprep.subr.mxu0 0.0
      %2862 = vmatpush2.msra.mxu0 0.0
      %2863 = vmatprep.subr.mxu0 0.0
      %2864 = vmatpush2.msra.mxu0 0.0
      %2865 = vmatprep.subr.mxu0 0.0
      %2866 = vmatpush2.msra.mxu0 0.0
      %2867 = vmatprep.subr.mxu0 0.0
      %2868 = vmatpush2.msra.mxu0 0.0
      %2869 = vmatprep.subr.mxu0 0.0
      %2870 = vmatpush2.msra.mxu0 0.0
      %2871 = vmatprep.subr.mxu0 0.0
      %2872 = vmatpush2.msra.mxu0 0.0
      %2873 = vmatprep.subr.mxu0 0.0
      %2874 = vmatpush2.msra.mxu0 0.0
      %2875 = vmatprep.subr.mxu0 0.0
      %2876 = vmatpush2.msra.mxu0 0.0
      %2877 = vmatprep.subr.mxu0 0.0
      %2878 = vmatpush2.msra.mxu0 0.0
      %2879 = vmatprep.subr.mxu0 0.0
      %2880 = vmatpush2.msra.mxu0 0.0
      %2881 = vmatprep.subr.mxu0 0.0
      %2882 = vmatpush2.msra.mxu0 0.0
      %2883 = vmatprep.subr.mxu0 0.0
      %2884 = vmatpush2.msra.mxu0 0.0
      %2885 = vmatprep.subr.mxu0 0.0
      %2886 = vmatpush2.msra.mxu0 0.0
      %2887 = vmatprep.subr.mxu0 0.0
      %2888 = vmatpush2.msra.mxu0 0.0
      %2889 = vmatprep.subr.mxu0 0.0
      %2890 = vmatpush2.msra.mxu0 0.0
      %2891 = vmatprep.subr.mxu0 0.0
      %2892 = vmatpush2.msra.mxu0 0.0
      %2893 = vmatprep.mubr.f32.mxu0 0.0
      %2894 = vmatmul.mubr.f32.gmra.mxu0 %v2719
      %v2895 = vpop.f32.mrf.mxu0
      %v2896 = vadd.f32 0.0, %v2895
      %v2897 = vpop.f32.mrf.mxu0
      %2898 = vmatprep.mubr.f32.mxu0 0.0
      %2899 = vmatmul.mubr.f32.gmra.mxu0 %v2722
      %v2900 = vpop.f32.mrf.mxu0
      %v2901 = vadd.f32 0.0, %v2900
      %v2902 = vpop.f32.mrf.mxu0
      %2903 = vmatprep.mubr.f32.mxu0 0.0
      %2904 = vmatmul.mubr.f32.gmra.mxu0 %v2725
      %v2905 = vpop.f32.mrf.mxu0
      %v2906 = vadd.f32 0.0, %v2905
      %v2907 = vpop.f32.mrf.mxu0
      %2908 = vmatprep.mubr.f32.mxu0 0.0
      %2909 = vmatmul.mubr.f32.gmra.mxu0 %v2728
      %v2910 = vpop.f32.mrf.mxu0
      %v2911 = vadd.f32 0.0, %v2910
      %v2912 = vpop.f32.mrf.mxu0
      %2913 = vmatprep.mubr.f32.mxu0 0.0
      %2914 = vmatmul.mubr.f32.gmra.mxu0 %v2731
      %v2915 = vpop.f32.mrf.mxu0
      %v2916 = vadd.f32 0.0, %v2915
      %v2917 = vpop.f32.mrf.mxu0
      %2918 = vmatprep.mubr.f32.mxu0 0.0
      %2919 = vmatmul.mubr.f32.gmra.mxu0 %v2734
      %v2920 = vpop.f32.mrf.mxu0
      %v2921 = vadd.f32 0.0, %v2920
      %v2922 = vpop.f32.mrf.mxu0
      %2923 = vmatprep.mubr.f32.mxu0 0.0
      %2924 = vmatmul.mubr.f32.gmra.mxu0 %v2737
      %v2925 = vpop.f32.mrf.mxu0
      %v2926 = vadd.f32 0.0, %v2925
      %v2927 = vpop.f32.mrf.mxu0
      %2928 = vmatprep.mubr.f32.mxu0 0.0
      %2929 = vmatmul.mubr.f32.gmra.mxu0 %v2740
      %v2930 = vpop.f32.mrf.mxu0
      %v2931 = vadd.f32 0.0, %v2930
      %v2932 = vpop.f32.mrf.mxu0
      %2933 = vmatprep.mubr.f32.mxu0 0.0
      %2934 = vmatmul.mubr.f32.gmra.mxu0 %v2743
      %v2935 = vpop.f32.mrf.mxu0
      %v2936 = vadd.f32 0.0, %v2935
      %v2937 = vpop.f32.mrf.mxu0
      %2938 = vmatprep.mubr.f32.mxu0 0.0
      %2939 = vmatmul.mubr.f32.gmra.mxu0 %v2746
      %v2940 = vpop.f32.mrf.mxu0
      %v2941 = vadd.f32 0.0, %v2940
      %v2942 = vpop.f32.mrf.mxu0
      %2943 = vmatprep.mubr.f32.mxu0 0.0
      %2944 = vmatmul.mubr.f32.gmra.mxu0 %v2749
      %v2945 = vpop.f32.mrf.mxu0
      %v2946 = vadd.f32 0.0, %v2945
      %v2947 = vpop.f32.mrf.mxu0
      %2948 = vmatprep.mubr.f32.mxu0 0.0
      %2949 = vmatmul.mubr.f32.gmra.mxu0 %v2752
      %v2950 = vpop.f32.mrf.mxu0
      %v2951 = vadd.f32 0.0, %v2950
      %v2952 = vpop.f32.mrf.mxu0
      %2953 = vmatprep.mubr.f32.mxu0 0.0
      %2954 = vmatmul.mubr.f32.gmra.mxu0 %v2755
      %v2955 = vpop.f32.mrf.mxu0
      %v2956 = vadd.f32 0.0, %v2955
      %v2957 = vpop.f32.mrf.mxu0
      %2958 = vmatprep.mubr.f32.mxu0 0.0
      %2959 = vmatmul.mubr.f32.gmra.mxu0 %v2758
      %v2960 = vpop.f32.mrf.mxu0
      %v2961 = vadd.f32 0.0, %v2960
      %v2962 = vpop.f32.mrf.mxu0
      %2963 = vmatprep.mubr.f32.mxu0 0.0
      %2964 = vmatmul.mubr.f32.gmra.mxu0 %v2761
      %v2965 = vpop.f32.mrf.mxu0
      %v2966 = vadd.f32 0.0, %v2965
      %v2967 = vpop.f32.mrf.mxu0
      %2968 = vmatprep.mubr.f32.mxu0 0.0
      %2969 = vmatmul.mubr.f32.gmra.mxu0 %v2764
      %v2970 = vpop.f32.mrf.mxu0
      %v2971 = vadd.f32 0.0, %v2970
      %v2972 = vpop.f32.mrf.mxu0
      %2973 = vmatprep.mubr.f32.mxu0 0.0
      %2974 = vmatmul.mubr.f32.gmra.mxu0 %v2767
      %v2975 = vpop.f32.mrf.mxu0
      %v2976 = vadd.f32 0.0, %v2975
      %v2977 = vpop.f32.mrf.mxu0
      %2978 = vmatprep.mubr.f32.mxu0 0.0
      %2979 = vmatmul.mubr.f32.gmra.mxu0 %v2770
      %v2980 = vpop.f32.mrf.mxu0
      %v2981 = vadd.f32 0.0, %v2980
      %v2982 = vpop.f32.mrf.mxu0
      %2983 = vmatprep.mubr.f32.mxu0 0.0
      %2984 = vmatmul.mubr.f32.gmra.mxu0 %v2773
      %v2985 = vpop.f32.mrf.mxu0
      %v2986 = vadd.f32 0.0, %v2985
      %v2987 = vpop.f32.mrf.mxu0
      %2988 = vmatprep.mubr.f32.mxu0 0.0
      %2989 = vmatmul.mubr.f32.gmra.mxu0 %v2776
      %v2990 = vpop.f32.mrf.mxu0
      %v2991 = vadd.f32 0.0, %v2990
      %v2992 = vpop.f32.mrf.mxu0
      %2993 = vmatprep.mubr.f32.mxu0 0.0
      %2994 = vmatmul.mubr.f32.gmra.mxu0 %v2779
      %v2995 = vpop.f32.mrf.mxu0
      %v2996 = vadd.f32 0.0, %v2995
      %v2997 = vpop.f32.mrf.mxu0
      %2998 = vmatprep.mubr.f32.mxu0 0.0
      %2999 = vmatmul.mubr.f32.gmra.mxu0 %v2782
      %v3000 = vpop.f32.mrf.mxu0
      %v3001 = vadd.f32 0.0, %v3000
      %v3002 = vpop.f32.mrf.mxu0
      %3003 = vmatprep.mubr.f32.mxu0 0.0
      %3004 = vmatmul.mubr.f32.gmra.mxu0 %v2785
      %v3005 = vpop.f32.mrf.mxu0
      %v3006 = vadd.f32 0.0, %v3005
      %v3007 = vpop.f32.mrf.mxu0
      %3008 = vmatprep.mubr.f32.mxu0 0.0
      %3009 = vmatmul.mubr.f32.gmra.mxu0 %v2788
      %v3010 = vpop.f32.mrf.mxu0
      %v3011 = vadd.f32 0.0, %v3010
      %v3012 = vpop.f32.mrf.mxu0
      %3013 = vmatprep.mubr.f32.mxu0 0.0
      %3014 = vmatmul.mubr.f32.gmra.mxu0 %v2791
      %v3015 = vpop.f32.mrf.mxu0
      %v3016 = vadd.f32 0.0, %v3015
      %v3017 = vpop.f32.mrf.mxu0
      %3018 = vmatprep.mubr.f32.mxu0 0.0
      %3019 = vmatmul.mubr.f32.gmra.mxu0 %v2794
      %v3020 = vpop.f32.mrf.mxu0
      %v3021 = vadd.f32 0.0, %v3020
      %v3022 = vpop.f32.mrf.mxu0
      %3023 = vmatprep.mubr.f32.mxu0 0.0
      %3024 = vmatmul.mubr.f32.gmra.mxu0 %v2797
      %v3025 = vpop.f32.mrf.mxu0
      %v3026 = vadd.f32 0.0, %v3025
      %v3027 = vpop.f32.mrf.mxu0
      %3028 = vmatprep.mubr.f32.mxu0 0.0
      %3029 = vmatmul.mubr.f32.gmra.mxu0 %v2800
      %v3030 = vpop.f32.mrf.mxu0
      %v3031 = vadd.f32 0.0, %v3030
      %v3032 = vpop.f32.mrf.mxu0
      %3033 = vmatprep.mubr.f32.mxu0 0.0
      %3034 = vmatmul.mubr.f32.gmra.mxu0 %v2803
      %v3035 = vpop.f32.mrf.mxu0
      %v3036 = vadd.f32 0.0, %v3035
      %v3037 = vpop.f32.mrf.mxu0
      %3038 = vmatprep.mubr.f32.mxu0 0.0
      %3039 = vmatmul.mubr.f32.gmra.mxu0 %v2806
      %v3040 = vpop.f32.mrf.mxu0
      %v3041 = vadd.f32 0.0, %v3040
      %v3042 = vpop.f32.mrf.mxu0
      %3043 = vmatprep.mubr.f32.mxu0 0.0
      %3044 = vmatmul.mubr.f32.gmra.mxu0 %v2809
      %v3045 = vpop.f32.mrf.mxu0
      %v3046 = vadd.f32 0.0, %v3045
      %v3047 = vpop.f32.mrf.mxu0
      %3048 = vmatprep.mubr.f32.mxu0 0.0
      %3049 = vmatmul.mubr.f32.gmra.mxu0 %v2812
      %v3050 = vpop.f32.mrf.mxu0
      %v3051 = vadd.f32 0.0, %v3050
      %v3052 = vpop.f32.mrf.mxu0
      %3053 = vmatprep.mubr.f32.mxu0 0.0
      %3054 = vmatmul.mubr.f32.gmra.mxu0 %v2815
      %v3055 = vpop.f32.mrf.mxu0
      %v3056 = vadd.f32 0.0, %v3055
      %v3057 = vpop.f32.mrf.mxu0
      %3058 = vmatprep.mubr.f32.mxu0 0.0
      %3059 = vmatmul.mubr.f32.gmra.mxu0 %v2818
      %v3060 = vpop.f32.mrf.mxu0
      %v3061 = vadd.f32 0.0, %v3060
      %v3062 = vpop.f32.mrf.mxu0
      %3063 = vmatprep.mubr.f32.mxu0 0.0
      %3064 = vmatmul.mubr.f32.gmra.mxu0 %v2821
      %v3065 = vpop.f32.mrf.mxu0
      %v3066 = vadd.f32 0.0, %v3065
      %v3067 = vpop.f32.mrf.mxu0
      %3068 = vmatprep.mubr.f32.mxu0 0.0
      %3069 = vmatmul.mubr.f32.gmra.mxu0 %v2824
      %v3070 = vpop.f32.mrf.mxu0
      %v3071 = vadd.f32 0.0, %v3070
      %v3072 = vpop.f32.mrf.mxu0
      %3073 = vdwg.mxu0
      %v3074 = vadd.f32 %v2644, %v2896
      %v3075 = vadd.f32 %v2645, %v2901
      %v3076 = vadd.f32 %v2646, %v2906
      %v3077 = vadd.f32 %v2647, %v2911
      %v3078 = vadd.f32 %v2648, %v2916
      %v3079 = vadd.f32 %v2649, %v2921
      %v3080 = vadd.f32 %v2650, %v2926
      %v3081 = vadd.f32 %v2651, %v2931
      %v3082 = vadd.f32 %v2652, %v2936
      %v3083 = vadd.f32 %v2653, %v2941
      %v3084 = vadd.f32 %v2654, %v2946
      %v3085 = vadd.f32 %v2655, %v2951
      %v3086 = vadd.f32 %v2656, %v2956
      %v3087 = vadd.f32 %v2657, %v2961
      %v3088 = vadd.f32 %v2658, %v2966
      %v3089 = vadd.f32 %v2659, %v2971
      %v3090 = vadd.f32 %v2660, %v2976
      %v3091 = vadd.f32 %v2661, %v2981
      %v3092 = vadd.f32 %v2662, %v2986
      %v3093 = vadd.f32 %v2663, %v2991
      %v3094 = vadd.f32 %v2664, %v2996
      %v3095 = vadd.f32 %v2665, %v3001
      %v3096 = vadd.f32 %v2666, %v3006
      %v3097 = vadd.f32 %v2667, %v3011
      %v3098 = vadd.f32 %v2668, %v3016
      %v3099 = vadd.f32 %v2669, %v3021
      %v3100 = vadd.f32 %v2670, %v3026
      %v3101 = vadd.f32 %v2671, %v3031
      %v3102 = vadd.f32 %v2672, %v3036
      %v3103 = vadd.f32 %v2673, %v3041
      %v3104 = vadd.f32 %v2674, %v3046
      %v3105 = vadd.f32 %v2675, %v3051
      %v3106 = vadd.f32 %v2676, %v3056
      %v3107 = vadd.f32 %v2677, %v3061
      %v3108 = vadd.f32 %v2678, %v3066
      %v3109 = vadd.f32 %v2679, %v3071
      %v3110 = vld [vmem:[%s165 + $0x25] sm:$0xff]
      %v3111 = vld [vmem:[%s165 + $0x2d] sm:$0xff]
      %v3112 = vld [vmem:[%s165 + $0x35] sm:$0xff]
      %v3113 = vld [vmem:[%s165 + $0x3d] sm:$0xff]
      %v3114 = vld [vmem:[%s165 + $0x45] sm:$0xff]
      %v3115 = vld [vmem:[%s165 + $0x4d] sm:$0xff]
      %v3116 = vld [vmem:[%s165 + $0x55] sm:$0xff]
      %v3117 = vld [vmem:[%s165 + $0x5d] sm:$0xff]
      %v3118 = vld [vmem:[%s165 + $0x65] sm:$0xff]
      %v3119 = vld [vmem:[%s165 + $0x6d] sm:$0xff]
      %v3120 = vld [vmem:[%s165 + $0x75] sm:$0xff]
      %v3121 = vld [vmem:[%s165 + $0x7d] sm:$0xff]
      %v3122 = vld [vmem:[%s165 + $0x85] sm:$0xff]
      %v3123 = vld [vmem:[%s165 + $0x8d] sm:$0xff]
      %v3124 = vld [vmem:[%s165 + $0x95] sm:$0xff]
      %v3125 = vld [vmem:[%s165 + $0x9d] sm:$0xff]
      %v3126 = vld [vmem:[%s165 + $0xa5] sm:$0xff]
      %v3127 = vld [vmem:[%s165 + $0xad] sm:$0xff]
      %v3128 = vld [vmem:[%s165 + $0xb5] sm:$0xff]
      %v3129 = vld [vmem:[%s165 + $0xbd] sm:$0xff]
      %v3130 = vld [vmem:[%s165 + $0xc5] sm:$0xff]
      %v3131 = vld [vmem:[%s165 + $0xcd] sm:$0xff]
      %v3132 = vld [vmem:[%s165 + $0xd5] sm:$0xff]
      %v3133 = vld [vmem:[%s165 + $0xdd] sm:$0xff]
      %v3134 = vld [vmem:[%s165 + $0xe5] sm:$0xff]
      %v3135 = vld [vmem:[%s165 + $0xed] sm:$0xff]
      %v3136 = vld [vmem:[%s165 + $0xf5] sm:$0xff]
      %v3137 = vld [vmem:[%s165 + $0xfd] sm:$0xff]
      %v3138 = vld [vmem:[%s165 + $0x105] sm:$0xff]
      %v3139 = vld [vmem:[%s165 + $0x10d] sm:$0xff]
      %v3140 = vld [vmem:[%s165 + $0x115] sm:$0xff]
      %v3141 = vld [vmem:[%s165 + $0x11d] sm:$0xff]
      %v3142 = vld [vmem:[%s165 + $0x125] sm:$0xff]
      %v3143 = vld [vmem:[%s165 + $0x12d] sm:$0xff]
      %v3144 = vld [vmem:[%s165 + $0x135] sm:$0xff]
      %v3145 = vld [vmem:[%s165 + $0x13d] sm:$0xff]
      %s3146 = scalar_lea.vmem %s1, 28
      %v3147 = vld [vmem:[%s3146] sm:$0xf]
      %v3149 = vsel %vm246, %v3110, 0
      %v3152 = vsel %vm246, %v3111, 0
      %v3155 = vsel %vm246, %v3112, 0
      %v3158 = vsel %vm246, %v3113, 0
      %v3161 = vsel %vm246, %v3114, 0
      %v3164 = vsel %vm246, %v3115, 0
      %v3167 = vsel %vm246, %v3116, 0
      %v3170 = vsel %vm246, %v3117, 0
      %v3173 = vsel %vm246, %v3118, 0
      %v3176 = vsel %vm246, %v3119, 0
      %v3179 = vsel %vm246, %v3120, 0
      %v3182 = vsel %vm246, %v3121, 0
      %v3185 = vsel %vm246, %v3122, 0
      %v3188 = vsel %vm246, %v3123, 0
      %v3191 = vsel %vm246, %v3124, 0
      %v3194 = vsel %vm246, %v3125, 0
      %v3197 = vsel %vm246, %v3126, 0
      %v3200 = vsel %vm246, %v3127, 0
      %v3203 = vsel %vm246, %v3128, 0
      %v3206 = vsel %vm246, %v3129, 0
      %v3209 = vsel %vm246, %v3130, 0
      %v3212 = vsel %vm246, %v3131, 0
      %v3215 = vsel %vm246, %v3132, 0
      %v3218 = vsel %vm246, %v3133, 0
      %v3221 = vsel %vm246, %v3134, 0
      %v3224 = vsel %vm246, %v3135, 0
      %v3227 = vsel %vm246, %v3136, 0
      %v3230 = vsel %vm246, %v3137, 0
      %v3233 = vsel %vm246, %v3138, 0
      %v3236 = vsel %vm246, %v3139, 0
      %v3239 = vsel %vm246, %v3140, 0
      %v3242 = vsel %vm246, %v3141, 0
      %v3245 = vsel %vm246, %v3142, 0
      %v3248 = vsel %vm246, %v3143, 0
      %v3251 = vsel %vm246, %v3144, 0
      %v3254 = vsel %vm246, %v3145, 0
      %v3257 = vsel %vm355, %v3147, 0
      %3259 = vmatprep.subr.mxu0 0.0
      %3260 = vmatpush1.msra.mxu0 0.0
      %3261 = vmatprep.subr.mxu0 0.0
      %3262 = vmatpush1.msra.mxu0 0.0
      %3263 = vmatprep.subr.mxu0 0.0
      %3264 = vmatpush1.msra.mxu0 0.0
      %3265 = vmatprep.subr.mxu0 0.0
      %3266 = vmatpush1.msra.mxu0 0.0
      %3267 = vmatprep.subr.mxu0 0.0
      %3268 = vmatpush1.msra.mxu0 0.0
      %3269 = vmatprep.subr.mxu0 0.0
      %3270 = vmatpush1.msra.mxu0 0.0
      %3271 = vmatprep.subr.mxu0 0.0
      %3272 = vmatpush1.msra.mxu0 0.0
      %3273 = vmatprep.subr.mxu0 0.0
      %3274 = vmatpush1.msra.mxu0 0.0
      %3275 = vmatprep.subr.mxu0 0.0
      %3276 = vmatpush1.msra.mxu0 0.0
      %3277 = vmatprep.subr.mxu0 0.0
      %3278 = vmatpush1.msra.mxu0 0.0
      %3279 = vmatprep.subr.mxu0 0.0
      %3280 = vmatpush1.msra.mxu0 0.0
      %3281 = vmatprep.subr.mxu0 0.0
      %3282 = vmatpush1.msra.mxu0 0.0
      %3283 = vmatprep.subr.mxu0 0.0
      %3284 = vmatpush1.msra.mxu0 0.0
      %3285 = vmatprep.subr.mxu0 0.0
      %3286 = vmatpush1.msra.mxu0 0.0
      %3287 = vmatprep.subr.mxu0 0.0
      %3288 = vmatpush1.msra.mxu0 0.0
      %3289 = vmatprep.subr.mxu0 0.0
      %3290 = vmatpush1.msra.mxu0 %v3257
      %3291 = vmatprep.subr.mxu0 0.0
      %3292 = vmatpush2.msra.mxu0 0.0
      %3293 = vmatprep.subr.mxu0 0.0
      %3294 = vmatpush2.msra.mxu0 0.0
      %3295 = vmatprep.subr.mxu0 0.0
      %3296 = vmatpush2.msra.mxu0 0.0
      %3297 = vmatprep.subr.mxu0 0.0
      %3298 = vmatpush2.msra.mxu0 0.0
      %3299 = vmatprep.subr.mxu0 0.0
      %3300 = vmatpush2.msra.mxu0 0.0
      %3301 = vmatprep.subr.mxu0 0.0
      %3302 = vmatpush2.msra.mxu0 0.0
      %3303 = vmatprep.subr.mxu0 0.0
      %3304 = vmatpush2.msra.mxu0 0.0
      %3305 = vmatprep.subr.mxu0 0.0
      %3306 = vmatpush2.msra.mxu0 0.0
      %3307 = vmatprep.subr.mxu0 0.0
      %3308 = vmatpush2.msra.mxu0 0.0
      %3309 = vmatprep.subr.mxu0 0.0
      %3310 = vmatpush2.msra.mxu0 0.0
      %3311 = vmatprep.subr.mxu0 0.0
      %3312 = vmatpush2.msra.mxu0 0.0
      %3313 = vmatprep.subr.mxu0 0.0
      %3314 = vmatpush2.msra.mxu0 0.0
      %3315 = vmatprep.subr.mxu0 0.0
      %3316 = vmatpush2.msra.mxu0 0.0
      %3317 = vmatprep.subr.mxu0 0.0
      %3318 = vmatpush2.msra.mxu0 0.0
      %3319 = vmatprep.subr.mxu0 0.0
      %3320 = vmatpush2.msra.mxu0 0.0
      %3321 = vmatprep.subr.mxu0 0.0
      %3322 = vmatpush2.msra.mxu0 0.0
      %3323 = vmatprep.mubr.f32.mxu0 0.0
      %3324 = vmatmul.mubr.f32.gmra.mxu0 %v3149
      %v3325 = vpop.f32.mrf.mxu0
      %v3326 = vadd.f32 0.0, %v3325
      %v3327 = vpop.f32.mrf.mxu0
      %3328 = vmatprep.mubr.f32.mxu0 0.0
      %3329 = vmatmul.mubr.f32.gmra.mxu0 %v3152
      %v3330 = vpop.f32.mrf.mxu0
      %v3331 = vadd.f32 0.0, %v3330
      %v3332 = vpop.f32.mrf.mxu0
      %3333 = vmatprep.mubr.f32.mxu0 0.0
      %3334 = vmatmul.mubr.f32.gmra.mxu0 %v3155
      %v3335 = vpop.f32.mrf.mxu0
      %v3336 = vadd.f32 0.0, %v3335
      %v3337 = vpop.f32.mrf.mxu0
      %3338 = vmatprep.mubr.f32.mxu0 0.0
      %3339 = vmatmul.mubr.f32.gmra.mxu0 %v3158
      %v3340 = vpop.f32.mrf.mxu0
      %v3341 = vadd.f32 0.0, %v3340
      %v3342 = vpop.f32.mrf.mxu0
      %3343 = vmatprep.mubr.f32.mxu0 0.0
      %3344 = vmatmul.mubr.f32.gmra.mxu0 %v3161
      %v3345 = vpop.f32.mrf.mxu0
      %v3346 = vadd.f32 0.0, %v3345
      %v3347 = vpop.f32.mrf.mxu0
      %3348 = vmatprep.mubr.f32.mxu0 0.0
      %3349 = vmatmul.mubr.f32.gmra.mxu0 %v3164
      %v3350 = vpop.f32.mrf.mxu0
      %v3351 = vadd.f32 0.0, %v3350
      %v3352 = vpop.f32.mrf.mxu0
      %3353 = vmatprep.mubr.f32.mxu0 0.0
      %3354 = vmatmul.mubr.f32.gmra.mxu0 %v3167
      %v3355 = vpop.f32.mrf.mxu0
      %v3356 = vadd.f32 0.0, %v3355
      %v3357 = vpop.f32.mrf.mxu0
      %3358 = vmatprep.mubr.f32.mxu0 0.0
      %3359 = vmatmul.mubr.f32.gmra.mxu0 %v3170
      %v3360 = vpop.f32.mrf.mxu0
      %v3361 = vadd.f32 0.0, %v3360
      %v3362 = vpop.f32.mrf.mxu0
      %3363 = vmatprep.mubr.f32.mxu0 0.0
      %3364 = vmatmul.mubr.f32.gmra.mxu0 %v3173
      %v3365 = vpop.f32.mrf.mxu0
      %v3366 = vadd.f32 0.0, %v3365
      %v3367 = vpop.f32.mrf.mxu0
      %3368 = vmatprep.mubr.f32.mxu0 0.0
      %3369 = vmatmul.mubr.f32.gmra.mxu0 %v3176
      %v3370 = vpop.f32.mrf.mxu0
      %v3371 = vadd.f32 0.0, %v3370
      %v3372 = vpop.f32.mrf.mxu0
      %3373 = vmatprep.mubr.f32.mxu0 0.0
      %3374 = vmatmul.mubr.f32.gmra.mxu0 %v3179
      %v3375 = vpop.f32.mrf.mxu0
      %v3376 = vadd.f32 0.0, %v3375
      %v3377 = vpop.f32.mrf.mxu0
      %3378 = vmatprep.mubr.f32.mxu0 0.0
      %3379 = vmatmul.mubr.f32.gmra.mxu0 %v3182
      %v3380 = vpop.f32.mrf.mxu0
      %v3381 = vadd.f32 0.0, %v3380
      %v3382 = vpop.f32.mrf.mxu0
      %3383 = vmatprep.mubr.f32.mxu0 0.0
      %3384 = vmatmul.mubr.f32.gmra.mxu0 %v3185
      %v3385 = vpop.f32.mrf.mxu0
      %v3386 = vadd.f32 0.0, %v3385
      %v3387 = vpop.f32.mrf.mxu0
      %3388 = vmatprep.mubr.f32.mxu0 0.0
      %3389 = vmatmul.mubr.f32.gmra.mxu0 %v3188
      %v3390 = vpop.f32.mrf.mxu0
      %v3391 = vadd.f32 0.0, %v3390
      %v3392 = vpop.f32.mrf.mxu0
      %3393 = vmatprep.mubr.f32.mxu0 0.0
      %3394 = vmatmul.mubr.f32.gmra.mxu0 %v3191
      %v3395 = vpop.f32.mrf.mxu0
      %v3396 = vadd.f32 0.0, %v3395
      %v3397 = vpop.f32.mrf.mxu0
      %3398 = vmatprep.mubr.f32.mxu0 0.0
      %3399 = vmatmul.mubr.f32.gmra.mxu0 %v3194
      %v3400 = vpop.f32.mrf.mxu0
      %v3401 = vadd.f32 0.0, %v3400
      %v3402 = vpop.f32.mrf.mxu0
      %3403 = vmatprep.mubr.f32.mxu0 0.0
      %3404 = vmatmul.mubr.f32.gmra.mxu0 %v3197
      %v3405 = vpop.f32.mrf.mxu0
      %v3406 = vadd.f32 0.0, %v3405
      %v3407 = vpop.f32.mrf.mxu0
      %3408 = vmatprep.mubr.f32.mxu0 0.0
      %3409 = vmatmul.mubr.f32.gmra.mxu0 %v3200
      %v3410 = vpop.f32.mrf.mxu0
      %v3411 = vadd.f32 0.0, %v3410
      %v3412 = vpop.f32.mrf.mxu0
      %3413 = vmatprep.mubr.f32.mxu0 0.0
      %3414 = vmatmul.mubr.f32.gmra.mxu0 %v3203
      %v3415 = vpop.f32.mrf.mxu0
      %v3416 = vadd.f32 0.0, %v3415
      %v3417 = vpop.f32.mrf.mxu0
      %3418 = vmatprep.mubr.f32.mxu0 0.0
      %3419 = vmatmul.mubr.f32.gmra.mxu0 %v3206
      %v3420 = vpop.f32.mrf.mxu0
      %v3421 = vadd.f32 0.0, %v3420
      %v3422 = vpop.f32.mrf.mxu0
      %3423 = vmatprep.mubr.f32.mxu0 0.0
      %3424 = vmatmul.mubr.f32.gmra.mxu0 %v3209
      %v3425 = vpop.f32.mrf.mxu0
      %v3426 = vadd.f32 0.0, %v3425
      %v3427 = vpop.f32.mrf.mxu0
      %3428 = vmatprep.mubr.f32.mxu0 0.0
      %3429 = vmatmul.mubr.f32.gmra.mxu0 %v3212
      %v3430 = vpop.f32.mrf.mxu0
      %v3431 = vadd.f32 0.0, %v3430
      %v3432 = vpop.f32.mrf.mxu0
      %3433 = vmatprep.mubr.f32.mxu0 0.0
      %3434 = vmatmul.mubr.f32.gmra.mxu0 %v3215
      %v3435 = vpop.f32.mrf.mxu0
      %v3436 = vadd.f32 0.0, %v3435
      %v3437 = vpop.f32.mrf.mxu0
      %3438 = vmatprep.mubr.f32.mxu0 0.0
      %3439 = vmatmul.mubr.f32.gmra.mxu0 %v3218
      %v3440 = vpop.f32.mrf.mxu0
      %v3441 = vadd.f32 0.0, %v3440
      %v3442 = vpop.f32.mrf.mxu0
      %3443 = vmatprep.mubr.f32.mxu0 0.0
      %3444 = vmatmul.mubr.f32.gmra.mxu0 %v3221
      %v3445 = vpop.f32.mrf.mxu0
      %v3446 = vadd.f32 0.0, %v3445
      %v3447 = vpop.f32.mrf.mxu0
      %3448 = vmatprep.mubr.f32.mxu0 0.0
      %3449 = vmatmul.mubr.f32.gmra.mxu0 %v3224
      %v3450 = vpop.f32.mrf.mxu0
      %v3451 = vadd.f32 0.0, %v3450
      %v3452 = vpop.f32.mrf.mxu0
      %3453 = vmatprep.mubr.f32.mxu0 0.0
      %3454 = vmatmul.mubr.f32.gmra.mxu0 %v3227
      %v3455 = vpop.f32.mrf.mxu0
      %v3456 = vadd.f32 0.0, %v3455
      %v3457 = vpop.f32.mrf.mxu0
      %3458 = vmatprep.mubr.f32.mxu0 0.0
      %3459 = vmatmul.mubr.f32.gmra.mxu0 %v3230
      %v3460 = vpop.f32.mrf.mxu0
      %v3461 = vadd.f32 0.0, %v3460
      %v3462 = vpop.f32.mrf.mxu0
      %3463 = vmatprep.mubr.f32.mxu0 0.0
      %3464 = vmatmul.mubr.f32.gmra.mxu0 %v3233
      %v3465 = vpop.f32.mrf.mxu0
      %v3466 = vadd.f32 0.0, %v3465
      %v3467 = vpop.f32.mrf.mxu0
      %3468 = vmatprep.mubr.f32.mxu0 0.0
      %3469 = vmatmul.mubr.f32.gmra.mxu0 %v3236
      %v3470 = vpop.f32.mrf.mxu0
      %v3471 = vadd.f32 0.0, %v3470
      %v3472 = vpop.f32.mrf.mxu0
      %3473 = vmatprep.mubr.f32.mxu0 0.0
      %3474 = vmatmul.mubr.f32.gmra.mxu0 %v3239
      %v3475 = vpop.f32.mrf.mxu0
      %v3476 = vadd.f32 0.0, %v3475
      %v3477 = vpop.f32.mrf.mxu0
      %3478 = vmatprep.mubr.f32.mxu0 0.0
      %3479 = vmatmul.mubr.f32.gmra.mxu0 %v3242
      %v3480 = vpop.f32.mrf.mxu0
      %v3481 = vadd.f32 0.0, %v3480
      %v3482 = vpop.f32.mrf.mxu0
      %3483 = vmatprep.mubr.f32.mxu0 0.0
      %3484 = vmatmul.mubr.f32.gmra.mxu0 %v3245
      %v3485 = vpop.f32.mrf.mxu0
      %v3486 = vadd.f32 0.0, %v3485
      %v3487 = vpop.f32.mrf.mxu0
      %3488 = vmatprep.mubr.f32.mxu0 0.0
      %3489 = vmatmul.mubr.f32.gmra.mxu0 %v3248
      %v3490 = vpop.f32.mrf.mxu0
      %v3491 = vadd.f32 0.0, %v3490
      %v3492 = vpop.f32.mrf.mxu0
      %3493 = vmatprep.mubr.f32.mxu0 0.0
      %3494 = vmatmul.mubr.f32.gmra.mxu0 %v3251
      %v3495 = vpop.f32.mrf.mxu0
      %v3496 = vadd.f32 0.0, %v3495
      %v3497 = vpop.f32.mrf.mxu0
      %3498 = vmatprep.mubr.f32.mxu0 0.0
      %3499 = vmatmul.mubr.f32.gmra.mxu0 %v3254
      %v3500 = vpop.f32.mrf.mxu0
      %v3501 = vadd.f32 0.0, %v3500
      %v3502 = vpop.f32.mrf.mxu0
      %3503 = vdwg.mxu0
      %v3504 = vadd.f32 %v3074, %v3326
      %v3505 = vadd.f32 %v3075, %v3331
      %v3506 = vadd.f32 %v3076, %v3336
      %v3507 = vadd.f32 %v3077, %v3341
      %v3508 = vadd.f32 %v3078, %v3346
      %v3509 = vadd.f32 %v3079, %v3351
      %v3510 = vadd.f32 %v3080, %v3356
      %v3511 = vadd.f32 %v3081, %v3361
      %v3512 = vadd.f32 %v3082, %v3366
      %v3513 = vadd.f32 %v3083, %v3371
      %v3514 = vadd.f32 %v3084, %v3376
      %v3515 = vadd.f32 %v3085, %v3381
      %v3516 = vadd.f32 %v3086, %v3386
      %v3517 = vadd.f32 %v3087, %v3391
      %v3518 = vadd.f32 %v3088, %v3396
      %v3519 = vadd.f32 %v3089, %v3401
      %v3520 = vadd.f32 %v3090, %v3406
      %v3521 = vadd.f32 %v3091, %v3411
      %v3522 = vadd.f32 %v3092, %v3416
      %v3523 = vadd.f32 %v3093, %v3421
      %v3524 = vadd.f32 %v3094, %v3426
      %v3525 = vadd.f32 %v3095, %v3431
      %v3526 = vadd.f32 %v3096, %v3436
      %v3527 = vadd.f32 %v3097, %v3441
      %v3528 = vadd.f32 %v3098, %v3446
      %v3529 = vadd.f32 %v3099, %v3451
      %v3530 = vadd.f32 %v3100, %v3456
      %v3531 = vadd.f32 %v3101, %v3461
      %v3532 = vadd.f32 %v3102, %v3466
      %v3533 = vadd.f32 %v3103, %v3471
      %v3534 = vadd.f32 %v3104, %v3476
      %v3535 = vadd.f32 %v3105, %v3481
      %v3536 = vadd.f32 %v3106, %v3486
      %v3537 = vadd.f32 %v3107, %v3491
      %v3538 = vadd.f32 %v3108, %v3496
      %v3539 = vadd.f32 %v3109, %v3501
      %v3540 = vld [vmem:[%s165 + $0x26] sm:$0xff]
      %v3541 = vld [vmem:[%s165 + $0x2e] sm:$0xff]
      %v3542 = vld [vmem:[%s165 + $0x36] sm:$0xff]
      %v3543 = vld [vmem:[%s165 + $0x3e] sm:$0xff]
      %v3544 = vld [vmem:[%s165 + $0x46] sm:$0xff]
      %v3545 = vld [vmem:[%s165 + $0x4e] sm:$0xff]
      %v3546 = vld [vmem:[%s165 + $0x56] sm:$0xff]
      %v3547 = vld [vmem:[%s165 + $0x5e] sm:$0xff]
      %v3548 = vld [vmem:[%s165 + $0x66] sm:$0xff]
      %v3549 = vld [vmem:[%s165 + $0x6e] sm:$0xff]
      %v3550 = vld [vmem:[%s165 + $0x76] sm:$0xff]
      %v3551 = vld [vmem:[%s165 + $0x7e] sm:$0xff]
      %v3552 = vld [vmem:[%s165 + $0x86] sm:$0xff]
      %v3553 = vld [vmem:[%s165 + $0x8e] sm:$0xff]
      %v3554 = vld [vmem:[%s165 + $0x96] sm:$0xff]
      %v3555 = vld [vmem:[%s165 + $0x9e] sm:$0xff]
      %v3556 = vld [vmem:[%s165 + $0xa6] sm:$0xff]
      %v3557 = vld [vmem:[%s165 + $0xae] sm:$0xff]
      %v3558 = vld [vmem:[%s165 + $0xb6] sm:$0xff]
      %v3559 = vld [vmem:[%s165 + $0xbe] sm:$0xff]
      %v3560 = vld [vmem:[%s165 + $0xc6] sm:$0xff]
      %v3561 = vld [vmem:[%s165 + $0xce] sm:$0xff]
      %v3562 = vld [vmem:[%s165 + $0xd6] sm:$0xff]
      %v3563 = vld [vmem:[%s165 + $0xde] sm:$0xff]
      %v3564 = vld [vmem:[%s165 + $0xe6] sm:$0xff]
      %v3565 = vld [vmem:[%s165 + $0xee] sm:$0xff]
      %v3566 = vld [vmem:[%s165 + $0xf6] sm:$0xff]
      %v3567 = vld [vmem:[%s165 + $0xfe] sm:$0xff]
      %v3568 = vld [vmem:[%s165 + $0x106] sm:$0xff]
      %v3569 = vld [vmem:[%s165 + $0x10e] sm:$0xff]
      %v3570 = vld [vmem:[%s165 + $0x116] sm:$0xff]
      %v3571 = vld [vmem:[%s165 + $0x11e] sm:$0xff]
      %v3572 = vld [vmem:[%s165 + $0x126] sm:$0xff]
      %v3573 = vld [vmem:[%s165 + $0x12e] sm:$0xff]
      %v3574 = vld [vmem:[%s165 + $0x136] sm:$0xff]
      %v3575 = vld [vmem:[%s165 + $0x13e] sm:$0xff]
      %s3576 = scalar_lea.vmem %s1, 32
      %v3577 = vld [vmem:[%s3576] sm:$0xf]
      %v3579 = vsel %vm246, %v3540, 0
      %v3582 = vsel %vm246, %v3541, 0
      %v3585 = vsel %vm246, %v3542, 0
      %v3588 = vsel %vm246, %v3543, 0
      %v3591 = vsel %vm246, %v3544, 0
      %v3594 = vsel %vm246, %v3545, 0
      %v3597 = vsel %vm246, %v3546, 0
      %v3600 = vsel %vm246, %v3547, 0
      %v3603 = vsel %vm246, %v3548, 0
      %v3606 = vsel %vm246, %v3549, 0
      %v3609 = vsel %vm246, %v3550, 0
      %v3612 = vsel %vm246, %v3551, 0
      %v3615 = vsel %vm246, %v3552, 0
      %v3618 = vsel %vm246, %v3553, 0
      %v3621 = vsel %vm246, %v3554, 0
      %v3624 = vsel %vm246, %v3555, 0
      %v3627 = vsel %vm246, %v3556, 0
      %v3630 = vsel %vm246, %v3557, 0
      %v3633 = vsel %vm246, %v3558, 0
      %v3636 = vsel %vm246, %v3559, 0
      %v3639 = vsel %vm246, %v3560, 0
      %v3642 = vsel %vm246, %v3561, 0
      %v3645 = vsel %vm246, %v3562, 0
      %v3648 = vsel %vm246, %v3563, 0
      %v3651 = vsel %vm246, %v3564, 0
      %v3654 = vsel %vm246, %v3565, 0
      %v3657 = vsel %vm246, %v3566, 0
      %v3660 = vsel %vm246, %v3567, 0
      %v3663 = vsel %vm246, %v3568, 0
      %v3666 = vsel %vm246, %v3569, 0
      %v3669 = vsel %vm246, %v3570, 0
      %v3672 = vsel %vm246, %v3571, 0
      %v3675 = vsel %vm246, %v3572, 0
      %v3678 = vsel %vm246, %v3573, 0
      %v3681 = vsel %vm246, %v3574, 0
      %v3684 = vsel %vm246, %v3575, 0
      %v3687 = vsel %vm355, %v3577, 0
      %3689 = vmatprep.subr.mxu0 0.0
      %3690 = vmatpush1.msra.mxu0 0.0
      %3691 = vmatprep.subr.mxu0 0.0
      %3692 = vmatpush1.msra.mxu0 0.0
      %3693 = vmatprep.subr.mxu0 0.0
      %3694 = vmatpush1.msra.mxu0 0.0
      %3695 = vmatprep.subr.mxu0 0.0
      %3696 = vmatpush1.msra.mxu0 0.0
      %3697 = vmatprep.subr.mxu0 0.0
      %3698 = vmatpush1.msra.mxu0 0.0
      %3699 = vmatprep.subr.mxu0 0.0
      %3700 = vmatpush1.msra.mxu0 0.0
      %3701 = vmatprep.subr.mxu0 0.0
      %3702 = vmatpush1.msra.mxu0 0.0
      %3703 = vmatprep.subr.mxu0 0.0
      %3704 = vmatpush1.msra.mxu0 0.0
      %3705 = vmatprep.subr.mxu0 0.0
      %3706 = vmatpush1.msra.mxu0 0.0
      %3707 = vmatprep.subr.mxu0 0.0
      %3708 = vmatpush1.msra.mxu0 0.0
      %3709 = vmatprep.subr.mxu0 0.0
      %3710 = vmatpush1.msra.mxu0 0.0
      %3711 = vmatprep.subr.mxu0 0.0
      %3712 = vmatpush1.msra.mxu0 0.0
      %3713 = vmatprep.subr.mxu0 0.0
      %3714 = vmatpush1.msra.mxu0 0.0
      %3715 = vmatprep.subr.mxu0 0.0
      %3716 = vmatpush1.msra.mxu0 0.0
      %3717 = vmatprep.subr.mxu0 0.0
      %3718 = vmatpush1.msra.mxu0 0.0
      %3719 = vmatprep.subr.mxu0 0.0
      %3720 = vmatpush1.msra.mxu0 %v3687
      %3721 = vmatprep.subr.mxu0 0.0
      %3722 = vmatpush2.msra.mxu0 0.0
      %3723 = vmatprep.subr.mxu0 0.0
      %3724 = vmatpush2.msra.mxu0 0.0
      %3725 = vmatprep.subr.mxu0 0.0
      %3726 = vmatpush2.msra.mxu0 0.0
      %3727 = vmatprep.subr.mxu0 0.0
      %3728 = vmatpush2.msra.mxu0 0.0
      %3729 = vmatprep.subr.mxu0 0.0
      %3730 = vmatpush2.msra.mxu0 0.0
      %3731 = vmatprep.subr.mxu0 0.0
      %3732 = vmatpush2.msra.mxu0 0.0
      %3733 = vmatprep.subr.mxu0 0.0
      %3734 = vmatpush2.msra.mxu0 0.0
      %3735 = vmatprep.subr.mxu0 0.0
      %3736 = vmatpush2.msra.mxu0 0.0
      %3737 = vmatprep.subr.mxu0 0.0
      %3738 = vmatpush2.msra.mxu0 0.0
      %3739 = vmatprep.subr.mxu0 0.0
      %3740 = vmatpush2.msra.mxu0 0.0
      %3741 = vmatprep.subr.mxu0 0.0
      %3742 = vmatpush2.msra.mxu0 0.0
      %3743 = vmatprep.subr.mxu0 0.0
      %3744 = vmatpush2.msra.mxu0 0.0
      %3745 = vmatprep.subr.mxu0 0.0
      %3746 = vmatpush2.msra.mxu0 0.0
      %3747 = vmatprep.subr.mxu0 0.0
      %3748 = vmatpush2.msra.mxu0 0.0
      %3749 = vmatprep.subr.mxu0 0.0
      %3750 = vmatpush2.msra.mxu0 0.0
      %3751 = vmatprep.subr.mxu0 0.0
      %3752 = vmatpush2.msra.mxu0 0.0
      %3753 = vmatprep.mubr.f32.mxu0 0.0
      %3754 = vmatmul.mubr.f32.gmra.mxu0 %v3579
      %v3755 = vpop.f32.mrf.mxu0
      %v3756 = vadd.f32 0.0, %v3755
      %v3757 = vpop.f32.mrf.mxu0
      %3758 = vmatprep.mubr.f32.mxu0 0.0
      %3759 = vmatmul.mubr.f32.gmra.mxu0 %v3582
      %v3760 = vpop.f32.mrf.mxu0
      %v3761 = vadd.f32 0.0, %v3760
      %v3762 = vpop.f32.mrf.mxu0
      %3763 = vmatprep.mubr.f32.mxu0 0.0
      %3764 = vmatmul.mubr.f32.gmra.mxu0 %v3585
      %v3765 = vpop.f32.mrf.mxu0
      %v3766 = vadd.f32 0.0, %v3765
      %v3767 = vpop.f32.mrf.mxu0
      %3768 = vmatprep.mubr.f32.mxu0 0.0
      %3769 = vmatmul.mubr.f32.gmra.mxu0 %v3588
      %v3770 = vpop.f32.mrf.mxu0
      %v3771 = vadd.f32 0.0, %v3770
      %v3772 = vpop.f32.mrf.mxu0
      %3773 = vmatprep.mubr.f32.mxu0 0.0
      %3774 = vmatmul.mubr.f32.gmra.mxu0 %v3591
      %v3775 = vpop.f32.mrf.mxu0
      %v3776 = vadd.f32 0.0, %v3775
      %v3777 = vpop.f32.mrf.mxu0
      %3778 = vmatprep.mubr.f32.mxu0 0.0
      %3779 = vmatmul.mubr.f32.gmra.mxu0 %v3594
      %v3780 = vpop.f32.mrf.mxu0
      %v3781 = vadd.f32 0.0, %v3780
      %v3782 = vpop.f32.mrf.mxu0
      %3783 = vmatprep.mubr.f32.mxu0 0.0
      %3784 = vmatmul.mubr.f32.gmra.mxu0 %v3597
      %v3785 = vpop.f32.mrf.mxu0
      %v3786 = vadd.f32 0.0, %v3785
      %v3787 = vpop.f32.mrf.mxu0
      %3788 = vmatprep.mubr.f32.mxu0 0.0
      %3789 = vmatmul.mubr.f32.gmra.mxu0 %v3600
      %v3790 = vpop.f32.mrf.mxu0
      %v3791 = vadd.f32 0.0, %v3790
      %v3792 = vpop.f32.mrf.mxu0
      %3793 = vmatprep.mubr.f32.mxu0 0.0
      %3794 = vmatmul.mubr.f32.gmra.mxu0 %v3603
      %v3795 = vpop.f32.mrf.mxu0
      %v3796 = vadd.f32 0.0, %v3795
      %v3797 = vpop.f32.mrf.mxu0
      %3798 = vmatprep.mubr.f32.mxu0 0.0
      %3799 = vmatmul.mubr.f32.gmra.mxu0 %v3606
      %v3800 = vpop.f32.mrf.mxu0
      %v3801 = vadd.f32 0.0, %v3800
      %v3802 = vpop.f32.mrf.mxu0
      %3803 = vmatprep.mubr.f32.mxu0 0.0
      %3804 = vmatmul.mubr.f32.gmra.mxu0 %v3609
      %v3805 = vpop.f32.mrf.mxu0
      %v3806 = vadd.f32 0.0, %v3805
      %v3807 = vpop.f32.mrf.mxu0
      %3808 = vmatprep.mubr.f32.mxu0 0.0
      %3809 = vmatmul.mubr.f32.gmra.mxu0 %v3612
      %v3810 = vpop.f32.mrf.mxu0
      %v3811 = vadd.f32 0.0, %v3810
      %v3812 = vpop.f32.mrf.mxu0
      %3813 = vmatprep.mubr.f32.mxu0 0.0
      %3814 = vmatmul.mubr.f32.gmra.mxu0 %v3615
      %v3815 = vpop.f32.mrf.mxu0
      %v3816 = vadd.f32 0.0, %v3815
      %v3817 = vpop.f32.mrf.mxu0
      %3818 = vmatprep.mubr.f32.mxu0 0.0
      %3819 = vmatmul.mubr.f32.gmra.mxu0 %v3618
      %v3820 = vpop.f32.mrf.mxu0
      %v3821 = vadd.f32 0.0, %v3820
      %v3822 = vpop.f32.mrf.mxu0
      %3823 = vmatprep.mubr.f32.mxu0 0.0
      %3824 = vmatmul.mubr.f32.gmra.mxu0 %v3621
      %v3825 = vpop.f32.mrf.mxu0
      %v3826 = vadd.f32 0.0, %v3825
      %v3827 = vpop.f32.mrf.mxu0
      %3828 = vmatprep.mubr.f32.mxu0 0.0
      %3829 = vmatmul.mubr.f32.gmra.mxu0 %v3624
      %v3830 = vpop.f32.mrf.mxu0
      %v3831 = vadd.f32 0.0, %v3830
      %v3832 = vpop.f32.mrf.mxu0
      %3833 = vmatprep.mubr.f32.mxu0 0.0
      %3834 = vmatmul.mubr.f32.gmra.mxu0 %v3627
      %v3835 = vpop.f32.mrf.mxu0
      %v3836 = vadd.f32 0.0, %v3835
      %v3837 = vpop.f32.mrf.mxu0
      %3838 = vmatprep.mubr.f32.mxu0 0.0
      %3839 = vmatmul.mubr.f32.gmra.mxu0 %v3630
      %v3840 = vpop.f32.mrf.mxu0
      %v3841 = vadd.f32 0.0, %v3840
      %v3842 = vpop.f32.mrf.mxu0
      %3843 = vmatprep.mubr.f32.mxu0 0.0
      %3844 = vmatmul.mubr.f32.gmra.mxu0 %v3633
      %v3845 = vpop.f32.mrf.mxu0
      %v3846 = vadd.f32 0.0, %v3845
      %v3847 = vpop.f32.mrf.mxu0
      %3848 = vmatprep.mubr.f32.mxu0 0.0
      %3849 = vmatmul.mubr.f32.gmra.mxu0 %v3636
      %v3850 = vpop.f32.mrf.mxu0
      %v3851 = vadd.f32 0.0, %v3850
      %v3852 = vpop.f32.mrf.mxu0
      %3853 = vmatprep.mubr.f32.mxu0 0.0
      %3854 = vmatmul.mubr.f32.gmra.mxu0 %v3639
      %v3855 = vpop.f32.mrf.mxu0
      %v3856 = vadd.f32 0.0, %v3855
      %v3857 = vpop.f32.mrf.mxu0
      %3858 = vmatprep.mubr.f32.mxu0 0.0
      %3859 = vmatmul.mubr.f32.gmra.mxu0 %v3642
      %v3860 = vpop.f32.mrf.mxu0
      %v3861 = vadd.f32 0.0, %v3860
      %v3862 = vpop.f32.mrf.mxu0
      %3863 = vmatprep.mubr.f32.mxu0 0.0
      %3864 = vmatmul.mubr.f32.gmra.mxu0 %v3645
      %v3865 = vpop.f32.mrf.mxu0
      %v3866 = vadd.f32 0.0, %v3865
      %v3867 = vpop.f32.mrf.mxu0
      %3868 = vmatprep.mubr.f32.mxu0 0.0
      %3869 = vmatmul.mubr.f32.gmra.mxu0 %v3648
      %v3870 = vpop.f32.mrf.mxu0
      %v3871 = vadd.f32 0.0, %v3870
      %v3872 = vpop.f32.mrf.mxu0
      %3873 = vmatprep.mubr.f32.mxu0 0.0
      %3874 = vmatmul.mubr.f32.gmra.mxu0 %v3651
      %v3875 = vpop.f32.mrf.mxu0
      %v3876 = vadd.f32 0.0, %v3875
      %v3877 = vpop.f32.mrf.mxu0
      %3878 = vmatprep.mubr.f32.mxu0 0.0
      %3879 = vmatmul.mubr.f32.gmra.mxu0 %v3654
      %v3880 = vpop.f32.mrf.mxu0
      %v3881 = vadd.f32 0.0, %v3880
      %v3882 = vpop.f32.mrf.mxu0
      %3883 = vmatprep.mubr.f32.mxu0 0.0
      %3884 = vmatmul.mubr.f32.gmra.mxu0 %v3657
      %v3885 = vpop.f32.mrf.mxu0
      %v3886 = vadd.f32 0.0, %v3885
      %v3887 = vpop.f32.mrf.mxu0
      %3888 = vmatprep.mubr.f32.mxu0 0.0
      %3889 = vmatmul.mubr.f32.gmra.mxu0 %v3660
      %v3890 = vpop.f32.mrf.mxu0
      %v3891 = vadd.f32 0.0, %v3890
      %v3892 = vpop.f32.mrf.mxu0
      %3893 = vmatprep.mubr.f32.mxu0 0.0
      %3894 = vmatmul.mubr.f32.gmra.mxu0 %v3663
      %v3895 = vpop.f32.mrf.mxu0
      %v3896 = vadd.f32 0.0, %v3895
      %v3897 = vpop.f32.mrf.mxu0
      %3898 = vmatprep.mubr.f32.mxu0 0.0
      %3899 = vmatmul.mubr.f32.gmra.mxu0 %v3666
      %v3900 = vpop.f32.mrf.mxu0
      %v3901 = vadd.f32 0.0, %v3900
      %v3902 = vpop.f32.mrf.mxu0
      %3903 = vmatprep.mubr.f32.mxu0 0.0
      %3904 = vmatmul.mubr.f32.gmra.mxu0 %v3669
      %v3905 = vpop.f32.mrf.mxu0
      %v3906 = vadd.f32 0.0, %v3905
      %v3907 = vpop.f32.mrf.mxu0
      %3908 = vmatprep.mubr.f32.mxu0 0.0
      %3909 = vmatmul.mubr.f32.gmra.mxu0 %v3672
      %v3910 = vpop.f32.mrf.mxu0
      %v3911 = vadd.f32 0.0, %v3910
      %v3912 = vpop.f32.mrf.mxu0
      %3913 = vmatprep.mubr.f32.mxu0 0.0
      %3914 = vmatmul.mubr.f32.gmra.mxu0 %v3675
      %v3915 = vpop.f32.mrf.mxu0
      %v3916 = vadd.f32 0.0, %v3915
      %v3917 = vpop.f32.mrf.mxu0
      %3918 = vmatprep.mubr.f32.mxu0 0.0
      %3919 = vmatmul.mubr.f32.gmra.mxu0 %v3678
      %v3920 = vpop.f32.mrf.mxu0
      %v3921 = vadd.f32 0.0, %v3920
      %v3922 = vpop.f32.mrf.mxu0
      %3923 = vmatprep.mubr.f32.mxu0 0.0
      %3924 = vmatmul.mubr.f32.gmra.mxu0 %v3681
      %v3925 = vpop.f32.mrf.mxu0
      %v3926 = vadd.f32 0.0, %v3925
      %v3927 = vpop.f32.mrf.mxu0
      %3928 = vmatprep.mubr.f32.mxu0 0.0
      %3929 = vmatmul.mubr.f32.gmra.mxu0 %v3684
      %v3930 = vpop.f32.mrf.mxu0
      %v3931 = vadd.f32 0.0, %v3930
      %v3932 = vpop.f32.mrf.mxu0
      %3933 = vdwg.mxu0
      %v3934 = vadd.f32 %v3504, %v3756
      %v3935 = vadd.f32 %v3505, %v3761
      %v3936 = vadd.f32 %v3506, %v3766
      %v3937 = vadd.f32 %v3507, %v3771
      %v3938 = vadd.f32 %v3508, %v3776
      %v3939 = vadd.f32 %v3509, %v3781
      %v3940 = vadd.f32 %v3510, %v3786
      %v3941 = vadd.f32 %v3511, %v3791
      %v3942 = vadd.f32 %v3512, %v3796
      %v3943 = vadd.f32 %v3513, %v3801
      %v3944 = vadd.f32 %v3514, %v3806
      %v3945 = vadd.f32 %v3515, %v3811
      %v3946 = vadd.f32 %v3516, %v3816
      %v3947 = vadd.f32 %v3517, %v3821
      %v3948 = vadd.f32 %v3518, %v3826
      %v3949 = vadd.f32 %v3519, %v3831
      %v3950 = vadd.f32 %v3520, %v3836
      %v3951 = vadd.f32 %v3521, %v3841
      %v3952 = vadd.f32 %v3522, %v3846
      %v3953 = vadd.f32 %v3523, %v3851
      %v3954 = vadd.f32 %v3524, %v3856
      %v3955 = vadd.f32 %v3525, %v3861
      %v3956 = vadd.f32 %v3526, %v3866
      %v3957 = vadd.f32 %v3527, %v3871
      %v3958 = vadd.f32 %v3528, %v3876
      %v3959 = vadd.f32 %v3529, %v3881
      %v3960 = vadd.f32 %v3530, %v3886
      %v3961 = vadd.f32 %v3531, %v3891
      %v3962 = vadd.f32 %v3532, %v3896
      %v3963 = vadd.f32 %v3533, %v3901
      %v3964 = vadd.f32 %v3534, %v3906
      %v3965 = vadd.f32 %v3535, %v3911
      %v3966 = vadd.f32 %v3536, %v3916
      %v3967 = vadd.f32 %v3537, %v3921
      %v3968 = vadd.f32 %v3538, %v3926
      %v3969 = vadd.f32 %v3539, %v3931
      %v3970 = vld [vmem:[%s2] sm:$0x1]
      %v3972 = vlaneseq
      %v3973 = vshrl.u32 %v3972, 7
      %v3974 = vsub.s32 0, %v3973
      %v3975 = vrot.slane %v3970, %v3974
      %v3977 = vadd.f32 %v3934, %v3975
      %v3978 = vadd.f32 %v3935, %v3975
      %v3979 = vadd.f32 %v3936, %v3975
      %v3980 = vadd.f32 %v3937, %v3975
      %v3981 = vadd.f32 %v3938, %v3975
      %v3982 = vadd.f32 %v3939, %v3975
      %v3983 = vadd.f32 %v3940, %v3975
      %v3984 = vadd.f32 %v3941, %v3975
      %v3985 = vadd.f32 %v3942, %v3975
      %v3986 = vadd.f32 %v3943, %v3975
      %v3987 = vadd.f32 %v3944, %v3975
      %v3988 = vadd.f32 %v3945, %v3975
      %v3989 = vadd.f32 %v3946, %v3975
      %v3990 = vadd.f32 %v3947, %v3975
      %v3991 = vadd.f32 %v3948, %v3975
      %v3992 = vadd.f32 %v3949, %v3975
      %v3993 = vadd.f32 %v3950, %v3975
      %v3994 = vadd.f32 %v3951, %v3975
      %v3995 = vadd.f32 %v3952, %v3975
      %v3996 = vadd.f32 %v3953, %v3975
      %v3997 = vadd.f32 %v3954, %v3975
      %v3998 = vadd.f32 %v3955, %v3975
      %v3999 = vadd.f32 %v3956, %v3975
      %v4000 = vadd.f32 %v3957, %v3975
      %v4001 = vadd.f32 %v3958, %v3975
      %v4002 = vadd.f32 %v3959, %v3975
      %v4003 = vadd.f32 %v3960, %v3975
      %v4004 = vadd.f32 %v3961, %v3975
      %v4005 = vadd.f32 %v3962, %v3975
      %v4006 = vadd.f32 %v3963, %v3975
      %v4007 = vadd.f32 %v3964, %v3975
      %v4008 = vadd.f32 %v3965, %v3975
      %v4009 = vadd.f32 %v3966, %v3975
      %v4010 = vadd.f32 %v3967, %v3975
      %v4011 = vadd.f32 %v3968, %v3975
      %v4012 = vadd.f32 %v3969, %v3975
      %vm4013 = vcmp.ge.f32.partialorder %v3977, 0.0
      %vm4014 = vcmp.ge.f32.partialorder %v3978, 0.0
      %vm4015 = vcmp.ge.f32.partialorder %v3979, 0.0
      %vm4016 = vcmp.ge.f32.partialorder %v3980, 0.0
      %vm4017 = vcmp.ge.f32.partialorder %v3981, 0.0
      %vm4018 = vcmp.ge.f32.partialorder %v3982, 0.0
      %vm4019 = vcmp.ge.f32.partialorder %v3983, 0.0
      %vm4020 = vcmp.ge.f32.partialorder %v3984, 0.0
      %vm4021 = vcmp.ge.f32.partialorder %v3985, 0.0
      %vm4022 = vcmp.ge.f32.partialorder %v3986, 0.0
      %vm4023 = vcmp.ge.f32.partialorder %v3987, 0.0
      %vm4024 = vcmp.ge.f32.partialorder %v3988, 0.0
      %vm4025 = vcmp.ge.f32.partialorder %v3989, 0.0
      %vm4026 = vcmp.ge.f32.partialorder %v3990, 0.0
      %vm4027 = vcmp.ge.f32.partialorder %v3991, 0.0
      %vm4028 = vcmp.ge.f32.partialorder %v3992, 0.0
      %vm4029 = vcmp.ge.f32.partialorder %v3993, 0.0
      %vm4030 = vcmp.ge.f32.partialorder %v3994, 0.0
      %vm4031 = vcmp.ge.f32.partialorder %v3995, 0.0
      %vm4032 = vcmp.ge.f32.partialorder %v3996, 0.0
      %vm4033 = vcmp.ge.f32.partialorder %v3997, 0.0
      %vm4034 = vcmp.ge.f32.partialorder %v3998, 0.0
      %vm4035 = vcmp.ge.f32.partialorder %v3999, 0.0
      %vm4036 = vcmp.ge.f32.partialorder %v4000, 0.0
      %vm4037 = vcmp.ge.f32.partialorder %v4001, 0.0
      %vm4038 = vcmp.ge.f32.partialorder %v4002, 0.0
      %vm4039 = vcmp.ge.f32.partialorder %v4003, 0.0
      %vm4040 = vcmp.ge.f32.partialorder %v4004, 0.0
      %vm4041 = vcmp.ge.f32.partialorder %v4005, 0.0
      %vm4042 = vcmp.ge.f32.partialorder %v4006, 0.0
      %vm4043 = vcmp.ge.f32.partialorder %v4007, 0.0
      %vm4044 = vcmp.ge.f32.partialorder %v4008, 0.0
      %vm4045 = vcmp.ge.f32.partialorder %v4009, 0.0
      %vm4046 = vcmp.ge.f32.partialorder %v4010, 0.0
      %vm4047 = vcmp.ge.f32.partialorder %v4011, 0.0
      %vm4048 = vcmp.ge.f32.partialorder %v4012, 0.0
      %v4049 = vmul.f32 %v3977, 0.2
      %v4050 = vmul.f32 %v3978, 0.2
      %v4051 = vmul.f32 %v3979, 0.2
      %v4052 = vmul.f32 %v3980, 0.2
      %v4053 = vmul.f32 %v3981, 0.2
      %v4054 = vmul.f32 %v3982, 0.2
      %v4055 = vmul.f32 %v3983, 0.2
      %v4056 = vmul.f32 %v3984, 0.2
      %v4057 = vmul.f32 %v3985, 0.2
      %v4058 = vmul.f32 %v3986, 0.2
      %v4059 = vmul.f32 %v3987, 0.2
      %v4060 = vmul.f32 %v3988, 0.2
      %v4061 = vmul.f32 %v3989, 0.2
      %v4062 = vmul.f32 %v3990, 0.2
      %v4063 = vmul.f32 %v3991, 0.2
      %v4064 = vmul.f32 %v3992, 0.2
      %v4065 = vmul.f32 %v3993, 0.2
      %v4066 = vmul.f32 %v3994, 0.2
      %v4067 = vmul.f32 %v3995, 0.2
      %v4068 = vmul.f32 %v3996, 0.2
      %v4069 = vmul.f32 %v3997, 0.2
      %v4070 = vmul.f32 %v3998, 0.2
      %v4071 = vmul.f32 %v3999, 0.2
      %v4072 = vmul.f32 %v4000, 0.2
      %v4073 = vmul.f32 %v4001, 0.2
      %v4074 = vmul.f32 %v4002, 0.2
      %v4075 = vmul.f32 %v4003, 0.2
      %v4076 = vmul.f32 %v4004, 0.2
      %v4077 = vmul.f32 %v4005, 0.2
      %v4078 = vmul.f32 %v4006, 0.2
      %v4079 = vmul.f32 %v4007, 0.2
      %v4080 = vmul.f32 %v4008, 0.2
      %v4081 = vmul.f32 %v4009, 0.2
      %v4082 = vmul.f32 %v4010, 0.2
      %v4083 = vmul.f32 %v4011, 0.2
      %v4084 = vmul.f32 %v4012, 0.2
      %v4085 = vsel %vm4013, %v3977, %v4049
      %v4086 = vsel %vm4014, %v3978, %v4050
      %v4087 = vsel %vm4015, %v3979, %v4051
      %v4088 = vsel %vm4016, %v3980, %v4052
      %v4089 = vsel %vm4017, %v3981, %v4053
      %v4090 = vsel %vm4018, %v3982, %v4054
      %v4091 = vsel %vm4019, %v3983, %v4055
      %v4092 = vsel %vm4020, %v3984, %v4056
      %v4093 = vsel %vm4021, %v3985, %v4057
      %v4094 = vsel %vm4022, %v3986, %v4058
      %v4095 = vsel %vm4023, %v3987, %v4059
      %v4096 = vsel %vm4024, %v3988, %v4060
      %v4097 = vsel %vm4025, %v3989, %v4061
      %v4098 = vsel %vm4026, %v3990, %v4062
      %v4099 = vsel %vm4027, %v3991, %v4063
      %v4100 = vsel %vm4028, %v3992, %v4064
      %v4101 = vsel %vm4029, %v3993, %v4065
      %v4102 = vsel %vm4030, %v3994, %v4066
      %v4103 = vsel %vm4031, %v3995, %v4067
      %v4104 = vsel %vm4032, %v3996, %v4068
      %v4105 = vsel %vm4033, %v3997, %v4069
      %v4106 = vsel %vm4034, %v3998, %v4070
      %v4107 = vsel %vm4035, %v3999, %v4071
      %v4108 = vsel %vm4036, %v4000, %v4072
      %v4109 = vsel %vm4037, %v4001, %v4073
      %v4110 = vsel %vm4038, %v4002, %v4074
      %v4111 = vsel %vm4039, %v4003, %v4075
      %v4112 = vsel %vm4040, %v4004, %v4076
      %v4113 = vsel %vm4041, %v4005, %v4077
      %v4114 = vsel %vm4042, %v4006, %v4078
      %v4115 = vsel %vm4043, %v4007, %v4079
      %v4116 = vsel %vm4044, %v4008, %v4080
      %v4117 = vsel %vm4045, %v4009, %v4081
      %v4118 = vsel %vm4046, %v4010, %v4082
      %v4119 = vsel %vm4047, %v4011, %v4083
      %v4120 = vsel %vm4048, %v4012, %v4084
      %v4121 = vmul.f32 %v4085, 0.5
      %v4122 = vmul.f32 %v4086, 0.5
      %v4123 = vmul.f32 %v4087, 0.5
      %v4124 = vmul.f32 %v4088, 0.5
      %v4125 = vmul.f32 %v4089, 0.5
      %v4126 = vmul.f32 %v4090, 0.5
      %v4127 = vmul.f32 %v4091, 0.5
      %v4128 = vmul.f32 %v4092, 0.5
      %v4129 = vmul.f32 %v4093, 0.5
      %v4130 = vmul.f32 %v4094, 0.5
      %v4131 = vmul.f32 %v4095, 0.5
      %v4132 = vmul.f32 %v4096, 0.5
      %v4133 = vmul.f32 %v4097, 0.5
      %v4134 = vmul.f32 %v4098, 0.5
      %v4135 = vmul.f32 %v4099, 0.5
      %v4136 = vmul.f32 %v4100, 0.5
      %v4137 = vmul.f32 %v4101, 0.5
      %v4138 = vmul.f32 %v4102, 0.5
      %v4139 = vmul.f32 %v4103, 0.5
      %v4140 = vmul.f32 %v4104, 0.5
      %v4141 = vmul.f32 %v4105, 0.5
      %v4142 = vmul.f32 %v4106, 0.5
      %v4143 = vmul.f32 %v4107, 0.5
      %v4144 = vmul.f32 %v4108, 0.5
      %v4145 = vmul.f32 %v4109, 0.5
      %v4146 = vmul.f32 %v4110, 0.5
      %v4147 = vmul.f32 %v4111, 0.5
      %v4148 = vmul.f32 %v4112, 0.5
      %v4149 = vmul.f32 %v4113, 0.5
      %v4150 = vmul.f32 %v4114, 0.5
      %v4151 = vmul.f32 %v4115, 0.5
      %v4152 = vmul.f32 %v4116, 0.5
      %v4153 = vmul.f32 %v4117, 0.5
      %v4154 = vmul.f32 %v4118, 0.5
      %v4155 = vmul.f32 %v4119, 0.5
      %v4156 = vmul.f32 %v4120, 0.5
      %vm4157 = vcmask 64512
      %4158 = vst.msk [vmem:[%s170] sm:$0xff] %vm4157, %v4121
      %4159 = vst.msk [vmem:[%s170 + $0x8] sm:$0xff] %vm4157, %v4122
      %4160 = vst.msk [vmem:[%s170 + $0x10] sm:$0xff] %vm4157, %v4123
      %4161 = vst.msk [vmem:[%s170 + $0x18] sm:$0xff] %vm4157, %v4124
      %4162 = vst.msk [vmem:[%s170 + $0x20] sm:$0xff] %vm4157, %v4125
      %4163 = vst.msk [vmem:[%s170 + $0x28] sm:$0xff] %vm4157, %v4126
      %4164 = vst.msk [vmem:[%s170 + $0x30] sm:$0xff] %vm4157, %v4127
      %4165 = vst.msk [vmem:[%s170 + $0x38] sm:$0xff] %vm4157, %v4128
      %4166 = vst.msk [vmem:[%s170 + $0x40] sm:$0xff] %vm4157, %v4129
      %4167 = vst.msk [vmem:[%s170 + $0x48] sm:$0xff] %vm4157, %v4130
      %4168 = vst.msk [vmem:[%s170 + $0x50] sm:$0xff] %vm4157, %v4131
      %4169 = vst.msk [vmem:[%s170 + $0x58] sm:$0xff] %vm4157, %v4132
      %4170 = vst.msk [vmem:[%s170 + $0x60] sm:$0xff] %vm4157, %v4133
      %4171 = vst.msk [vmem:[%s170 + $0x68] sm:$0xff] %vm4157, %v4134
      %4172 = vst.msk [vmem:[%s170 + $0x70] sm:$0xff] %vm4157, %v4135
      %4173 = vst.msk [vmem:[%s170 + $0x78] sm:$0xff] %vm4157, %v4136
      %4174 = vst.msk [vmem:[%s170 + $0x80] sm:$0xff] %vm4157, %v4137
      %4175 = vst.msk [vmem:[%s170 + $0x88] sm:$0xff] %vm4157, %v4138
      %4176 = vst.msk [vmem:[%s170 + $0x90] sm:$0xff] %vm4157, %v4139
      %4177 = vst.msk [vmem:[%s170 + $0x98] sm:$0xff] %vm4157, %v4140
      %4178 = vst.msk [vmem:[%s170 + $0xa0] sm:$0xff] %vm4157, %v4141
      %4179 = vst.msk [vmem:[%s170 + $0xa8] sm:$0xff] %vm4157, %v4142
      %4180 = vst.msk [vmem:[%s170 + $0xb0] sm:$0xff] %vm4157, %v4143
      %4181 = vst.msk [vmem:[%s170 + $0xb8] sm:$0xff] %vm4157, %v4144
      %4182 = vst.msk [vmem:[%s170 + $0xc0] sm:$0xff] %vm4157, %v4145
      %4183 = vst.msk [vmem:[%s170 + $0xc8] sm:$0xff] %vm4157, %v4146
      %4184 = vst.msk [vmem:[%s170 + $0xd0] sm:$0xff] %vm4157, %v4147
      %4185 = vst.msk [vmem:[%s170 + $0xd8] sm:$0xff] %vm4157, %v4148
      %4186 = vst.msk [vmem:[%s170 + $0xe0] sm:$0xff] %vm4157, %v4149
      %4187 = vst.msk [vmem:[%s170 + $0xe8] sm:$0xff] %vm4157, %v4150
      %4188 = vst.msk [vmem:[%s170 + $0xf0] sm:$0xff] %vm4157, %v4151
      %4189 = vst.msk [vmem:[%s170 + $0xf8] sm:$0xff] %vm4157, %v4152
      %4190 = vst.msk [vmem:[%s170 + $0x100] sm:$0xff] %vm4157, %v4153
      %4191 = vst.msk [vmem:[%s170 + $0x108] sm:$0xff] %vm4157, %v4154
      %4192 = vst.msk [vmem:[%s170 + $0x110] sm:$0xff] %vm4157, %v4155
      %4193 = vst.msk [vmem:[%s170 + $0x118] sm:$0xff] %vm4157, %v4156
      %p4194 = scmp.lt.s32.totalorder %s14, 1
      %s4195 = scalar_select %p4194, %s14, 1
      %s4196 = smul.addr %s4195, 36
      %s4197 = smul.addr %s4196, 8
      %s4198 = scalar_lea.vmem %s3, %s4197
      // Predicated region
      $region33: #{tpu_custom_call.1} parent=31 // pred_check
        %p4199 = pneg %p100
      $region34: #{tpu_custom_call.1} parent=31 // pred_check_branch
        %4201 = sbr.rel (%p4199) target = $region36
      $region35: #{tpu_custom_call.1} parent=31 // pred_region
        _
      $region36: #{tpu_custom_call.1} parent=31 // pred_fallthru
        _
    $region32: #{tpu_custom_call.1} parent=5 // pred_fallthru
      _
    %p4202 = scmp.le.s32.totalorder 2, %s9
    // Predicated region
    $region37: #{tpu_custom_call.1} parent=5 // pred_check
      %p4203 = pneg %p4202
    $region38: #{tpu_custom_call.1} parent=5 // pred_check_branch
      %4205 = sbr.rel (%p4203) target = $region40
    $region39: #{tpu_custom_call.1} parent=5 // pred_region
      %s4206 = ssub.s32 %s9, 2
      // Predicated region
      $region41: #{tpu_custom_call.1} parent=39 // pred_check
        %p4207 = pneg %p106
      $region42: #{tpu_custom_call.1} parent=39 // pred_check_branch
        %4209 = sbr.rel (%p4207) target = $region44
      $region43: #{tpu_custom_call.1} parent=39 // pred_region
        %p4210 = scmp.lt.s32.totalorder %s15, 1
        %s4211 = scalar_select %p4210, %s15, 1
        %s4212 = smul.addr %s4211, 36
        %s4213 = smul.addr %s4212, 8
        %s4214 = scalar_lea.vmem %s3, %s4213
      $region44: #{tpu_custom_call.1} parent=39 // pred_fallthru
        _
    $region40: #{tpu_custom_call.1} parent=5 // pred_fallthru
      _
  $region6: #{tpu_custom_call.1} parent=0 // loop_footer
    %s13 = sadd.s32 1, %s9
  $region7: #{tpu_custom_call.1} parent=0 // loop_footer_branch
    %8 = sbr.rel target = $region3
  $region8: #{tpu_custom_call.1} parent=0 // loop_exit
    _

</llo_original>
